<compile_context>
chip_gen: v7x
topology: tpu7x:2x2x1
jax: 0.10.0
libtpu: 0.0.40
codegen_flags: <defaults>
</compile_context>

<pallas_src>
import jax
import jax.numpy as jnp
from jax.experimental import pallas as pl
from jax.experimental.pallas import tpu as pltpu

IN_FEATURES = 2048
HIDDEN = 512
OUT_FEATURES = 2
OUT_PAD = 128          # lane-dense padded fc2 output width (sliced back to 2)
FAST_PATH_MAX_B = 31   # below this, use the grid-less single-block path


def _mlp_kernel(x_ref, w1_ref, b1_ref, w2_ref, b2_ref, o_ref):
    # Cast the f32 activation tile to bf16 in-kernel (VPU has slack; avoids a
    # separate XLA cast pass over HBM in the wrapper).
    xb = x_ref[...].astype(jnp.bfloat16)
    # fc1: bf16 x bf16 -> f32 accumulation on the MXU; bias + ReLU in f32.
    h = jnp.dot(xb, w1_ref[...], preferred_element_type=jnp.float32)
    h = jnp.maximum(h + b1_ref[...], 0.0)
    # fc2: bf16 x bf16 -> f32 accumulation, 128-lane padded output block.
    out = jnp.dot(h.astype(jnp.bfloat16), w2_ref[...],
                  preferred_element_type=jnp.float32)
    o_ref[...] = (out + b2_ref[...]).astype(o_ref.dtype)


def _round_up(x, m):
    return (x + m - 1) // m * m


def prepare_params(w1, b1, w2, b2):
    """One-time conversion of f32 params ([in, out] layout) to kernel-ready,
    MXU-friendly forms.  Call once and reuse for every forward call."""
    w1b = jnp.asarray(w1, jnp.float32).astype(jnp.bfloat16)            # (2048, 512)
    b1r = jnp.asarray(b1, jnp.float32).reshape(1, HIDDEN)              # (1, 512)
    w2p = jnp.zeros((HIDDEN, OUT_PAD), jnp.bfloat16).at[:, :OUT_FEATURES].set(
        jnp.asarray(w2, jnp.float32).astype(jnp.bfloat16))             # (512, 128)
    b2p = jnp.zeros((1, OUT_PAD), jnp.float32).at[:, :OUT_FEATURES].set(
        jnp.asarray(b2, jnp.float32).reshape(1, OUT_FEATURES))         # (1, 128)
    return w1b, b1r, w2p, b2p


def new_classifier_forward(x, w1b, b1r, w2p, b2p, *, block_b=512):
    """x: [B, 2048] float (f32 ok; cast to bf16 in-kernel).  Params from
    prepare_params().  Returns logits [B, 2] f32."""
    B = x.shape[0]

    # ---- tiny-batch fast path: single block, no grid / pipeline machinery ----
    if B <= FAST_PATH_MAX_B:
        out = pl.pallas_call(
            _mlp_kernel,
            out_shape=jax.ShapeDtypeStruct((B, OUT_PAD), jnp.float32),
        )(x, w1b, b1r, w2p, b2p)
        return out[:, :OUT_FEATURES]

    # ---- tiled path ----
    # Balanced batch tiles: at least 2 tiles (so both v7x TensorCores get
    # work), tile size ~= ceil(B / n_tiles) rounded to 16 (bf16 sublane
    # packing), capped at block_b.  Partial last block handled by Pallas.
    n_tiles = max(pl.cdiv(B, block_b), 2)
    tb = min(_round_up(pl.cdiv(B, n_tiles), 16), block_b)
    grid = (pl.cdiv(B, tb),)
    rows = grid[0] * tb

    cost = pl.CostEstimate(
        flops=2 * rows * (IN_FEATURES * HIDDEN + HIDDEN * OUT_PAD),
        transcendentals=0,
        bytes_accessed=(B * IN_FEATURES * 4        # x read (f32)
                        + w1b.size * 2 + w2p.size * 2
                        + b1r.size * 4 + b2p.size * 4
                        + B * OUT_PAD * 2),        # bf16 writeback
    )

    out = pl.pallas_call(
        _mlp_kernel,
        out_shape=jax.ShapeDtypeStruct((B, OUT_PAD), jnp.bfloat16),
        grid_spec=pltpu.PrefetchScalarGridSpec(
            num_scalar_prefetch=0,
            grid=grid,
            in_specs=[
                # x tile marches over the batch; weights/biases stay resident
                # (constant index_maps -> fetched once, VMEM-resident).
                pl.BlockSpec((tb, IN_FEATURES), lambda i: (i, 0)),
                pl.BlockSpec((IN_FEATURES, HIDDEN), lambda i: (0, 0)),
                pl.BlockSpec((1, HIDDEN), lambda i: (0, 0)),
                pl.BlockSpec((HIDDEN, OUT_PAD), lambda i: (0, 0)),
                pl.BlockSpec((1, OUT_PAD), lambda i: (0, 0)),
            ],
            out_specs=pl.BlockSpec((tb, OUT_PAD), lambda i: (i, 0)),
        ),
        compiler_params=pltpu.CompilerParams(
            dimension_semantics=("parallel",),
            vmem_limit_bytes=32 * 1024 * 1024,
        ),
        cost_estimate=cost,
    )(x, w1b, b1r, w2p, b2p)

    return out[:, :OUT_FEATURES].astype(jnp.float32)


def init_params(key):
    """Deterministic kaiming_normal_ (fan_in, gain=sqrt(2)) weights, zero bias.

    PyTorch stores Linear weights as [out, in]; we generate with the same
    statistics and keep them as [in, out] for the kernel's x @ W layout.
    """
    k1, k2 = jax.random.split(key)
    std1 = (2.0 / IN_FEATURES) ** 0.5
    std2 = (2.0 / HIDDEN) ** 0.5
    w1 = jax.random.normal(k1, (IN_FEATURES, HIDDEN), jnp.float32) * std1
    b1 = jnp.zeros((HIDDEN,), jnp.float32)
    w2 = jax.random.normal(k2, (HIDDEN, OUT_FEATURES), jnp.float32) * std2
    b2 = jnp.zeros((OUT_FEATURES,), jnp.float32)
    return w1, b1, w2, b2


if __name__ == "__main__":
    key = jax.random.PRNGKey(0)
    kx, kp = jax.random.split(key)

    w1, b1, w2, b2 = init_params(kp)
    # One-time parameter prep (hoisted out of the per-call path).
    params = prepare_params(w1, b1, w2, b2)

    def ref_bf16(xx):
        xr = xx.astype(jnp.bfloat16).astype(jnp.float32)
        w1r = w1.astype(jnp.bfloat16).astype(jnp.float32)
        w2r = w2.astype(jnp.bfloat16).astype(jnp.float32)
        h = jnp.maximum(xr @ w1r + b1[None, :], 0.0)
        return h.astype(jnp.bfloat16).astype(jnp.float32) @ w2r + b2[None, :]

    def ref_f32(xx):
        return jnp.maximum(xx @ w1 + b1[None, :], 0.0) @ w2 + b2[None, :]

    # B=8 exercises the grid-less fast path; B=48 exercises the tiled path
    # (grid=2, balanced tb=32, partial last block).
    for B in (8, 48):
        x = jax.random.normal(jax.random.fold_in(kx, B),
                              (B, IN_FEATURES), jnp.float32)
        logits = jax.block_until_ready(
            new_classifier_forward(x, *params))
        assert logits.shape == (B, OUT_FEATURES)
        assert logits.dtype == jnp.float32

        # Tight check against a reference with the same bf16 rounding.
        r = ref_bf16(x)
        assert jnp.allclose(logits, r, atol=2e-2, rtol=2e-2), (
            float(jnp.max(jnp.abs(logits - r))))
        # Looser sanity check against pure-f32 PyTorch-equivalent math.
        rf = ref_f32(x)
        assert jnp.allclose(logits, rf, atol=6e-2, rtol=6e-2), (
            float(jnp.max(jnp.abs(logits - rf))))

    print("KERNEL_OK")
</pallas_src>

<mosaic_0001>
module attributes {stable_mosaic.version = 11 : i64} {
  func.func @_mlp_kernel(%arg0: memref<8x2048xf32, #tpu.memory_space<vmem>>, %arg1: memref<2048x512xbf16, #tpu.memory_space<vmem>>, %arg2: memref<1x512xf32, #tpu.memory_space<vmem>>, %arg3: memref<512x128xbf16, #tpu.memory_space<vmem>>, %arg4: memref<1x128xf32, #tpu.memory_space<vmem>>, %arg5: memref<8x128xf32, #tpu.memory_space<vmem>>) attributes {dimension_semantics = [], scalar_prefetch = 0 : i64, scratch_operands = 0 : i64, tpu.core_type = #tpu.core_type<tc>} {
    %c0 = arith.constant 0 : index
    %c0_0 = arith.constant 0 : index
    %0 = vector.load %arg0[%c0, %c0_0] : memref<8x2048xf32, #tpu.memory_space<vmem>>, vector<8x2048xf32>
    %1 = arith.truncf %0 : vector<8x2048xf32> to vector<8x2048xbf16>
    %c0_1 = arith.constant 0 : index
    %c0_2 = arith.constant 0 : index
    %2 = vector.load %arg1[%c0_1, %c0_2] : memref<2048x512xbf16, #tpu.memory_space<vmem>>, vector<2048x512xbf16>
    %cst = arith.constant dense<0.000000e+00> : vector<8x512xf32>
    %3 = tpu.matmul %1, %2, %cst {dimension_numbers = #tpu.dot_dimension_numbers<[1], [0], [0], [1], [0, 0, 1, 1], [], []>} : vector<8x2048xbf16>, vector<2048x512xbf16>, vector<8x512xf32> -> vector<8x512xf32>
    %c0_3 = arith.constant 0 : index
    %c0_4 = arith.constant 0 : index
    %4 = vector.load %arg2[%c0_3, %c0_4] : memref<1x512xf32, #tpu.memory_space<vmem>>, vector<1x512xf32>
    %5 = vector.broadcast %4 : vector<1x512xf32> to vector<8x512xf32>
    %6 = arith.addf %3, %5 : vector<8x512xf32>
    %cst_5 = arith.constant 0.000000e+00 : f32
    %7 = vector.broadcast %cst_5 : f32 to vector<8x512xf32>
    %8 = arith.maximumf %6, %7 : vector<8x512xf32>
    %9 = arith.truncf %8 : vector<8x512xf32> to vector<8x512xbf16>
    %c0_6 = arith.constant 0 : index
    %c0_7 = arith.constant 0 : index
    %10 = vector.load %arg3[%c0_6, %c0_7] : memref<512x128xbf16, #tpu.memory_space<vmem>>, vector<512x128xbf16>
    %cst_8 = arith.constant dense<0.000000e+00> : vector<8x128xf32>
    %11 = tpu.matmul %9, %10, %cst_8 {dimension_numbers = #tpu.dot_dimension_numbers<[1], [0], [0], [1], [0, 0, 1, 1], [], []>} : vector<8x512xbf16>, vector<512x128xbf16>, vector<8x128xf32> -> vector<8x128xf32>
    %c0_9 = arith.constant 0 : index
    %c0_10 = arith.constant 0 : index
    %12 = vector.load %arg4[%c0_9, %c0_10] : memref<1x128xf32, #tpu.memory_space<vmem>>, vector<1x128xf32>
    %13 = vector.broadcast %12 : vector<1x128xf32> to vector<8x128xf32>
    %14 = arith.addf %11, %13 : vector<8x128xf32>
    %c0_11 = arith.constant 0 : index
    %c0_12 = arith.constant 0 : index
    %15 = vector.load %arg5[%c0_11, %c0_12] : memref<8x128xf32, #tpu.memory_space<vmem>>, vector<8x128xf32>
    tpu.vector_store %arg5[%c0_11, %c0_12], %14 {strides = array<i32>} : memref<8x128xf32, #tpu.memory_space<vmem>>, vector<8x128xf32>,
    return
  }
}

</mosaic_0001>

<llo_original>
// kernel: tpu_custom_call.1
$region0: #{tpu_custom_call.1}
  #allocation0 [shape = 'u32[]', space=smem, size = 0x4, offset = 0x4, fixed_abs, tag = 'smem constant byte address 0x4 - core index']
  #allocation1 [shape = 'u32[144,128]{1,0:T(1,128)}', space=vmem, size = 0x12000, scoped, tag = 'internal scratch']
  %s0 = inlined_call_operand.hbm [shape: f32[8,2048], index: 0, kind: input, shape index: {}]
  %s1 = inlined_call_operand.hbm [shape: bf16[2048,512], index: 1, kind: input, shape index: {}]
  %s2 = inlined_call_operand.hbm [shape: f32[1,512], index: 2, kind: input, shape index: {}]
  %s3 = inlined_call_operand.hbm [shape: bf16[512,128], index: 3, kind: input, shape index: {}]
  %s4 = inlined_call_operand.hbm [shape: f32[1,128], index: 4, kind: input, shape index: {}]
  %s5 = inlined_call_operand.hbm [shape: f32[8,128], index: 5, kind: output, shape index: {}]
  %s6 = sld [smem:[#allocation0]]
  $region50: #{tpu_custom_call.1} parent=0
    _
  %s8 = ssub.s32 1, %s6
  %s9 = scalar_select 0, %s8, %s6
  $region1: #{tpu_custom_call.1} parent=0
    #allocation2 [shape = 'u8[65536]{0}', space=vmem, size = 0x10000, scoped, tag = 'input window, operand 0, single buffered']
    #allocation3 [shape = 's32[1]{0}', space=sflag, size = 0x4, scoped, tag = 'scoped memory for tpu_custom_call.1']
    #allocation4 [shape = 's32[1]{0}', space=sflag, size = 0x4, scoped, tag = 'scoped memory for tpu_custom_call.1']
    #allocation5 [shape = 'u8[2097152]{0}', space=vmem, size = 0x200000, scoped, tag = 'input window, operand 1, single buffered']
    #allocation6 [shape = 's32[1]{0}', space=sflag, size = 0x4, scoped, tag = 'scoped memory for tpu_custom_call.1']
    #allocation7 [shape = 'u8[2048]{0}', space=vmem, size = 0x800, scoped, tag = 'input window, operand 2, single buffered']
    #allocation8 [shape = 'u8[131072]{0}', space=vmem, size = 0x20000, scoped, tag = 'input window, operand 3, single buffered']
    #allocation9 [shape = 's32[1]{0}', space=sflag, size = 0x4, scoped, tag = 'scoped memory for tpu_custom_call.1']
    #allocation10 [shape = 'u8[512]{0}', space=vmem, size = 0x400, scoped, tag = 'input window, operand 4, single buffered']
    #allocation11 [shape = 'u8[4096]{0}', space=vmem, size = 0x1000, scoped, tag = 'output window, operand 0, single buffered']
    %10 = vsyncpa [#allocation3], 0
    %11 = vsyncpa [#allocation6], 0
    %12 = vsyncpa [#allocation9], 0
    %13 = vsyncpa [#allocation4], 0
    // Predicated region
    $region2: #{tpu_custom_call.1} parent=1 // pred_check
      _
    $region3: #{tpu_custom_call.1} parent=1 // pred_check_branch
      %15 = sbr.rel (0) target = $region5
    $region4: #{tpu_custom_call.1} parent=1 // pred_region
      %s17 = ssub.s32 2048, 2048
      %18 = vsyncadd [#allocation3], %s17
      %s20 = sshll.u32 [#allocation2], 4
      %s21 = int_to_ptr.vmem [resolvable:$true] %s20
      %23 = dma.hbm_to_vmem [thread:$0]  %s0, 2048, %s21, [#allocation3]
    $region5: #{tpu_custom_call.1} parent=1 // pred_fallthru
      _
    // Predicated region
    $region6: #{tpu_custom_call.1} parent=1 // pred_check
      _
    $region7: #{tpu_custom_call.1} parent=1 // pred_check_branch
      %25 = sbr.rel (0) target = $region9
    $region8: #{tpu_custom_call.1} parent=1 // pred_region
      %s27 = ssub.s32 65536, 65536
      %28 = vsyncadd [#allocation6], %s27
      %s29 = sshll.u32 [#allocation5], 4
      %s30 = int_to_ptr.vmem [resolvable:$true] %s29
      %35 = dma.hbm_to_vmem [thread:$0]  %s1, 65536, %s30, [#allocation6], 256, 256, 16
    $region9: #{tpu_custom_call.1} parent=1 // pred_fallthru
      _
    // Predicated region
    $region10: #{tpu_custom_call.1} parent=1 // pred_check
      _
    $region11: #{tpu_custom_call.1} parent=1 // pred_check_branch
      %37 = sbr.rel (0) target = $region13
    $region12: #{tpu_custom_call.1} parent=1 // pred_region
      %s39 = ssub.s32 64, 64
      %40 = vsyncadd [#allocation6], %s39
      %s42 = sshll.u32 [#allocation7], 4
      %s43 = int_to_ptr.vmem [resolvable:$true] %s42
      %45 = dma.hbm_to_vmem [thread:$0]  %s2, 64, %s43, [#allocation6]
    $region13: #{tpu_custom_call.1} parent=1 // pred_fallthru
      _
    // Predicated region
    $region14: #{tpu_custom_call.1} parent=1 // pred_check
      _
    $region15: #{tpu_custom_call.1} parent=1 // pred_check_branch
      %47 = sbr.rel (0) target = $region17
    $region16: #{tpu_custom_call.1} parent=1 // pred_region
      %s49 = ssub.s32 4096, 4096
      %50 = vsyncadd [#allocation9], %s49
      %s51 = sshll.u32 [#allocation8], 4
      %s52 = int_to_ptr.vmem [resolvable:$true] %s51
      %57 = dma.hbm_to_vmem [thread:$0]  %s3, 4096, %s52, [#allocation9], 64, 64, 4
    $region17: #{tpu_custom_call.1} parent=1 // pred_fallthru
      _
    // Predicated region
    $region18: #{tpu_custom_call.1} parent=1 // pred_check
      _
    $region19: #{tpu_custom_call.1} parent=1 // pred_check_branch
      %59 = sbr.rel (0) target = $region21
    $region20: #{tpu_custom_call.1} parent=1 // pred_region
      %s61 = ssub.s32 16, 16
      %62 = vsyncadd [#allocation9], %s61
      %s64 = sshll.u32 [#allocation10], 4
      %s65 = int_to_ptr.vmem [resolvable:$true] %s64
      %67 = dma.hbm_to_vmem [thread:$0]  %s4, 16, %s65, [#allocation9]
    $region21: #{tpu_custom_call.1} parent=1 // pred_fallthru
      _
    // Predicated region
    $region22: #{tpu_custom_call.1} parent=1 // pred_check
      _
    $region23: #{tpu_custom_call.1} parent=1 // pred_check_branch
      %69 = sbr.rel (0) target = $region25
    $region24: #{tpu_custom_call.1} parent=1 // pred_region
      %70 = dma.done [#allocation3], 2048
    $region25: #{tpu_custom_call.1} parent=1 // pred_fallthru
      _
    // Predicated region
    $region26: #{tpu_custom_call.1} parent=1 // pred_check
      _
    $region27: #{tpu_custom_call.1} parent=1 // pred_check_branch
      %72 = sbr.rel (0) target = $region29
    $region28: #{tpu_custom_call.1} parent=1 // pred_region
      %73 = dma.done [#allocation6], 65536
    $region29: #{tpu_custom_call.1} parent=1 // pred_fallthru
      _
    // Predicated region
    $region30: #{tpu_custom_call.1} parent=1 // pred_check
      _
    $region31: #{tpu_custom_call.1} parent=1 // pred_check_branch
      %75 = sbr.rel (0) target = $region33
    $region32: #{tpu_custom_call.1} parent=1 // pred_region
      %76 = dma.done [#allocation6], 64
    $region33: #{tpu_custom_call.1} parent=1 // pred_fallthru
      _
    // Predicated region
    $region34: #{tpu_custom_call.1} parent=1 // pred_check
      _
    $region35: #{tpu_custom_call.1} parent=1 // pred_check_branch
      %78 = sbr.rel (0) target = $region37
    $region36: #{tpu_custom_call.1} parent=1 // pred_region
      %79 = dma.done [#allocation9], 4096
    $region37: #{tpu_custom_call.1} parent=1 // pred_fallthru
      _
    // Predicated region
    $region38: #{tpu_custom_call.1} parent=1 // pred_check
      _
    $region39: #{tpu_custom_call.1} parent=1 // pred_check_branch
      %81 = sbr.rel (0) target = $region41
    $region40: #{tpu_custom_call.1} parent=1 // pred_region
      %82 = dma.done [#allocation9], 16
    $region41: #{tpu_custom_call.1} parent=1 // pred_fallthru
      _
    %v84 = vld [vmem:[#allocation2] sm:$0xff]
    %v85 = vld [vmem:[#allocation2 + $0x8] sm:$0xff]
    %v86 = vld [vmem:[#allocation2 + $0x10] sm:$0xff]
    %v87 = vld [vmem:[#allocation2 + $0x18] sm:$0xff]
    %v88 = vld [vmem:[#allocation2 + $0x20] sm:$0xff]
    %v89 = vld [vmem:[#allocation2 + $0x28] sm:$0xff]
    %v90 = vld [vmem:[#allocation2 + $0x30] sm:$0xff]
    %v91 = vld [vmem:[#allocation2 + $0x38] sm:$0xff]
    %v92 = vld [vmem:[#allocation2 + $0x40] sm:$0xff]
    %v93 = vld [vmem:[#allocation2 + $0x48] sm:$0xff]
    %v94 = vld [vmem:[#allocation2 + $0x50] sm:$0xff]
    %v95 = vld [vmem:[#allocation2 + $0x58] sm:$0xff]
    %v96 = vld [vmem:[#allocation2 + $0x60] sm:$0xff]
    %v97 = vld [vmem:[#allocation2 + $0x68] sm:$0xff]
    %v98 = vld [vmem:[#allocation2 + $0x70] sm:$0xff]
    %v99 = vld [vmem:[#allocation2 + $0x78] sm:$0xff]
    %v100 = vpack.c.bf16 %v84, %v84
    %v101 = vpack.c.bf16 %v85, %v85
    %v102 = vpack.c.bf16 %v86, %v86
    %v103 = vpack.c.bf16 %v87, %v87
    %v104 = vpack.c.bf16 %v88, %v88
    %v105 = vpack.c.bf16 %v89, %v89
    %v106 = vpack.c.bf16 %v90, %v90
    %v107 = vpack.c.bf16 %v91, %v91
    %v108 = vpack.c.bf16 %v92, %v92
    %v109 = vpack.c.bf16 %v93, %v93
    %v110 = vpack.c.bf16 %v94, %v94
    %v111 = vpack.c.bf16 %v95, %v95
    %v112 = vpack.c.bf16 %v96, %v96
    %v113 = vpack.c.bf16 %v97, %v97
    %v114 = vpack.c.bf16 %v98, %v98
    %v115 = vpack.c.bf16 %v99, %v99
    %v116 = vld [vmem:[#allocation5] sm:$0xff]
    %v117 = vld [vmem:[#allocation5 + $0x8] sm:$0xff]
    %v118 = vld [vmem:[#allocation5 + $0x10] sm:$0xff]
    %v119 = vld [vmem:[#allocation5 + $0x18] sm:$0xff]
    %v120 = vld [vmem:[#allocation5 + $0x20] sm:$0xff]
    %v121 = vld [vmem:[#allocation5 + $0x28] sm:$0xff]
    %v122 = vld [vmem:[#allocation5 + $0x30] sm:$0xff]
    %v123 = vld [vmem:[#allocation5 + $0x38] sm:$0xff]
    %v124 = vld [vmem:[#allocation5 + $0x40] sm:$0xff]
    %v125 = vld [vmem:[#allocation5 + $0x48] sm:$0xff]
    %v126 = vld [vmem:[#allocation5 + $0x50] sm:$0xff]
    %v127 = vld [vmem:[#allocation5 + $0x58] sm:$0xff]
    %v128 = vld [vmem:[#allocation5 + $0x60] sm:$0xff]
    %v129 = vld [vmem:[#allocation5 + $0x68] sm:$0xff]
    %v130 = vld [vmem:[#allocation5 + $0x70] sm:$0xff]
    %v131 = vld [vmem:[#allocation5 + $0x78] sm:$0xff]
    %v132 = vld [vmem:[#allocation5 + $0x80] sm:$0xff]
    %v133 = vld [vmem:[#allocation5 + $0x88] sm:$0xff]
    %v134 = vld [vmem:[#allocation5 + $0x90] sm:$0xff]
    %v135 = vld [vmem:[#allocation5 + $0x98] sm:$0xff]
    %v136 = vld [vmem:[#allocation5 + $0xa0] sm:$0xff]
    %v137 = vld [vmem:[#allocation5 + $0xa8] sm:$0xff]
    %v138 = vld [vmem:[#allocation5 + $0xb0] sm:$0xff]
    %v139 = vld [vmem:[#allocation5 + $0xb8] sm:$0xff]
    %v140 = vld [vmem:[#allocation5 + $0xc0] sm:$0xff]
    %v141 = vld [vmem:[#allocation5 + $0xc8] sm:$0xff]
    %v142 = vld [vmem:[#allocation5 + $0xd0] sm:$0xff]
    %v143 = vld [vmem:[#allocation5 + $0xd8] sm:$0xff]
    %v144 = vld [vmem:[#allocation5 + $0xe0] sm:$0xff]
    %v145 = vld [vmem:[#allocation5 + $0xe8] sm:$0xff]
    %v146 = vld [vmem:[#allocation5 + $0xf0] sm:$0xff]
    %v147 = vld [vmem:[#allocation5 + $0xf8] sm:$0xff]
    %v148 = vld [vmem:[#allocation5 + $0x100] sm:$0xff]
    %v149 = vld [vmem:[#allocation5 + $0x108] sm:$0xff]
    %v150 = vld [vmem:[#allocation5 + $0x110] sm:$0xff]
    %v151 = vld [vmem:[#allocation5 + $0x118] sm:$0xff]
    %v152 = vld [vmem:[#allocation5 + $0x120] sm:$0xff]
    %v153 = vld [vmem:[#allocation5 + $0x128] sm:$0xff]
    %v154 = vld [vmem:[#allocation5 + $0x130] sm:$0xff]
    %v155 = vld [vmem:[#allocation5 + $0x138] sm:$0xff]
    %v156 = vld [vmem:[#allocation5 + $0x140] sm:$0xff]
    %v157 = vld [vmem:[#allocation5 + $0x148] sm:$0xff]
    %v158 = vld [vmem:[#allocation5 + $0x150] sm:$0xff]
    %v159 = vld [vmem:[#allocation5 + $0x158] sm:$0xff]
    %v160 = vld [vmem:[#allocation5 + $0x160] sm:$0xff]
    %v161 = vld [vmem:[#allocation5 + $0x168] sm:$0xff]
    %v162 = vld [vmem:[#allocation5 + $0x170] sm:$0xff]
    %v163 = vld [vmem:[#allocation5 + $0x178] sm:$0xff]
    %v164 = vld [vmem:[#allocation5 + $0x180] sm:$0xff]
    %v165 = vld [vmem:[#allocation5 + $0x188] sm:$0xff]
    %v166 = vld [vmem:[#allocation5 + $0x190] sm:$0xff]
    %v167 = vld [vmem:[#allocation5 + $0x198] sm:$0xff]
    %v168 = vld [vmem:[#allocation5 + $0x1a0] sm:$0xff]
    %v169 = vld [vmem:[#allocation5 + $0x1a8] sm:$0xff]
    %v170 = vld [vmem:[#allocation5 + $0x1b0] sm:$0xff]
    %v171 = vld [vmem:[#allocation5 + $0x1b8] sm:$0xff]
    %v172 = vld [vmem:[#allocation5 + $0x1c0] sm:$0xff]
    %v173 = vld [vmem:[#allocation5 + $0x1c8] sm:$0xff]
    %v174 = vld [vmem:[#allocation5 + $0x1d0] sm:$0xff]
    %v175 = vld [vmem:[#allocation5 + $0x1d8] sm:$0xff]
    %v176 = vld [vmem:[#allocation5 + $0x1e0] sm:$0xff]
    %v177 = vld [vmem:[#allocation5 + $0x1e8] sm:$0xff]
    %v178 = vld [vmem:[#allocation5 + $0x1f0] sm:$0xff]
    %v179 = vld [vmem:[#allocation5 + $0x1f8] sm:$0xff]
    %v180 = vld [vmem:[#allocation5 + $0x200] sm:$0xff]
    %v181 = vld [vmem:[#allocation5 + $0x208] sm:$0xff]
    %v182 = vld [vmem:[#allocation5 + $0x210] sm:$0xff]
    %v183 = vld [vmem:[#allocation5 + $0x218] sm:$0xff]
    %v184 = vld [vmem:[#allocation5 + $0x220] sm:$0xff]
    %v185 = vld [vmem:[#allocation5 + $0x228] sm:$0xff]
    %v186 = vld [vmem:[#allocation5 + $0x230] sm:$0xff]
    %v187 = vld [vmem:[#allocation5 + $0x238] sm:$0xff]
    %v188 = vld [vmem:[#allocation5 + $0x240] sm:$0xff]
    %v189 = vld [vmem:[#allocation5 + $0x248] sm:$0xff]
    %v190 = vld [vmem:[#allocation5 + $0x250] sm:$0xff]
    %v191 = vld [vmem:[#allocation5 + $0x258] sm:$0xff]
    %v192 = vld [vmem:[#allocation5 + $0x260] sm:$0xff]
    %v193 = vld [vmem:[#allocation5 + $0x268] sm:$0xff]
    %v194 = vld [vmem:[#allocation5 + $0x270] sm:$0xff]
    %v195 = vld [vmem:[#allocation5 + $0x278] sm:$0xff]
    %v196 = vld [vmem:[#allocation5 + $0x280] sm:$0xff]
    %v197 = vld [vmem:[#allocation5 + $0x288] sm:$0xff]
    %v198 = vld [vmem:[#allocation5 + $0x290] sm:$0xff]
    %v199 = vld [vmem:[#allocation5 + $0x298] sm:$0xff]
    %v200 = vld [vmem:[#allocation5 + $0x2a0] sm:$0xff]
    %v201 = vld [vmem:[#allocation5 + $0x2a8] sm:$0xff]
    %v202 = vld [vmem:[#allocation5 + $0x2b0] sm:$0xff]
    %v203 = vld [vmem:[#allocation5 + $0x2b8] sm:$0xff]
    %v204 = vld [vmem:[#allocation5 + $0x2c0] sm:$0xff]
    %v205 = vld [vmem:[#allocation5 + $0x2c8] sm:$0xff]
    %v206 = vld [vmem:[#allocation5 + $0x2d0] sm:$0xff]
    %v207 = vld [vmem:[#allocation5 + $0x2d8] sm:$0xff]
    %v208 = vld [vmem:[#allocation5 + $0x2e0] sm:$0xff]
    %v209 = vld [vmem:[#allocation5 + $0x2e8] sm:$0xff]
    %v210 = vld [vmem:[#allocation5 + $0x2f0] sm:$0xff]
    %v211 = vld [vmem:[#allocation5 + $0x2f8] sm:$0xff]
    %v212 = vld [vmem:[#allocation5 + $0x300] sm:$0xff]
    %v213 = vld [vmem:[#allocation5 + $0x308] sm:$0xff]
    %v214 = vld [vmem:[#allocation5 + $0x310] sm:$0xff]
    %v215 = vld [vmem:[#allocation5 + $0x318] sm:$0xff]
    %v216 = vld [vmem:[#allocation5 + $0x320] sm:$0xff]
    %v217 = vld [vmem:[#allocation5 + $0x328] sm:$0xff]
    %v218 = vld [vmem:[#allocation5 + $0x330] sm:$0xff]
    %v219 = vld [vmem:[#allocation5 + $0x338] sm:$0xff]
    %v220 = vld [vmem:[#allocation5 + $0x340] sm:$0xff]
    %v221 = vld [vmem:[#allocation5 + $0x348] sm:$0xff]
    %v222 = vld [vmem:[#allocation5 + $0x350] sm:$0xff]
    %v223 = vld [vmem:[#allocation5 + $0x358] sm:$0xff]
    %v224 = vld [vmem:[#allocation5 + $0x360] sm:$0xff]
    %v225 = vld [vmem:[#allocation5 + $0x368] sm:$0xff]
    %v226 = vld [vmem:[#allocation5 + $0x370] sm:$0xff]
    %v227 = vld [vmem:[#allocation5 + $0x378] sm:$0xff]
    %v228 = vld [vmem:[#allocation5 + $0x380] sm:$0xff]
    %v229 = vld [vmem:[#allocation5 + $0x388] sm:$0xff]
    %v230 = vld [vmem:[#allocation5 + $0x390] sm:$0xff]
    %v231 = vld [vmem:[#allocation5 + $0x398] sm:$0xff]
    %v232 = vld [vmem:[#allocation5 + $0x3a0] sm:$0xff]
    %v233 = vld [vmem:[#allocation5 + $0x3a8] sm:$0xff]
    %v234 = vld [vmem:[#allocation5 + $0x3b0] sm:$0xff]
    %v235 = vld [vmem:[#allocation5 + $0x3b8] sm:$0xff]
    %v236 = vld [vmem:[#allocation5 + $0x3c0] sm:$0xff]
    %v237 = vld [vmem:[#allocation5 + $0x3c8] sm:$0xff]
    %v238 = vld [vmem:[#allocation5 + $0x3d0] sm:$0xff]
    %v239 = vld [vmem:[#allocation5 + $0x3d8] sm:$0xff]
    %v240 = vld [vmem:[#allocation5 + $0x3e0] sm:$0xff]
    %v241 = vld [vmem:[#allocation5 + $0x3e8] sm:$0xff]
    %v242 = vld [vmem:[#allocation5 + $0x3f0] sm:$0xff]
    %v243 = vld [vmem:[#allocation5 + $0x3f8] sm:$0xff]
    %v244 = vld [vmem:[#allocation5 + $0x400] sm:$0xff]
    %v245 = vld [vmem:[#allocation5 + $0x408] sm:$0xff]
    %v246 = vld [vmem:[#allocation5 + $0x410] sm:$0xff]
    %v247 = vld [vmem:[#allocation5 + $0x418] sm:$0xff]
    %v248 = vld [vmem:[#allocation5 + $0x420] sm:$0xff]
    %v249 = vld [vmem:[#allocation5 + $0x428] sm:$0xff]
    %v250 = vld [vmem:[#allocation5 + $0x430] sm:$0xff]
    %v251 = vld [vmem:[#allocation5 + $0x438] sm:$0xff]
    %v252 = vld [vmem:[#allocation5 + $0x440] sm:$0xff]
    %v253 = vld [vmem:[#allocation5 + $0x448] sm:$0xff]
    %v254 = vld [vmem:[#allocation5 + $0x450] sm:$0xff]
    %v255 = vld [vmem:[#allocation5 + $0x458] sm:$0xff]
    %v256 = vld [vmem:[#allocation5 + $0x460] sm:$0xff]
    %v257 = vld [vmem:[#allocation5 + $0x468] sm:$0xff]
    %v258 = vld [vmem:[#allocation5 + $0x470] sm:$0xff]
    %v259 = vld [vmem:[#allocation5 + $0x478] sm:$0xff]
    %v260 = vld [vmem:[#allocation5 + $0x480] sm:$0xff]
    %v261 = vld [vmem:[#allocation5 + $0x488] sm:$0xff]
    %v262 = vld [vmem:[#allocation5 + $0x490] sm:$0xff]
    %v263 = vld [vmem:[#allocation5 + $0x498] sm:$0xff]
    %v264 = vld [vmem:[#allocation5 + $0x4a0] sm:$0xff]
    %v265 = vld [vmem:[#allocation5 + $0x4a8] sm:$0xff]
    %v266 = vld [vmem:[#allocation5 + $0x4b0] sm:$0xff]
    %v267 = vld [vmem:[#allocation5 + $0x4b8] sm:$0xff]
    %v268 = vld [vmem:[#allocation5 + $0x4c0] sm:$0xff]
    %v269 = vld [vmem:[#allocation5 + $0x4c8] sm:$0xff]
    %v270 = vld [vmem:[#allocation5 + $0x4d0] sm:$0xff]
    %v271 = vld [vmem:[#allocation5 + $0x4d8] sm:$0xff]
    %v272 = vld [vmem:[#allocation5 + $0x4e0] sm:$0xff]
    %v273 = vld [vmem:[#allocation5 + $0x4e8] sm:$0xff]
    %v274 = vld [vmem:[#allocation5 + $0x4f0] sm:$0xff]
    %v275 = vld [vmem:[#allocation5 + $0x4f8] sm:$0xff]
    %v276 = vld [vmem:[#allocation5 + $0x500] sm:$0xff]
    %v277 = vld [vmem:[#allocation5 + $0x508] sm:$0xff]
    %v278 = vld [vmem:[#allocation5 + $0x510] sm:$0xff]
    %v279 = vld [vmem:[#allocation5 + $0x518] sm:$0xff]
    %v280 = vld [vmem:[#allocation5 + $0x520] sm:$0xff]
    %v281 = vld [vmem:[#allocation5 + $0x528] sm:$0xff]
    %v282 = vld [vmem:[#allocation5 + $0x530] sm:$0xff]
    %v283 = vld [vmem:[#allocation5 + $0x538] sm:$0xff]
    %v284 = vld [vmem:[#allocation5 + $0x540] sm:$0xff]
    %v285 = vld [vmem:[#allocation5 + $0x548] sm:$0xff]
    %v286 = vld [vmem:[#allocation5 + $0x550] sm:$0xff]
    %v287 = vld [vmem:[#allocation5 + $0x558] sm:$0xff]
    %v288 = vld [vmem:[#allocation5 + $0x560] sm:$0xff]
    %v289 = vld [vmem:[#allocation5 + $0x568] sm:$0xff]
    %v290 = vld [vmem:[#allocation5 + $0x570] sm:$0xff]
    %v291 = vld [vmem:[#allocation5 + $0x578] sm:$0xff]
    %v292 = vld [vmem:[#allocation5 + $0x580] sm:$0xff]
    %v293 = vld [vmem:[#allocation5 + $0x588] sm:$0xff]
    %v294 = vld [vmem:[#allocation5 + $0x590] sm:$0xff]
    %v295 = vld [vmem:[#allocation5 + $0x598] sm:$0xff]
    %v296 = vld [vmem:[#allocation5 + $0x5a0] sm:$0xff]
    %v297 = vld [vmem:[#allocation5 + $0x5a8] sm:$0xff]
    %v298 = vld [vmem:[#allocation5 + $0x5b0] sm:$0xff]
    %v299 = vld [vmem:[#allocation5 + $0x5b8] sm:$0xff]
    %v300 = vld [vmem:[#allocation5 + $0x5c0] sm:$0xff]
    %v301 = vld [vmem:[#allocation5 + $0x5c8] sm:$0xff]
    %v302 = vld [vmem:[#allocation5 + $0x5d0] sm:$0xff]
    %v303 = vld [vmem:[#allocation5 + $0x5d8] sm:$0xff]
    %v304 = vld [vmem:[#allocation5 + $0x5e0] sm:$0xff]
    %v305 = vld [vmem:[#allocation5 + $0x5e8] sm:$0xff]
    %v306 = vld [vmem:[#allocation5 + $0x5f0] sm:$0xff]
    %v307 = vld [vmem:[#allocation5 + $0x5f8] sm:$0xff]
    %v308 = vld [vmem:[#allocation5 + $0x600] sm:$0xff]
    %v309 = vld [vmem:[#allocation5 + $0x608] sm:$0xff]
    %v310 = vld [vmem:[#allocation5 + $0x610] sm:$0xff]
    %v311 = vld [vmem:[#allocation5 + $0x618] sm:$0xff]
    %v312 = vld [vmem:[#allocation5 + $0x620] sm:$0xff]
    %v313 = vld [vmem:[#allocation5 + $0x628] sm:$0xff]
    %v314 = vld [vmem:[#allocation5 + $0x630] sm:$0xff]
    %v315 = vld [vmem:[#allocation5 + $0x638] sm:$0xff]
    %v316 = vld [vmem:[#allocation5 + $0x640] sm:$0xff]
    %v317 = vld [vmem:[#allocation5 + $0x648] sm:$0xff]
    %v318 = vld [vmem:[#allocation5 + $0x650] sm:$0xff]
    %v319 = vld [vmem:[#allocation5 + $0x658] sm:$0xff]
    %v320 = vld [vmem:[#allocation5 + $0x660] sm:$0xff]
    %v321 = vld [vmem:[#allocation5 + $0x668] sm:$0xff]
    %v322 = vld [vmem:[#allocation5 + $0x670] sm:$0xff]
    %v323 = vld [vmem:[#allocation5 + $0x678] sm:$0xff]
    %v324 = vld [vmem:[#allocation5 + $0x680] sm:$0xff]
    %v325 = vld [vmem:[#allocation5 + $0x688] sm:$0xff]
    %v326 = vld [vmem:[#allocation5 + $0x690] sm:$0xff]
    %v327 = vld [vmem:[#allocation5 + $0x698] sm:$0xff]
    %v328 = vld [vmem:[#allocation5 + $0x6a0] sm:$0xff]
    %v329 = vld [vmem:[#allocation5 + $0x6a8] sm:$0xff]
    %v330 = vld [vmem:[#allocation5 + $0x6b0] sm:$0xff]
    %v331 = vld [vmem:[#allocation5 + $0x6b8] sm:$0xff]
    %v332 = vld [vmem:[#allocation5 + $0x6c0] sm:$0xff]
    %v333 = vld [vmem:[#allocation5 + $0x6c8] sm:$0xff]
    %v334 = vld [vmem:[#allocation5 + $0x6d0] sm:$0xff]
    %v335 = vld [vmem:[#allocation5 + $0x6d8] sm:$0xff]
    %v336 = vld [vmem:[#allocation5 + $0x6e0] sm:$0xff]
    %v337 = vld [vmem:[#allocation5 + $0x6e8] sm:$0xff]
    %v338 = vld [vmem:[#allocation5 + $0x6f0] sm:$0xff]
    %v339 = vld [vmem:[#allocation5 + $0x6f8] sm:$0xff]
    %v340 = vld [vmem:[#allocation5 + $0x700] sm:$0xff]
    %v341 = vld [vmem:[#allocation5 + $0x708] sm:$0xff]
    %v342 = vld [vmem:[#allocation5 + $0x710] sm:$0xff]
    %v343 = vld [vmem:[#allocation5 + $0x718] sm:$0xff]
    %v344 = vld [vmem:[#allocation5 + $0x720] sm:$0xff]
    %v345 = vld [vmem:[#allocation5 + $0x728] sm:$0xff]
    %v346 = vld [vmem:[#allocation5 + $0x730] sm:$0xff]
    %v347 = vld [vmem:[#allocation5 + $0x738] sm:$0xff]
    %v348 = vld [vmem:[#allocation5 + $0x740] sm:$0xff]
    %v349 = vld [vmem:[#allocation5 + $0x748] sm:$0xff]
    %v350 = vld [vmem:[#allocation5 + $0x750] sm:$0xff]
    %v351 = vld [vmem:[#allocation5 + $0x758] sm:$0xff]
    %v352 = vld [vmem:[#allocation5 + $0x760] sm:$0xff]
    %v353 = vld [vmem:[#allocation5 + $0x768] sm:$0xff]
    %v354 = vld [vmem:[#allocation5 + $0x770] sm:$0xff]
    %v355 = vld [vmem:[#allocation5 + $0x778] sm:$0xff]
    %v356 = vld [vmem:[#allocation5 + $0x780] sm:$0xff]
    %v357 = vld [vmem:[#allocation5 + $0x788] sm:$0xff]
    %v358 = vld [vmem:[#allocation5 + $0x790] sm:$0xff]
    %v359 = vld [vmem:[#allocation5 + $0x798] sm:$0xff]
    %v360 = vld [vmem:[#allocation5 + $0x7a0] sm:$0xff]
    %v361 = vld [vmem:[#allocation5 + $0x7a8] sm:$0xff]
    %v362 = vld [vmem:[#allocation5 + $0x7b0] sm:$0xff]
    %v363 = vld [vmem:[#allocation5 + $0x7b8] sm:$0xff]
    %v364 = vld [vmem:[#allocation5 + $0x7c0] sm:$0xff]
    %v365 = vld [vmem:[#allocation5 + $0x7c8] sm:$0xff]
    %v366 = vld [vmem:[#allocation5 + $0x7d0] sm:$0xff]
    %v367 = vld [vmem:[#allocation5 + $0x7d8] sm:$0xff]
    %v368 = vld [vmem:[#allocation5 + $0x7e0] sm:$0xff]
    %v369 = vld [vmem:[#allocation5 + $0x7e8] sm:$0xff]
    %v370 = vld [vmem:[#allocation5 + $0x7f0] sm:$0xff]
    %v371 = vld [vmem:[#allocation5 + $0x7f8] sm:$0xff]
    %v372 = vld [vmem:[#allocation5 + $0x800] sm:$0xff]
    %v373 = vld [vmem:[#allocation5 + $0x808] sm:$0xff]
    %v374 = vld [vmem:[#allocation5 + $0x810] sm:$0xff]
    %v375 = vld [vmem:[#allocation5 + $0x818] sm:$0xff]
    %v376 = vld [vmem:[#allocation5 + $0x820] sm:$0xff]
    %v377 = vld [vmem:[#allocation5 + $0x828] sm:$0xff]
    %v378 = vld [vmem:[#allocation5 + $0x830] sm:$0xff]
    %v379 = vld [vmem:[#allocation5 + $0x838] sm:$0xff]
    %v380 = vld [vmem:[#allocation5 + $0x840] sm:$0xff]
    %v381 = vld [vmem:[#allocation5 + $0x848] sm:$0xff]
    %v382 = vld [vmem:[#allocation5 + $0x850] sm:$0xff]
    %v383 = vld [vmem:[#allocation5 + $0x858] sm:$0xff]
    %v384 = vld [vmem:[#allocation5 + $0x860] sm:$0xff]
    %v385 = vld [vmem:[#allocation5 + $0x868] sm:$0xff]
    %v386 = vld [vmem:[#allocation5 + $0x870] sm:$0xff]
    %v387 = vld [vmem:[#allocation5 + $0x878] sm:$0xff]
    %v388 = vld [vmem:[#allocation5 + $0x880] sm:$0xff]
    %v389 = vld [vmem:[#allocation5 + $0x888] sm:$0xff]
    %v390 = vld [vmem:[#allocation5 + $0x890] sm:$0xff]
    %v391 = vld [vmem:[#allocation5 + $0x898] sm:$0xff]
    %v392 = vld [vmem:[#allocation5 + $0x8a0] sm:$0xff]
    %v393 = vld [vmem:[#allocation5 + $0x8a8] sm:$0xff]
    %v394 = vld [vmem:[#allocation5 + $0x8b0] sm:$0xff]
    %v395 = vld [vmem:[#allocation5 + $0x8b8] sm:$0xff]
    %v396 = vld [vmem:[#allocation5 + $0x8c0] sm:$0xff]
    %v397 = vld [vmem:[#allocation5 + $0x8c8] sm:$0xff]
    %v398 = vld [vmem:[#allocation5 + $0x8d0] sm:$0xff]
    %v399 = vld [vmem:[#allocation5 + $0x8d8] sm:$0xff]
    %v400 = vld [vmem:[#allocation5 + $0x8e0] sm:$0xff]
    %v401 = vld [vmem:[#allocation5 + $0x8e8] sm:$0xff]
    %v402 = vld [vmem:[#allocation5 + $0x8f0] sm:$0xff]
    %v403 = vld [vmem:[#allocation5 + $0x8f8] sm:$0xff]
    %v404 = vld [vmem:[#allocation5 + $0x900] sm:$0xff]
    %v405 = vld [vmem:[#allocation5 + $0x908] sm:$0xff]
    %v406 = vld [vmem:[#allocation5 + $0x910] sm:$0xff]
    %v407 = vld [vmem:[#allocation5 + $0x918] sm:$0xff]
    %v408 = vld [vmem:[#allocation5 + $0x920] sm:$0xff]
    %v409 = vld [vmem:[#allocation5 + $0x928] sm:$0xff]
    %v410 = vld [vmem:[#allocation5 + $0x930] sm:$0xff]
    %v411 = vld [vmem:[#allocation5 + $0x938] sm:$0xff]
    %v412 = vld [vmem:[#allocation5 + $0x940] sm:$0xff]
    %v413 = vld [vmem:[#allocation5 + $0x948] sm:$0xff]
    %v414 = vld [vmem:[#allocation5 + $0x950] sm:$0xff]
    %v415 = vld [vmem:[#allocation5 + $0x958] sm:$0xff]
    %v416 = vld [vmem:[#allocation5 + $0x960] sm:$0xff]
    %v417 = vld [vmem:[#allocation5 + $0x968] sm:$0xff]
    %v418 = vld [vmem:[#allocation5 + $0x970] sm:$0xff]
    %v419 = vld [vmem:[#allocation5 + $0x978] sm:$0xff]
    %v420 = vld [vmem:[#allocation5 + $0x980] sm:$0xff]
    %v421 = vld [vmem:[#allocation5 + $0x988] sm:$0xff]
    %v422 = vld [vmem:[#allocation5 + $0x990] sm:$0xff]
    %v423 = vld [vmem:[#allocation5 + $0x998] sm:$0xff]
    %v424 = vld [vmem:[#allocation5 + $0x9a0] sm:$0xff]
    %v425 = vld [vmem:[#allocation5 + $0x9a8] sm:$0xff]
    %v426 = vld [vmem:[#allocation5 + $0x9b0] sm:$0xff]
    %v427 = vld [vmem:[#allocation5 + $0x9b8] sm:$0xff]
    %v428 = vld [vmem:[#allocation5 + $0x9c0] sm:$0xff]
    %v429 = vld [vmem:[#allocation5 + $0x9c8] sm:$0xff]
    %v430 = vld [vmem:[#allocation5 + $0x9d0] sm:$0xff]
    %v431 = vld [vmem:[#allocation5 + $0x9d8] sm:$0xff]
    %v432 = vld [vmem:[#allocation5 + $0x9e0] sm:$0xff]
    %v433 = vld [vmem:[#allocation5 + $0x9e8] sm:$0xff]
    %v434 = vld [vmem:[#allocation5 + $0x9f0] sm:$0xff]
    %v435 = vld [vmem:[#allocation5 + $0x9f8] sm:$0xff]
    %v436 = vld [vmem:[#allocation5 + $0xa00] sm:$0xff]
    %v437 = vld [vmem:[#allocation5 + $0xa08] sm:$0xff]
    %v438 = vld [vmem:[#allocation5 + $0xa10] sm:$0xff]
    %v439 = vld [vmem:[#allocation5 + $0xa18] sm:$0xff]
    %v440 = vld [vmem:[#allocation5 + $0xa20] sm:$0xff]
    %v441 = vld [vmem:[#allocation5 + $0xa28] sm:$0xff]
    %v442 = vld [vmem:[#allocation5 + $0xa30] sm:$0xff]
    %v443 = vld [vmem:[#allocation5 + $0xa38] sm:$0xff]
    %v444 = vld [vmem:[#allocation5 + $0xa40] sm:$0xff]
    %v445 = vld [vmem:[#allocation5 + $0xa48] sm:$0xff]
    %v446 = vld [vmem:[#allocation5 + $0xa50] sm:$0xff]
    %v447 = vld [vmem:[#allocation5 + $0xa58] sm:$0xff]
    %v448 = vld [vmem:[#allocation5 + $0xa60] sm:$0xff]
    %v449 = vld [vmem:[#allocation5 + $0xa68] sm:$0xff]
    %v450 = vld [vmem:[#allocation5 + $0xa70] sm:$0xff]
    %v451 = vld [vmem:[#allocation5 + $0xa78] sm:$0xff]
    %v452 = vld [vmem:[#allocation5 + $0xa80] sm:$0xff]
    %v453 = vld [vmem:[#allocation5 + $0xa88] sm:$0xff]
    %v454 = vld [vmem:[#allocation5 + $0xa90] sm:$0xff]
    %v455 = vld [vmem:[#allocation5 + $0xa98] sm:$0xff]
    %v456 = vld [vmem:[#allocation5 + $0xaa0] sm:$0xff]
    %v457 = vld [vmem:[#allocation5 + $0xaa8] sm:$0xff]
    %v458 = vld [vmem:[#allocation5 + $0xab0] sm:$0xff]
    %v459 = vld [vmem:[#allocation5 + $0xab8] sm:$0xff]
    %v460 = vld [vmem:[#allocation5 + $0xac0] sm:$0xff]
    %v461 = vld [vmem:[#allocation5 + $0xac8] sm:$0xff]
    %v462 = vld [vmem:[#allocation5 + $0xad0] sm:$0xff]
    %v463 = vld [vmem:[#allocation5 + $0xad8] sm:$0xff]
    %v464 = vld [vmem:[#allocation5 + $0xae0] sm:$0xff]
    %v465 = vld [vmem:[#allocation5 + $0xae8] sm:$0xff]
    %v466 = vld [vmem:[#allocation5 + $0xaf0] sm:$0xff]
    %v467 = vld [vmem:[#allocation5 + $0xaf8] sm:$0xff]
    %v468 = vld [vmem:[#allocation5 + $0xb00] sm:$0xff]
    %v469 = vld [vmem:[#allocation5 + $0xb08] sm:$0xff]
    %v470 = vld [vmem:[#allocation5 + $0xb10] sm:$0xff]
    %v471 = vld [vmem:[#allocation5 + $0xb18] sm:$0xff]
    %v472 = vld [vmem:[#allocation5 + $0xb20] sm:$0xff]
    %v473 = vld [vmem:[#allocation5 + $0xb28] sm:$0xff]
    %v474 = vld [vmem:[#allocation5 + $0xb30] sm:$0xff]
    %v475 = vld [vmem:[#allocation5 + $0xb38] sm:$0xff]
    %v476 = vld [vmem:[#allocation5 + $0xb40] sm:$0xff]
    %v477 = vld [vmem:[#allocation5 + $0xb48] sm:$0xff]
    %v478 = vld [vmem:[#allocation5 + $0xb50] sm:$0xff]
    %v479 = vld [vmem:[#allocation5 + $0xb58] sm:$0xff]
    %v480 = vld [vmem:[#allocation5 + $0xb60] sm:$0xff]
    %v481 = vld [vmem:[#allocation5 + $0xb68] sm:$0xff]
    %v482 = vld [vmem:[#allocation5 + $0xb70] sm:$0xff]
    %v483 = vld [vmem:[#allocation5 + $0xb78] sm:$0xff]
    %v484 = vld [vmem:[#allocation5 + $0xb80] sm:$0xff]
    %v485 = vld [vmem:[#allocation5 + $0xb88] sm:$0xff]
    %v486 = vld [vmem:[#allocation5 + $0xb90] sm:$0xff]
    %v487 = vld [vmem:[#allocation5 + $0xb98] sm:$0xff]
    %v488 = vld [vmem:[#allocation5 + $0xba0] sm:$0xff]
    %v489 = vld [vmem:[#allocation5 + $0xba8] sm:$0xff]
    %v490 = vld [vmem:[#allocation5 + $0xbb0] sm:$0xff]
    %v491 = vld [vmem:[#allocation5 + $0xbb8] sm:$0xff]
    %v492 = vld [vmem:[#allocation5 + $0xbc0] sm:$0xff]
    %v493 = vld [vmem:[#allocation5 + $0xbc8] sm:$0xff]
    %v494 = vld [vmem:[#allocation5 + $0xbd0] sm:$0xff]
    %v495 = vld [vmem:[#allocation5 + $0xbd8] sm:$0xff]
    %v496 = vld [vmem:[#allocation5 + $0xbe0] sm:$0xff]
    %v497 = vld [vmem:[#allocation5 + $0xbe8] sm:$0xff]
    %v498 = vld [vmem:[#allocation5 + $0xbf0] sm:$0xff]
    %v499 = vld [vmem:[#allocation5 + $0xbf8] sm:$0xff]
    %v500 = vld [vmem:[#allocation5 + $0xc00] sm:$0xff]
    %v501 = vld [vmem:[#allocation5 + $0xc08] sm:$0xff]
    %v502 = vld [vmem:[#allocation5 + $0xc10] sm:$0xff]
    %v503 = vld [vmem:[#allocation5 + $0xc18] sm:$0xff]
    %v504 = vld [vmem:[#allocation5 + $0xc20] sm:$0xff]
    %v505 = vld [vmem:[#allocation5 + $0xc28] sm:$0xff]
    %v506 = vld [vmem:[#allocation5 + $0xc30] sm:$0xff]
    %v507 = vld [vmem:[#allocation5 + $0xc38] sm:$0xff]
    %v508 = vld [vmem:[#allocation5 + $0xc40] sm:$0xff]
    %v509 = vld [vmem:[#allocation5 + $0xc48] sm:$0xff]
    %v510 = vld [vmem:[#allocation5 + $0xc50] sm:$0xff]
    %v511 = vld [vmem:[#allocation5 + $0xc58] sm:$0xff]
    %v512 = vld [vmem:[#allocation5 + $0xc60] sm:$0xff]
    %v513 = vld [vmem:[#allocation5 + $0xc68] sm:$0xff]
    %v514 = vld [vmem:[#allocation5 + $0xc70] sm:$0xff]
    %v515 = vld [vmem:[#allocation5 + $0xc78] sm:$0xff]
    %v516 = vld [vmem:[#allocation5 + $0xc80] sm:$0xff]
    %v517 = vld [vmem:[#allocation5 + $0xc88] sm:$0xff]
    %v518 = vld [vmem:[#allocation5 + $0xc90] sm:$0xff]
    %v519 = vld [vmem:[#allocation5 + $0xc98] sm:$0xff]
    %v520 = vld [vmem:[#allocation5 + $0xca0] sm:$0xff]
    %v521 = vld [vmem:[#allocation5 + $0xca8] sm:$0xff]
    %v522 = vld [vmem:[#allocation5 + $0xcb0] sm:$0xff]
    %v523 = vld [vmem:[#allocation5 + $0xcb8] sm:$0xff]
    %v524 = vld [vmem:[#allocation5 + $0xcc0] sm:$0xff]
    %v525 = vld [vmem:[#allocation5 + $0xcc8] sm:$0xff]
    %v526 = vld [vmem:[#allocation5 + $0xcd0] sm:$0xff]
    %v527 = vld [vmem:[#allocation5 + $0xcd8] sm:$0xff]
    %v528 = vld [vmem:[#allocation5 + $0xce0] sm:$0xff]
    %v529 = vld [vmem:[#allocation5 + $0xce8] sm:$0xff]
    %v530 = vld [vmem:[#allocation5 + $0xcf0] sm:$0xff]
    %v531 = vld [vmem:[#allocation5 + $0xcf8] sm:$0xff]
    %v532 = vld [vmem:[#allocation5 + $0xd00] sm:$0xff]
    %v533 = vld [vmem:[#allocation5 + $0xd08] sm:$0xff]
    %v534 = vld [vmem:[#allocation5 + $0xd10] sm:$0xff]
    %v535 = vld [vmem:[#allocation5 + $0xd18] sm:$0xff]
    %v536 = vld [vmem:[#allocation5 + $0xd20] sm:$0xff]
    %v537 = vld [vmem:[#allocation5 + $0xd28] sm:$0xff]
    %v538 = vld [vmem:[#allocation5 + $0xd30] sm:$0xff]
    %v539 = vld [vmem:[#allocation5 + $0xd38] sm:$0xff]
    %v540 = vld [vmem:[#allocation5 + $0xd40] sm:$0xff]
    %v541 = vld [vmem:[#allocation5 + $0xd48] sm:$0xff]
    %v542 = vld [vmem:[#allocation5 + $0xd50] sm:$0xff]
    %v543 = vld [vmem:[#allocation5 + $0xd58] sm:$0xff]
    %v544 = vld [vmem:[#allocation5 + $0xd60] sm:$0xff]
    %v545 = vld [vmem:[#allocation5 + $0xd68] sm:$0xff]
    %v546 = vld [vmem:[#allocation5 + $0xd70] sm:$0xff]
    %v547 = vld [vmem:[#allocation5 + $0xd78] sm:$0xff]
    %v548 = vld [vmem:[#allocation5 + $0xd80] sm:$0xff]
    %v549 = vld [vmem:[#allocation5 + $0xd88] sm:$0xff]
    %v550 = vld [vmem:[#allocation5 + $0xd90] sm:$0xff]
    %v551 = vld [vmem:[#allocation5 + $0xd98] sm:$0xff]
    %v552 = vld [vmem:[#allocation5 + $0xda0] sm:$0xff]
    %v553 = vld [vmem:[#allocation5 + $0xda8] sm:$0xff]
    %v554 = vld [vmem:[#allocation5 + $0xdb0] sm:$0xff]
    %v555 = vld [vmem:[#allocation5 + $0xdb8] sm:$0xff]
    %v556 = vld [vmem:[#allocation5 + $0xdc0] sm:$0xff]
    %v557 = vld [vmem:[#allocation5 + $0xdc8] sm:$0xff]
    %v558 = vld [vmem:[#allocation5 + $0xdd0] sm:$0xff]
    %v559 = vld [vmem:[#allocation5 + $0xdd8] sm:$0xff]
    %v560 = vld [vmem:[#allocation5 + $0xde0] sm:$0xff]
    %v561 = vld [vmem:[#allocation5 + $0xde8] sm:$0xff]
    %v562 = vld [vmem:[#allocation5 + $0xdf0] sm:$0xff]
    %v563 = vld [vmem:[#allocation5 + $0xdf8] sm:$0xff]
    %v564 = vld [vmem:[#allocation5 + $0xe00] sm:$0xff]
    %v565 = vld [vmem:[#allocation5 + $0xe08] sm:$0xff]
    %v566 = vld [vmem:[#allocation5 + $0xe10] sm:$0xff]
    %v567 = vld [vmem:[#allocation5 + $0xe18] sm:$0xff]
    %v568 = vld [vmem:[#allocation5 + $0xe20] sm:$0xff]
    %v569 = vld [vmem:[#allocation5 + $0xe28] sm:$0xff]
    %v570 = vld [vmem:[#allocation5 + $0xe30] sm:$0xff]
    %v571 = vld [vmem:[#allocation5 + $0xe38] sm:$0xff]
    %v572 = vld [vmem:[#allocation5 + $0xe40] sm:$0xff]
    %v573 = vld [vmem:[#allocation5 + $0xe48] sm:$0xff]
    %v574 = vld [vmem:[#allocation5 + $0xe50] sm:$0xff]
    %v575 = vld [vmem:[#allocation5 + $0xe58] sm:$0xff]
    %v576 = vld [vmem:[#allocation5 + $0xe60] sm:$0xff]
    %v577 = vld [vmem:[#allocation5 + $0xe68] sm:$0xff]
    %v578 = vld [vmem:[#allocation5 + $0xe70] sm:$0xff]
    %v579 = vld [vmem:[#allocation5 + $0xe78] sm:$0xff]
    %v580 = vld [vmem:[#allocation5 + $0xe80] sm:$0xff]
    %v581 = vld [vmem:[#allocation5 + $0xe88] sm:$0xff]
    %v582 = vld [vmem:[#allocation5 + $0xe90] sm:$0xff]
    %v583 = vld [vmem:[#allocation5 + $0xe98] sm:$0xff]
    %v584 = vld [vmem:[#allocation5 + $0xea0] sm:$0xff]
    %v585 = vld [vmem:[#allocation5 + $0xea8] sm:$0xff]
    %v586 = vld [vmem:[#allocation5 + $0xeb0] sm:$0xff]
    %v587 = vld [vmem:[#allocation5 + $0xeb8] sm:$0xff]
    %v588 = vld [vmem:[#allocation5 + $0xec0] sm:$0xff]
    %v589 = vld [vmem:[#allocation5 + $0xec8] sm:$0xff]
    %v590 = vld [vmem:[#allocation5 + $0xed0] sm:$0xff]
    %v591 = vld [vmem:[#allocation5 + $0xed8] sm:$0xff]
    %v592 = vld [vmem:[#allocation5 + $0xee0] sm:$0xff]
    %v593 = vld [vmem:[#allocation5 + $0xee8] sm:$0xff]
    %v594 = vld [vmem:[#allocation5 + $0xef0] sm:$0xff]
    %v595 = vld [vmem:[#allocation5 + $0xef8] sm:$0xff]
    %v596 = vld [vmem:[#allocation5 + $0xf00] sm:$0xff]
    %v597 = vld [vmem:[#allocation5 + $0xf08] sm:$0xff]
    %v598 = vld [vmem:[#allocation5 + $0xf10] sm:$0xff]
    %v599 = vld [vmem:[#allocation5 + $0xf18] sm:$0xff]
    %v600 = vld [vmem:[#allocation5 + $0xf20] sm:$0xff]
    %v601 = vld [vmem:[#allocation5 + $0xf28] sm:$0xff]
    %v602 = vld [vmem:[#allocation5 + $0xf30] sm:$0xff]
    %v603 = vld [vmem:[#allocation5 + $0xf38] sm:$0xff]
    %v604 = vld [vmem:[#allocation5 + $0xf40] sm:$0xff]
    %v605 = vld [vmem:[#allocation5 + $0xf48] sm:$0xff]
    %v606 = vld [vmem:[#allocation5 + $0xf50] sm:$0xff]
    %v607 = vld [vmem:[#allocation5 + $0xf58] sm:$0xff]
    %v608 = vld [vmem:[#allocation5 + $0xf60] sm:$0xff]
    %v609 = vld [vmem:[#allocation5 + $0xf68] sm:$0xff]
    %v610 = vld [vmem:[#allocation5 + $0xf70] sm:$0xff]
    %v611 = vld [vmem:[#allocation5 + $0xf78] sm:$0xff]
    %v612 = vld [vmem:[#allocation5 + $0xf80] sm:$0xff]
    %v613 = vld [vmem:[#allocation5 + $0xf88] sm:$0xff]
    %v614 = vld [vmem:[#allocation5 + $0xf90] sm:$0xff]
    %v615 = vld [vmem:[#allocation5 + $0xf98] sm:$0xff]
    %v616 = vld [vmem:[#allocation5 + $0xfa0] sm:$0xff]
    %v617 = vld [vmem:[#allocation5 + $0xfa8] sm:$0xff]
    %v618 = vld [vmem:[#allocation5 + $0xfb0] sm:$0xff]
    %v619 = vld [vmem:[#allocation5 + $0xfb8] sm:$0xff]
    %v620 = vld [vmem:[#allocation5 + $0xfc0] sm:$0xff]
    %v621 = vld [vmem:[#allocation5 + $0xfc8] sm:$0xff]
    %v622 = vld [vmem:[#allocation5 + $0xfd0] sm:$0xff]
    %v623 = vld [vmem:[#allocation5 + $0xfd8] sm:$0xff]
    %v624 = vld [vmem:[#allocation5 + $0xfe0] sm:$0xff]
    %v625 = vld [vmem:[#allocation5 + $0xfe8] sm:$0xff]
    %v626 = vld [vmem:[#allocation5 + $0xff0] sm:$0xff]
    %v627 = vld [vmem:[#allocation5 + $0xff8] sm:$0xff]
    %v628 = vld [vmem:[#allocation7] sm:$0xf]
    %v630 = vlaneseq
    %v631 = vshrl.u32 %v630, 7
    %v632 = vsub.s32 0, %v631
    %v633 = vrot.slane %v628, %v632
    %v634 = vlaneseq
    %v635 = vshrl.u32 %v634, 7
    %v636 = vsub.s32 1, %v635
    %v637 = vrot.slane %v628, %v636
    %v638 = vlaneseq
    %v639 = vshrl.u32 %v638, 7
    %v640 = vsub.s32 2, %v639
    %v641 = vrot.slane %v628, %v640
    %v642 = vlaneseq
    %v643 = vshrl.u32 %v642, 7
    %v644 = vsub.s32 3, %v643
    %v645 = vrot.slane %v628, %v644
    %v1162 = vunpack.c.l.b16 %v116
    %v1163 = vunpack.c.h.b16 %v116
    %v1164 = vunpack.c.l.b16 %v117
    %v1165 = vunpack.c.h.b16 %v117
    %v1166 = vunpack.c.l.b16 %v118
    %v1167 = vunpack.c.h.b16 %v118
    %v1168 = vunpack.c.l.b16 %v119
    %v1169 = vunpack.c.h.b16 %v119
    %v1170 = vunpack.c.l.b16 %v120
    %v1171 = vunpack.c.h.b16 %v120
    %v1172 = vunpack.c.l.b16 %v121
    %v1173 = vunpack.c.h.b16 %v121
    %v1174 = vunpack.c.l.b16 %v122
    %v1175 = vunpack.c.h.b16 %v122
    %v1176 = vunpack.c.l.b16 %v123
    %v1177 = vunpack.c.h.b16 %v123
    %v1178 = vunpack.c.l.b16 %v124
    %v1179 = vunpack.c.h.b16 %v124
    %v1180 = vunpack.c.l.b16 %v125
    %v1181 = vunpack.c.h.b16 %v125
    %v1182 = vunpack.c.l.b16 %v126
    %v1183 = vunpack.c.h.b16 %v126
    %v1184 = vunpack.c.l.b16 %v127
    %v1185 = vunpack.c.h.b16 %v127
    %v1186 = vunpack.c.l.b16 %v128
    %v1187 = vunpack.c.h.b16 %v128
    %v1188 = vunpack.c.l.b16 %v129
    %v1189 = vunpack.c.h.b16 %v129
    %v1190 = vunpack.c.l.b16 %v130
    %v1191 = vunpack.c.h.b16 %v130
    %v1192 = vunpack.c.l.b16 %v131
    %v1193 = vunpack.c.h.b16 %v131
    %v1194 = vunpack.c.l.b16 %v132
    %v1195 = vunpack.c.h.b16 %v132
    %v1196 = vunpack.c.l.b16 %v133
    %v1197 = vunpack.c.h.b16 %v133
    %v1198 = vunpack.c.l.b16 %v134
    %v1199 = vunpack.c.h.b16 %v134
    %v1200 = vunpack.c.l.b16 %v135
    %v1201 = vunpack.c.h.b16 %v135
    %v1202 = vunpack.c.l.b16 %v136
    %v1203 = vunpack.c.h.b16 %v136
    %v1204 = vunpack.c.l.b16 %v137
    %v1205 = vunpack.c.h.b16 %v137
    %v1206 = vunpack.c.l.b16 %v138
    %v1207 = vunpack.c.h.b16 %v138
    %v1208 = vunpack.c.l.b16 %v139
    %v1209 = vunpack.c.h.b16 %v139
    %v1210 = vunpack.c.l.b16 %v140
    %v1211 = vunpack.c.h.b16 %v140
    %v1212 = vunpack.c.l.b16 %v141
    %v1213 = vunpack.c.h.b16 %v141
    %v1214 = vunpack.c.l.b16 %v142
    %v1215 = vunpack.c.h.b16 %v142
    %v1216 = vunpack.c.l.b16 %v143
    %v1217 = vunpack.c.h.b16 %v143
    %v1218 = vunpack.c.l.b16 %v144
    %v1219 = vunpack.c.h.b16 %v144
    %v1220 = vunpack.c.l.b16 %v145
    %v1221 = vunpack.c.h.b16 %v145
    %v1222 = vunpack.c.l.b16 %v146
    %v1223 = vunpack.c.h.b16 %v146
    %v1224 = vunpack.c.l.b16 %v147
    %v1225 = vunpack.c.h.b16 %v147
    %v1226 = vunpack.c.l.b16 %v148
    %v1227 = vunpack.c.h.b16 %v148
    %v1228 = vunpack.c.l.b16 %v149
    %v1229 = vunpack.c.h.b16 %v149
    %v1230 = vunpack.c.l.b16 %v150
    %v1231 = vunpack.c.h.b16 %v150
    %v1232 = vunpack.c.l.b16 %v151
    %v1233 = vunpack.c.h.b16 %v151
    %v1234 = vunpack.c.l.b16 %v152
    %v1235 = vunpack.c.h.b16 %v152
    %v1236 = vunpack.c.l.b16 %v153
    %v1237 = vunpack.c.h.b16 %v153
    %v1238 = vunpack.c.l.b16 %v154
    %v1239 = vunpack.c.h.b16 %v154
    %v1240 = vunpack.c.l.b16 %v155
    %v1241 = vunpack.c.h.b16 %v155
    %v1242 = vunpack.c.l.b16 %v156
    %v1243 = vunpack.c.h.b16 %v156
    %v1244 = vunpack.c.l.b16 %v157
    %v1245 = vunpack.c.h.b16 %v157
    %v1246 = vunpack.c.l.b16 %v158
    %v1247 = vunpack.c.h.b16 %v158
    %v1248 = vunpack.c.l.b16 %v159
    %v1249 = vunpack.c.h.b16 %v159
    %v1250 = vunpack.c.l.b16 %v160
    %v1251 = vunpack.c.h.b16 %v160
    %v1252 = vunpack.c.l.b16 %v161
    %v1253 = vunpack.c.h.b16 %v161
    %v1254 = vunpack.c.l.b16 %v162
    %v1255 = vunpack.c.h.b16 %v162
    %v1256 = vunpack.c.l.b16 %v163
    %v1257 = vunpack.c.h.b16 %v163
    %v1258 = vunpack.c.l.b16 %v164
    %v1259 = vunpack.c.h.b16 %v164
    %v1260 = vunpack.c.l.b16 %v165
    %v1261 = vunpack.c.h.b16 %v165
    %v1262 = vunpack.c.l.b16 %v166
    %v1263 = vunpack.c.h.b16 %v166
    %v1264 = vunpack.c.l.b16 %v167
    %v1265 = vunpack.c.h.b16 %v167
    %v1266 = vunpack.c.l.b16 %v168
    %v1267 = vunpack.c.h.b16 %v168
    %v1268 = vunpack.c.l.b16 %v169
    %v1269 = vunpack.c.h.b16 %v169
    %v1270 = vunpack.c.l.b16 %v170
    %v1271 = vunpack.c.h.b16 %v170
    %v1272 = vunpack.c.l.b16 %v171
    %v1273 = vunpack.c.h.b16 %v171
    %v1274 = vunpack.c.l.b16 %v172
    %v1275 = vunpack.c.h.b16 %v172
    %v1276 = vunpack.c.l.b16 %v173
    %v1277 = vunpack.c.h.b16 %v173
    %v1278 = vunpack.c.l.b16 %v174
    %v1279 = vunpack.c.h.b16 %v174
    %v1280 = vunpack.c.l.b16 %v175
    %v1281 = vunpack.c.h.b16 %v175
    %v1282 = vunpack.c.l.b16 %v176
    %v1283 = vunpack.c.h.b16 %v176
    %v1284 = vunpack.c.l.b16 %v177
    %v1285 = vunpack.c.h.b16 %v177
    %v1286 = vunpack.c.l.b16 %v178
    %v1287 = vunpack.c.h.b16 %v178
    %v1288 = vunpack.c.l.b16 %v179
    %v1289 = vunpack.c.h.b16 %v179
    %v1290 = vunpack.c.l.b16 %v180
    %v1291 = vunpack.c.h.b16 %v180
    %v1292 = vunpack.c.l.b16 %v181
    %v1293 = vunpack.c.h.b16 %v181
    %v1294 = vunpack.c.l.b16 %v182
    %v1295 = vunpack.c.h.b16 %v182
    %v1296 = vunpack.c.l.b16 %v183
    %v1297 = vunpack.c.h.b16 %v183
    %v1298 = vunpack.c.l.b16 %v184
    %v1299 = vunpack.c.h.b16 %v184
    %v1300 = vunpack.c.l.b16 %v185
    %v1301 = vunpack.c.h.b16 %v185
    %v1302 = vunpack.c.l.b16 %v186
    %v1303 = vunpack.c.h.b16 %v186
    %v1304 = vunpack.c.l.b16 %v187
    %v1305 = vunpack.c.h.b16 %v187
    %v1306 = vunpack.c.l.b16 %v188
    %v1307 = vunpack.c.h.b16 %v188
    %v1308 = vunpack.c.l.b16 %v189
    %v1309 = vunpack.c.h.b16 %v189
    %v1310 = vunpack.c.l.b16 %v190
    %v1311 = vunpack.c.h.b16 %v190
    %v1312 = vunpack.c.l.b16 %v191
    %v1313 = vunpack.c.h.b16 %v191
    %v1314 = vunpack.c.l.b16 %v192
    %v1315 = vunpack.c.h.b16 %v192
    %v1316 = vunpack.c.l.b16 %v193
    %v1317 = vunpack.c.h.b16 %v193
    %v1318 = vunpack.c.l.b16 %v194
    %v1319 = vunpack.c.h.b16 %v194
    %v1320 = vunpack.c.l.b16 %v195
    %v1321 = vunpack.c.h.b16 %v195
    %v1322 = vunpack.c.l.b16 %v196
    %v1323 = vunpack.c.h.b16 %v196
    %v1324 = vunpack.c.l.b16 %v197
    %v1325 = vunpack.c.h.b16 %v197
    %v1326 = vunpack.c.l.b16 %v198
    %v1327 = vunpack.c.h.b16 %v198
    %v1328 = vunpack.c.l.b16 %v199
    %v1329 = vunpack.c.h.b16 %v199
    %v1330 = vunpack.c.l.b16 %v200
    %v1331 = vunpack.c.h.b16 %v200
    %v1332 = vunpack.c.l.b16 %v201
    %v1333 = vunpack.c.h.b16 %v201
    %v1334 = vunpack.c.l.b16 %v202
    %v1335 = vunpack.c.h.b16 %v202
    %v1336 = vunpack.c.l.b16 %v203
    %v1337 = vunpack.c.h.b16 %v203
    %v1338 = vunpack.c.l.b16 %v204
    %v1339 = vunpack.c.h.b16 %v204
    %v1340 = vunpack.c.l.b16 %v205
    %v1341 = vunpack.c.h.b16 %v205
    %v1342 = vunpack.c.l.b16 %v206
    %v1343 = vunpack.c.h.b16 %v206
    %v1344 = vunpack.c.l.b16 %v207
    %v1345 = vunpack.c.h.b16 %v207
    %v1346 = vunpack.c.l.b16 %v208
    %v1347 = vunpack.c.h.b16 %v208
    %v1348 = vunpack.c.l.b16 %v209
    %v1349 = vunpack.c.h.b16 %v209
    %v1350 = vunpack.c.l.b16 %v210
    %v1351 = vunpack.c.h.b16 %v210
    %v1352 = vunpack.c.l.b16 %v211
    %v1353 = vunpack.c.h.b16 %v211
    %v1354 = vunpack.c.l.b16 %v212
    %v1355 = vunpack.c.h.b16 %v212
    %v1356 = vunpack.c.l.b16 %v213
    %v1357 = vunpack.c.h.b16 %v213
    %v1358 = vunpack.c.l.b16 %v214
    %v1359 = vunpack.c.h.b16 %v214
    %v1360 = vunpack.c.l.b16 %v215
    %v1361 = vunpack.c.h.b16 %v215
    %v1362 = vunpack.c.l.b16 %v216
    %v1363 = vunpack.c.h.b16 %v216
    %v1364 = vunpack.c.l.b16 %v217
    %v1365 = vunpack.c.h.b16 %v217
    %v1366 = vunpack.c.l.b16 %v218
    %v1367 = vunpack.c.h.b16 %v218
    %v1368 = vunpack.c.l.b16 %v219
    %v1369 = vunpack.c.h.b16 %v219
    %v1370 = vunpack.c.l.b16 %v220
    %v1371 = vunpack.c.h.b16 %v220
    %v1372 = vunpack.c.l.b16 %v221
    %v1373 = vunpack.c.h.b16 %v221
    %v1374 = vunpack.c.l.b16 %v222
    %v1375 = vunpack.c.h.b16 %v222
    %v1376 = vunpack.c.l.b16 %v223
    %v1377 = vunpack.c.h.b16 %v223
    %v1378 = vunpack.c.l.b16 %v224
    %v1379 = vunpack.c.h.b16 %v224
    %v1380 = vunpack.c.l.b16 %v225
    %v1381 = vunpack.c.h.b16 %v225
    %v1382 = vunpack.c.l.b16 %v226
    %v1383 = vunpack.c.h.b16 %v226
    %v1384 = vunpack.c.l.b16 %v227
    %v1385 = vunpack.c.h.b16 %v227
    %v1386 = vunpack.c.l.b16 %v228
    %v1387 = vunpack.c.h.b16 %v228
    %v1388 = vunpack.c.l.b16 %v229
    %v1389 = vunpack.c.h.b16 %v229
    %v1390 = vunpack.c.l.b16 %v230
    %v1391 = vunpack.c.h.b16 %v230
    %v1392 = vunpack.c.l.b16 %v231
    %v1393 = vunpack.c.h.b16 %v231
    %v1394 = vunpack.c.l.b16 %v232
    %v1395 = vunpack.c.h.b16 %v232
    %v1396 = vunpack.c.l.b16 %v233
    %v1397 = vunpack.c.h.b16 %v233
    %v1398 = vunpack.c.l.b16 %v234
    %v1399 = vunpack.c.h.b16 %v234
    %v1400 = vunpack.c.l.b16 %v235
    %v1401 = vunpack.c.h.b16 %v235
    %v1402 = vunpack.c.l.b16 %v236
    %v1403 = vunpack.c.h.b16 %v236
    %v1404 = vunpack.c.l.b16 %v237
    %v1405 = vunpack.c.h.b16 %v237
    %v1406 = vunpack.c.l.b16 %v238
    %v1407 = vunpack.c.h.b16 %v238
    %v1408 = vunpack.c.l.b16 %v239
    %v1409 = vunpack.c.h.b16 %v239
    %v1410 = vunpack.c.l.b16 %v240
    %v1411 = vunpack.c.h.b16 %v240
    %v1412 = vunpack.c.l.b16 %v241
    %v1413 = vunpack.c.h.b16 %v241
    %v1414 = vunpack.c.l.b16 %v242
    %v1415 = vunpack.c.h.b16 %v242
    %v1416 = vunpack.c.l.b16 %v243
    %v1417 = vunpack.c.h.b16 %v243
    %v1418 = vunpack.c.l.b16 %v244
    %v1419 = vunpack.c.h.b16 %v244
    %v1420 = vunpack.c.l.b16 %v245
    %v1421 = vunpack.c.h.b16 %v245
    %v1422 = vunpack.c.l.b16 %v246
    %v1423 = vunpack.c.h.b16 %v246
    %v1424 = vunpack.c.l.b16 %v247
    %v1425 = vunpack.c.h.b16 %v247
    %v1426 = vunpack.c.l.b16 %v248
    %v1427 = vunpack.c.h.b16 %v248
    %v1428 = vunpack.c.l.b16 %v249
    %v1429 = vunpack.c.h.b16 %v249
    %v1430 = vunpack.c.l.b16 %v250
    %v1431 = vunpack.c.h.b16 %v250
    %v1432 = vunpack.c.l.b16 %v251
    %v1433 = vunpack.c.h.b16 %v251
    %v1434 = vunpack.c.l.b16 %v252
    %v1435 = vunpack.c.h.b16 %v252
    %v1436 = vunpack.c.l.b16 %v253
    %v1437 = vunpack.c.h.b16 %v253
    %v1438 = vunpack.c.l.b16 %v254
    %v1439 = vunpack.c.h.b16 %v254
    %v1440 = vunpack.c.l.b16 %v255
    %v1441 = vunpack.c.h.b16 %v255
    %v1442 = vunpack.c.l.b16 %v256
    %v1443 = vunpack.c.h.b16 %v256
    %v1444 = vunpack.c.l.b16 %v257
    %v1445 = vunpack.c.h.b16 %v257
    %v1446 = vunpack.c.l.b16 %v258
    %v1447 = vunpack.c.h.b16 %v258
    %v1448 = vunpack.c.l.b16 %v259
    %v1449 = vunpack.c.h.b16 %v259
    %v1450 = vunpack.c.l.b16 %v260
    %v1451 = vunpack.c.h.b16 %v260
    %v1452 = vunpack.c.l.b16 %v261
    %v1453 = vunpack.c.h.b16 %v261
    %v1454 = vunpack.c.l.b16 %v262
    %v1455 = vunpack.c.h.b16 %v262
    %v1456 = vunpack.c.l.b16 %v263
    %v1457 = vunpack.c.h.b16 %v263
    %v1458 = vunpack.c.l.b16 %v264
    %v1459 = vunpack.c.h.b16 %v264
    %v1460 = vunpack.c.l.b16 %v265
    %v1461 = vunpack.c.h.b16 %v265
    %v1462 = vunpack.c.l.b16 %v266
    %v1463 = vunpack.c.h.b16 %v266
    %v1464 = vunpack.c.l.b16 %v267
    %v1465 = vunpack.c.h.b16 %v267
    %v1466 = vunpack.c.l.b16 %v268
    %v1467 = vunpack.c.h.b16 %v268
    %v1468 = vunpack.c.l.b16 %v269
    %v1469 = vunpack.c.h.b16 %v269
    %v1470 = vunpack.c.l.b16 %v270
    %v1471 = vunpack.c.h.b16 %v270
    %v1472 = vunpack.c.l.b16 %v271
    %v1473 = vunpack.c.h.b16 %v271
    %v1474 = vunpack.c.l.b16 %v272
    %v1475 = vunpack.c.h.b16 %v272
    %v1476 = vunpack.c.l.b16 %v273
    %v1477 = vunpack.c.h.b16 %v273
    %v1478 = vunpack.c.l.b16 %v274
    %v1479 = vunpack.c.h.b16 %v274
    %v1480 = vunpack.c.l.b16 %v275
    %v1481 = vunpack.c.h.b16 %v275
    %v1482 = vunpack.c.l.b16 %v276
    %v1483 = vunpack.c.h.b16 %v276
    %v1484 = vunpack.c.l.b16 %v277
    %v1485 = vunpack.c.h.b16 %v277
    %v1486 = vunpack.c.l.b16 %v278
    %v1487 = vunpack.c.h.b16 %v278
    %v1488 = vunpack.c.l.b16 %v279
    %v1489 = vunpack.c.h.b16 %v279
    %v1490 = vunpack.c.l.b16 %v280
    %v1491 = vunpack.c.h.b16 %v280
    %v1492 = vunpack.c.l.b16 %v281
    %v1493 = vunpack.c.h.b16 %v281
    %v1494 = vunpack.c.l.b16 %v282
    %v1495 = vunpack.c.h.b16 %v282
    %v1496 = vunpack.c.l.b16 %v283
    %v1497 = vunpack.c.h.b16 %v283
    %v1498 = vunpack.c.l.b16 %v284
    %v1499 = vunpack.c.h.b16 %v284
    %v1500 = vunpack.c.l.b16 %v285
    %v1501 = vunpack.c.h.b16 %v285
    %v1502 = vunpack.c.l.b16 %v286
    %v1503 = vunpack.c.h.b16 %v286
    %v1504 = vunpack.c.l.b16 %v287
    %v1505 = vunpack.c.h.b16 %v287
    %v1506 = vunpack.c.l.b16 %v288
    %v1507 = vunpack.c.h.b16 %v288
    %v1508 = vunpack.c.l.b16 %v289
    %v1509 = vunpack.c.h.b16 %v289
    %v1510 = vunpack.c.l.b16 %v290
    %v1511 = vunpack.c.h.b16 %v290
    %v1512 = vunpack.c.l.b16 %v291
    %v1513 = vunpack.c.h.b16 %v291
    %v1514 = vunpack.c.l.b16 %v292
    %v1515 = vunpack.c.h.b16 %v292
    %v1516 = vunpack.c.l.b16 %v293
    %v1517 = vunpack.c.h.b16 %v293
    %v1518 = vunpack.c.l.b16 %v294
    %v1519 = vunpack.c.h.b16 %v294
    %v1520 = vunpack.c.l.b16 %v295
    %v1521 = vunpack.c.h.b16 %v295
    %v1522 = vunpack.c.l.b16 %v296
    %v1523 = vunpack.c.h.b16 %v296
    %v1524 = vunpack.c.l.b16 %v297
    %v1525 = vunpack.c.h.b16 %v297
    %v1526 = vunpack.c.l.b16 %v298
    %v1527 = vunpack.c.h.b16 %v298
    %v1528 = vunpack.c.l.b16 %v299
    %v1529 = vunpack.c.h.b16 %v299
    %v1530 = vunpack.c.l.b16 %v300
    %v1531 = vunpack.c.h.b16 %v300
    %v1532 = vunpack.c.l.b16 %v301
    %v1533 = vunpack.c.h.b16 %v301
    %v1534 = vunpack.c.l.b16 %v302
    %v1535 = vunpack.c.h.b16 %v302
    %v1536 = vunpack.c.l.b16 %v303
    %v1537 = vunpack.c.h.b16 %v303
    %v1538 = vunpack.c.l.b16 %v304
    %v1539 = vunpack.c.h.b16 %v304
    %v1540 = vunpack.c.l.b16 %v305
    %v1541 = vunpack.c.h.b16 %v305
    %v1542 = vunpack.c.l.b16 %v306
    %v1543 = vunpack.c.h.b16 %v306
    %v1544 = vunpack.c.l.b16 %v307
    %v1545 = vunpack.c.h.b16 %v307
    %v1546 = vunpack.c.l.b16 %v308
    %v1547 = vunpack.c.h.b16 %v308
    %v1548 = vunpack.c.l.b16 %v309
    %v1549 = vunpack.c.h.b16 %v309
    %v1550 = vunpack.c.l.b16 %v310
    %v1551 = vunpack.c.h.b16 %v310
    %v1552 = vunpack.c.l.b16 %v311
    %v1553 = vunpack.c.h.b16 %v311
    %v1554 = vunpack.c.l.b16 %v312
    %v1555 = vunpack.c.h.b16 %v312
    %v1556 = vunpack.c.l.b16 %v313
    %v1557 = vunpack.c.h.b16 %v313
    %v1558 = vunpack.c.l.b16 %v314
    %v1559 = vunpack.c.h.b16 %v314
    %v1560 = vunpack.c.l.b16 %v315
    %v1561 = vunpack.c.h.b16 %v315
    %v1562 = vunpack.c.l.b16 %v316
    %v1563 = vunpack.c.h.b16 %v316
    %v1564 = vunpack.c.l.b16 %v317
    %v1565 = vunpack.c.h.b16 %v317
    %v1566 = vunpack.c.l.b16 %v318
    %v1567 = vunpack.c.h.b16 %v318
    %v1568 = vunpack.c.l.b16 %v319
    %v1569 = vunpack.c.h.b16 %v319
    %v1570 = vunpack.c.l.b16 %v320
    %v1571 = vunpack.c.h.b16 %v320
    %v1572 = vunpack.c.l.b16 %v321
    %v1573 = vunpack.c.h.b16 %v321
    %v1574 = vunpack.c.l.b16 %v322
    %v1575 = vunpack.c.h.b16 %v322
    %v1576 = vunpack.c.l.b16 %v323
    %v1577 = vunpack.c.h.b16 %v323
    %v1578 = vunpack.c.l.b16 %v324
    %v1579 = vunpack.c.h.b16 %v324
    %v1580 = vunpack.c.l.b16 %v325
    %v1581 = vunpack.c.h.b16 %v325
    %v1582 = vunpack.c.l.b16 %v326
    %v1583 = vunpack.c.h.b16 %v326
    %v1584 = vunpack.c.l.b16 %v327
    %v1585 = vunpack.c.h.b16 %v327
    %v1586 = vunpack.c.l.b16 %v328
    %v1587 = vunpack.c.h.b16 %v328
    %v1588 = vunpack.c.l.b16 %v329
    %v1589 = vunpack.c.h.b16 %v329
    %v1590 = vunpack.c.l.b16 %v330
    %v1591 = vunpack.c.h.b16 %v330
    %v1592 = vunpack.c.l.b16 %v331
    %v1593 = vunpack.c.h.b16 %v331
    %v1594 = vunpack.c.l.b16 %v332
    %v1595 = vunpack.c.h.b16 %v332
    %v1596 = vunpack.c.l.b16 %v333
    %v1597 = vunpack.c.h.b16 %v333
    %v1598 = vunpack.c.l.b16 %v334
    %v1599 = vunpack.c.h.b16 %v334
    %v1600 = vunpack.c.l.b16 %v335
    %v1601 = vunpack.c.h.b16 %v335
    %v1602 = vunpack.c.l.b16 %v336
    %v1603 = vunpack.c.h.b16 %v336
    %v1604 = vunpack.c.l.b16 %v337
    %v1605 = vunpack.c.h.b16 %v337
    %v1606 = vunpack.c.l.b16 %v338
    %v1607 = vunpack.c.h.b16 %v338
    %v1608 = vunpack.c.l.b16 %v339
    %v1609 = vunpack.c.h.b16 %v339
    %v1610 = vunpack.c.l.b16 %v340
    %v1611 = vunpack.c.h.b16 %v340
    %v1612 = vunpack.c.l.b16 %v341
    %v1613 = vunpack.c.h.b16 %v341
    %v1614 = vunpack.c.l.b16 %v342
    %v1615 = vunpack.c.h.b16 %v342
    %v1616 = vunpack.c.l.b16 %v343
    %v1617 = vunpack.c.h.b16 %v343
    %v1618 = vunpack.c.l.b16 %v344
    %v1619 = vunpack.c.h.b16 %v344
    %v1620 = vunpack.c.l.b16 %v345
    %v1621 = vunpack.c.h.b16 %v345
    %v1622 = vunpack.c.l.b16 %v346
    %v1623 = vunpack.c.h.b16 %v346
    %v1624 = vunpack.c.l.b16 %v347
    %v1625 = vunpack.c.h.b16 %v347
    %v1626 = vunpack.c.l.b16 %v348
    %v1627 = vunpack.c.h.b16 %v348
    %v1628 = vunpack.c.l.b16 %v349
    %v1629 = vunpack.c.h.b16 %v349
    %v1630 = vunpack.c.l.b16 %v350
    %v1631 = vunpack.c.h.b16 %v350
    %v1632 = vunpack.c.l.b16 %v351
    %v1633 = vunpack.c.h.b16 %v351
    %v1634 = vunpack.c.l.b16 %v352
    %v1635 = vunpack.c.h.b16 %v352
    %v1636 = vunpack.c.l.b16 %v353
    %v1637 = vunpack.c.h.b16 %v353
    %v1638 = vunpack.c.l.b16 %v354
    %v1639 = vunpack.c.h.b16 %v354
    %v1640 = vunpack.c.l.b16 %v355
    %v1641 = vunpack.c.h.b16 %v355
    %v1642 = vunpack.c.l.b16 %v356
    %v1643 = vunpack.c.h.b16 %v356
    %v1644 = vunpack.c.l.b16 %v357
    %v1645 = vunpack.c.h.b16 %v357
    %v1646 = vunpack.c.l.b16 %v358
    %v1647 = vunpack.c.h.b16 %v358
    %v1648 = vunpack.c.l.b16 %v359
    %v1649 = vunpack.c.h.b16 %v359
    %v1650 = vunpack.c.l.b16 %v360
    %v1651 = vunpack.c.h.b16 %v360
    %v1652 = vunpack.c.l.b16 %v361
    %v1653 = vunpack.c.h.b16 %v361
    %v1654 = vunpack.c.l.b16 %v362
    %v1655 = vunpack.c.h.b16 %v362
    %v1656 = vunpack.c.l.b16 %v363
    %v1657 = vunpack.c.h.b16 %v363
    %v1658 = vunpack.c.l.b16 %v364
    %v1659 = vunpack.c.h.b16 %v364
    %v1660 = vunpack.c.l.b16 %v365
    %v1661 = vunpack.c.h.b16 %v365
    %v1662 = vunpack.c.l.b16 %v366
    %v1663 = vunpack.c.h.b16 %v366
    %v1664 = vunpack.c.l.b16 %v367
    %v1665 = vunpack.c.h.b16 %v367
    %v1666 = vunpack.c.l.b16 %v368
    %v1667 = vunpack.c.h.b16 %v368
    %v1668 = vunpack.c.l.b16 %v369
    %v1669 = vunpack.c.h.b16 %v369
    %v1670 = vunpack.c.l.b16 %v370
    %v1671 = vunpack.c.h.b16 %v370
    %v1672 = vunpack.c.l.b16 %v371
    %v1673 = vunpack.c.h.b16 %v371
    %v1674 = vunpack.c.l.b16 %v372
    %v1675 = vunpack.c.h.b16 %v372
    %v1676 = vunpack.c.l.b16 %v373
    %v1677 = vunpack.c.h.b16 %v373
    %v1678 = vunpack.c.l.b16 %v374
    %v1679 = vunpack.c.h.b16 %v374
    %v1680 = vunpack.c.l.b16 %v375
    %v1681 = vunpack.c.h.b16 %v375
    %v1682 = vunpack.c.l.b16 %v376
    %v1683 = vunpack.c.h.b16 %v376
    %v1684 = vunpack.c.l.b16 %v377
    %v1685 = vunpack.c.h.b16 %v377
    %v1686 = vunpack.c.l.b16 %v378
    %v1687 = vunpack.c.h.b16 %v378
    %v1688 = vunpack.c.l.b16 %v379
    %v1689 = vunpack.c.h.b16 %v379
    %v1690 = vunpack.c.l.b16 %v380
    %v1691 = vunpack.c.h.b16 %v380
    %v1692 = vunpack.c.l.b16 %v381
    %v1693 = vunpack.c.h.b16 %v381
    %v1694 = vunpack.c.l.b16 %v382
    %v1695 = vunpack.c.h.b16 %v382
    %v1696 = vunpack.c.l.b16 %v383
    %v1697 = vunpack.c.h.b16 %v383
    %v1698 = vunpack.c.l.b16 %v384
    %v1699 = vunpack.c.h.b16 %v384
    %v1700 = vunpack.c.l.b16 %v385
    %v1701 = vunpack.c.h.b16 %v385
    %v1702 = vunpack.c.l.b16 %v386
    %v1703 = vunpack.c.h.b16 %v386
    %v1704 = vunpack.c.l.b16 %v387
    %v1705 = vunpack.c.h.b16 %v387
    %v1706 = vunpack.c.l.b16 %v388
    %v1707 = vunpack.c.h.b16 %v388
    %v1708 = vunpack.c.l.b16 %v389
    %v1709 = vunpack.c.h.b16 %v389
    %v1710 = vunpack.c.l.b16 %v390
    %v1711 = vunpack.c.h.b16 %v390
    %v1712 = vunpack.c.l.b16 %v391
    %v1713 = vunpack.c.h.b16 %v391
    %v1714 = vunpack.c.l.b16 %v392
    %v1715 = vunpack.c.h.b16 %v392
    %v1716 = vunpack.c.l.b16 %v393
    %v1717 = vunpack.c.h.b16 %v393
    %v1718 = vunpack.c.l.b16 %v394
    %v1719 = vunpack.c.h.b16 %v394
    %v1720 = vunpack.c.l.b16 %v395
    %v1721 = vunpack.c.h.b16 %v395
    %v1722 = vunpack.c.l.b16 %v396
    %v1723 = vunpack.c.h.b16 %v396
    %v1724 = vunpack.c.l.b16 %v397
    %v1725 = vunpack.c.h.b16 %v397
    %v1726 = vunpack.c.l.b16 %v398
    %v1727 = vunpack.c.h.b16 %v398
    %v1728 = vunpack.c.l.b16 %v399
    %v1729 = vunpack.c.h.b16 %v399
    %v1730 = vunpack.c.l.b16 %v400
    %v1731 = vunpack.c.h.b16 %v400
    %v1732 = vunpack.c.l.b16 %v401
    %v1733 = vunpack.c.h.b16 %v401
    %v1734 = vunpack.c.l.b16 %v402
    %v1735 = vunpack.c.h.b16 %v402
    %v1736 = vunpack.c.l.b16 %v403
    %v1737 = vunpack.c.h.b16 %v403
    %v1738 = vunpack.c.l.b16 %v404
    %v1739 = vunpack.c.h.b16 %v404
    %v1740 = vunpack.c.l.b16 %v405
    %v1741 = vunpack.c.h.b16 %v405
    %v1742 = vunpack.c.l.b16 %v406
    %v1743 = vunpack.c.h.b16 %v406
    %v1744 = vunpack.c.l.b16 %v407
    %v1745 = vunpack.c.h.b16 %v407
    %v1746 = vunpack.c.l.b16 %v408
    %v1747 = vunpack.c.h.b16 %v408
    %v1748 = vunpack.c.l.b16 %v409
    %v1749 = vunpack.c.h.b16 %v409
    %v1750 = vunpack.c.l.b16 %v410
    %v1751 = vunpack.c.h.b16 %v410
    %v1752 = vunpack.c.l.b16 %v411
    %v1753 = vunpack.c.h.b16 %v411
    %v1754 = vunpack.c.l.b16 %v412
    %v1755 = vunpack.c.h.b16 %v412
    %v1756 = vunpack.c.l.b16 %v413
    %v1757 = vunpack.c.h.b16 %v413
    %v1758 = vunpack.c.l.b16 %v414
    %v1759 = vunpack.c.h.b16 %v414
    %v1760 = vunpack.c.l.b16 %v415
    %v1761 = vunpack.c.h.b16 %v415
    %v1762 = vunpack.c.l.b16 %v416
    %v1763 = vunpack.c.h.b16 %v416
    %v1764 = vunpack.c.l.b16 %v417
    %v1765 = vunpack.c.h.b16 %v417
    %v1766 = vunpack.c.l.b16 %v418
    %v1767 = vunpack.c.h.b16 %v418
    %v1768 = vunpack.c.l.b16 %v419
    %v1769 = vunpack.c.h.b16 %v419
    %v1770 = vunpack.c.l.b16 %v420
    %v1771 = vunpack.c.h.b16 %v420
    %v1772 = vunpack.c.l.b16 %v421
    %v1773 = vunpack.c.h.b16 %v421
    %v1774 = vunpack.c.l.b16 %v422
    %v1775 = vunpack.c.h.b16 %v422
    %v1776 = vunpack.c.l.b16 %v423
    %v1777 = vunpack.c.h.b16 %v423
    %v1778 = vunpack.c.l.b16 %v424
    %v1779 = vunpack.c.h.b16 %v424
    %v1780 = vunpack.c.l.b16 %v425
    %v1781 = vunpack.c.h.b16 %v425
    %v1782 = vunpack.c.l.b16 %v426
    %v1783 = vunpack.c.h.b16 %v426
    %v1784 = vunpack.c.l.b16 %v427
    %v1785 = vunpack.c.h.b16 %v427
    %v1786 = vunpack.c.l.b16 %v428
    %v1787 = vunpack.c.h.b16 %v428
    %v1788 = vunpack.c.l.b16 %v429
    %v1789 = vunpack.c.h.b16 %v429
    %v1790 = vunpack.c.l.b16 %v430
    %v1791 = vunpack.c.h.b16 %v430
    %v1792 = vunpack.c.l.b16 %v431
    %v1793 = vunpack.c.h.b16 %v431
    %v1794 = vunpack.c.l.b16 %v432
    %v1795 = vunpack.c.h.b16 %v432
    %v1796 = vunpack.c.l.b16 %v433
    %v1797 = vunpack.c.h.b16 %v433
    %v1798 = vunpack.c.l.b16 %v434
    %v1799 = vunpack.c.h.b16 %v434
    %v1800 = vunpack.c.l.b16 %v435
    %v1801 = vunpack.c.h.b16 %v435
    %v1802 = vunpack.c.l.b16 %v436
    %v1803 = vunpack.c.h.b16 %v436
    %v1804 = vunpack.c.l.b16 %v437
    %v1805 = vunpack.c.h.b16 %v437
    %v1806 = vunpack.c.l.b16 %v438
    %v1807 = vunpack.c.h.b16 %v438
    %v1808 = vunpack.c.l.b16 %v439
    %v1809 = vunpack.c.h.b16 %v439
    %v1810 = vunpack.c.l.b16 %v440
    %v1811 = vunpack.c.h.b16 %v440
    %v1812 = vunpack.c.l.b16 %v441
    %v1813 = vunpack.c.h.b16 %v441
    %v1814 = vunpack.c.l.b16 %v442
    %v1815 = vunpack.c.h.b16 %v442
    %v1816 = vunpack.c.l.b16 %v443
    %v1817 = vunpack.c.h.b16 %v443
    %v1818 = vunpack.c.l.b16 %v444
    %v1819 = vunpack.c.h.b16 %v444
    %v1820 = vunpack.c.l.b16 %v445
    %v1821 = vunpack.c.h.b16 %v445
    %v1822 = vunpack.c.l.b16 %v446
    %v1823 = vunpack.c.h.b16 %v446
    %v1824 = vunpack.c.l.b16 %v447
    %v1825 = vunpack.c.h.b16 %v447
    %v1826 = vunpack.c.l.b16 %v448
    %v1827 = vunpack.c.h.b16 %v448
    %v1828 = vunpack.c.l.b16 %v449
    %v1829 = vunpack.c.h.b16 %v449
    %v1830 = vunpack.c.l.b16 %v450
    %v1831 = vunpack.c.h.b16 %v450
    %v1832 = vunpack.c.l.b16 %v451
    %v1833 = vunpack.c.h.b16 %v451
    %v1834 = vunpack.c.l.b16 %v452
    %v1835 = vunpack.c.h.b16 %v452
    %v1836 = vunpack.c.l.b16 %v453
    %v1837 = vunpack.c.h.b16 %v453
    %v1838 = vunpack.c.l.b16 %v454
    %v1839 = vunpack.c.h.b16 %v454
    %v1840 = vunpack.c.l.b16 %v455
    %v1841 = vunpack.c.h.b16 %v455
    %v1842 = vunpack.c.l.b16 %v456
    %v1843 = vunpack.c.h.b16 %v456
    %v1844 = vunpack.c.l.b16 %v457
    %v1845 = vunpack.c.h.b16 %v457
    %v1846 = vunpack.c.l.b16 %v458
    %v1847 = vunpack.c.h.b16 %v458
    %v1848 = vunpack.c.l.b16 %v459
    %v1849 = vunpack.c.h.b16 %v459
    %v1850 = vunpack.c.l.b16 %v460
    %v1851 = vunpack.c.h.b16 %v460
    %v1852 = vunpack.c.l.b16 %v461
    %v1853 = vunpack.c.h.b16 %v461
    %v1854 = vunpack.c.l.b16 %v462
    %v1855 = vunpack.c.h.b16 %v462
    %v1856 = vunpack.c.l.b16 %v463
    %v1857 = vunpack.c.h.b16 %v463
    %v1858 = vunpack.c.l.b16 %v464
    %v1859 = vunpack.c.h.b16 %v464
    %v1860 = vunpack.c.l.b16 %v465
    %v1861 = vunpack.c.h.b16 %v465
    %v1862 = vunpack.c.l.b16 %v466
    %v1863 = vunpack.c.h.b16 %v466
    %v1864 = vunpack.c.l.b16 %v467
    %v1865 = vunpack.c.h.b16 %v467
    %v1866 = vunpack.c.l.b16 %v468
    %v1867 = vunpack.c.h.b16 %v468
    %v1868 = vunpack.c.l.b16 %v469
    %v1869 = vunpack.c.h.b16 %v469
    %v1870 = vunpack.c.l.b16 %v470
    %v1871 = vunpack.c.h.b16 %v470
    %v1872 = vunpack.c.l.b16 %v471
    %v1873 = vunpack.c.h.b16 %v471
    %v1874 = vunpack.c.l.b16 %v472
    %v1875 = vunpack.c.h.b16 %v472
    %v1876 = vunpack.c.l.b16 %v473
    %v1877 = vunpack.c.h.b16 %v473
    %v1878 = vunpack.c.l.b16 %v474
    %v1879 = vunpack.c.h.b16 %v474
    %v1880 = vunpack.c.l.b16 %v475
    %v1881 = vunpack.c.h.b16 %v475
    %v1882 = vunpack.c.l.b16 %v476
    %v1883 = vunpack.c.h.b16 %v476
    %v1884 = vunpack.c.l.b16 %v477
    %v1885 = vunpack.c.h.b16 %v477
    %v1886 = vunpack.c.l.b16 %v478
    %v1887 = vunpack.c.h.b16 %v478
    %v1888 = vunpack.c.l.b16 %v479
    %v1889 = vunpack.c.h.b16 %v479
    %v1890 = vunpack.c.l.b16 %v480
    %v1891 = vunpack.c.h.b16 %v480
    %v1892 = vunpack.c.l.b16 %v481
    %v1893 = vunpack.c.h.b16 %v481
    %v1894 = vunpack.c.l.b16 %v482
    %v1895 = vunpack.c.h.b16 %v482
    %v1896 = vunpack.c.l.b16 %v483
    %v1897 = vunpack.c.h.b16 %v483
    %v1898 = vunpack.c.l.b16 %v484
    %v1899 = vunpack.c.h.b16 %v484
    %v1900 = vunpack.c.l.b16 %v485
    %v1901 = vunpack.c.h.b16 %v485
    %v1902 = vunpack.c.l.b16 %v486
    %v1903 = vunpack.c.h.b16 %v486
    %v1904 = vunpack.c.l.b16 %v487
    %v1905 = vunpack.c.h.b16 %v487
    %v1906 = vunpack.c.l.b16 %v488
    %v1907 = vunpack.c.h.b16 %v488
    %v1908 = vunpack.c.l.b16 %v489
    %v1909 = vunpack.c.h.b16 %v489
    %v1910 = vunpack.c.l.b16 %v490
    %v1911 = vunpack.c.h.b16 %v490
    %v1912 = vunpack.c.l.b16 %v491
    %v1913 = vunpack.c.h.b16 %v491
    %v1914 = vunpack.c.l.b16 %v492
    %v1915 = vunpack.c.h.b16 %v492
    %v1916 = vunpack.c.l.b16 %v493
    %v1917 = vunpack.c.h.b16 %v493
    %v1918 = vunpack.c.l.b16 %v494
    %v1919 = vunpack.c.h.b16 %v494
    %v1920 = vunpack.c.l.b16 %v495
    %v1921 = vunpack.c.h.b16 %v495
    %v1922 = vunpack.c.l.b16 %v496
    %v1923 = vunpack.c.h.b16 %v496
    %v1924 = vunpack.c.l.b16 %v497
    %v1925 = vunpack.c.h.b16 %v497
    %v1926 = vunpack.c.l.b16 %v498
    %v1927 = vunpack.c.h.b16 %v498
    %v1928 = vunpack.c.l.b16 %v499
    %v1929 = vunpack.c.h.b16 %v499
    %v1930 = vunpack.c.l.b16 %v500
    %v1931 = vunpack.c.h.b16 %v500
    %v1932 = vunpack.c.l.b16 %v501
    %v1933 = vunpack.c.h.b16 %v501
    %v1934 = vunpack.c.l.b16 %v502
    %v1935 = vunpack.c.h.b16 %v502
    %v1936 = vunpack.c.l.b16 %v503
    %v1937 = vunpack.c.h.b16 %v503
    %v1938 = vunpack.c.l.b16 %v504
    %v1939 = vunpack.c.h.b16 %v504
    %v1940 = vunpack.c.l.b16 %v505
    %v1941 = vunpack.c.h.b16 %v505
    %v1942 = vunpack.c.l.b16 %v506
    %v1943 = vunpack.c.h.b16 %v506
    %v1944 = vunpack.c.l.b16 %v507
    %v1945 = vunpack.c.h.b16 %v507
    %v1946 = vunpack.c.l.b16 %v508
    %v1947 = vunpack.c.h.b16 %v508
    %v1948 = vunpack.c.l.b16 %v509
    %v1949 = vunpack.c.h.b16 %v509
    %v1950 = vunpack.c.l.b16 %v510
    %v1951 = vunpack.c.h.b16 %v510
    %v1952 = vunpack.c.l.b16 %v511
    %v1953 = vunpack.c.h.b16 %v511
    %v1954 = vunpack.c.l.b16 %v512
    %v1955 = vunpack.c.h.b16 %v512
    %v1956 = vunpack.c.l.b16 %v513
    %v1957 = vunpack.c.h.b16 %v513
    %v1958 = vunpack.c.l.b16 %v514
    %v1959 = vunpack.c.h.b16 %v514
    %v1960 = vunpack.c.l.b16 %v515
    %v1961 = vunpack.c.h.b16 %v515
    %v1962 = vunpack.c.l.b16 %v516
    %v1963 = vunpack.c.h.b16 %v516
    %v1964 = vunpack.c.l.b16 %v517
    %v1965 = vunpack.c.h.b16 %v517
    %v1966 = vunpack.c.l.b16 %v518
    %v1967 = vunpack.c.h.b16 %v518
    %v1968 = vunpack.c.l.b16 %v519
    %v1969 = vunpack.c.h.b16 %v519
    %v1970 = vunpack.c.l.b16 %v520
    %v1971 = vunpack.c.h.b16 %v520
    %v1972 = vunpack.c.l.b16 %v521
    %v1973 = vunpack.c.h.b16 %v521
    %v1974 = vunpack.c.l.b16 %v522
    %v1975 = vunpack.c.h.b16 %v522
    %v1976 = vunpack.c.l.b16 %v523
    %v1977 = vunpack.c.h.b16 %v523
    %v1978 = vunpack.c.l.b16 %v524
    %v1979 = vunpack.c.h.b16 %v524
    %v1980 = vunpack.c.l.b16 %v525
    %v1981 = vunpack.c.h.b16 %v525
    %v1982 = vunpack.c.l.b16 %v526
    %v1983 = vunpack.c.h.b16 %v526
    %v1984 = vunpack.c.l.b16 %v527
    %v1985 = vunpack.c.h.b16 %v527
    %v1986 = vunpack.c.l.b16 %v528
    %v1987 = vunpack.c.h.b16 %v528
    %v1988 = vunpack.c.l.b16 %v529
    %v1989 = vunpack.c.h.b16 %v529
    %v1990 = vunpack.c.l.b16 %v530
    %v1991 = vunpack.c.h.b16 %v530
    %v1992 = vunpack.c.l.b16 %v531
    %v1993 = vunpack.c.h.b16 %v531
    %v1994 = vunpack.c.l.b16 %v532
    %v1995 = vunpack.c.h.b16 %v532
    %v1996 = vunpack.c.l.b16 %v533
    %v1997 = vunpack.c.h.b16 %v533
    %v1998 = vunpack.c.l.b16 %v534
    %v1999 = vunpack.c.h.b16 %v534
    %v2000 = vunpack.c.l.b16 %v535
    %v2001 = vunpack.c.h.b16 %v535
    %v2002 = vunpack.c.l.b16 %v536
    %v2003 = vunpack.c.h.b16 %v536
    %v2004 = vunpack.c.l.b16 %v537
    %v2005 = vunpack.c.h.b16 %v537
    %v2006 = vunpack.c.l.b16 %v538
    %v2007 = vunpack.c.h.b16 %v538
    %v2008 = vunpack.c.l.b16 %v539
    %v2009 = vunpack.c.h.b16 %v539
    %v2010 = vunpack.c.l.b16 %v540
    %v2011 = vunpack.c.h.b16 %v540
    %v2012 = vunpack.c.l.b16 %v541
    %v2013 = vunpack.c.h.b16 %v541
    %v2014 = vunpack.c.l.b16 %v542
    %v2015 = vunpack.c.h.b16 %v542
    %v2016 = vunpack.c.l.b16 %v543
    %v2017 = vunpack.c.h.b16 %v543
    %v2018 = vunpack.c.l.b16 %v544
    %v2019 = vunpack.c.h.b16 %v544
    %v2020 = vunpack.c.l.b16 %v545
    %v2021 = vunpack.c.h.b16 %v545
    %v2022 = vunpack.c.l.b16 %v546
    %v2023 = vunpack.c.h.b16 %v546
    %v2024 = vunpack.c.l.b16 %v547
    %v2025 = vunpack.c.h.b16 %v547
    %v2026 = vunpack.c.l.b16 %v548
    %v2027 = vunpack.c.h.b16 %v548
    %v2028 = vunpack.c.l.b16 %v549
    %v2029 = vunpack.c.h.b16 %v549
    %v2030 = vunpack.c.l.b16 %v550
    %v2031 = vunpack.c.h.b16 %v550
    %v2032 = vunpack.c.l.b16 %v551
    %v2033 = vunpack.c.h.b16 %v551
    %v2034 = vunpack.c.l.b16 %v552
    %v2035 = vunpack.c.h.b16 %v552
    %v2036 = vunpack.c.l.b16 %v553
    %v2037 = vunpack.c.h.b16 %v553
    %v2038 = vunpack.c.l.b16 %v554
    %v2039 = vunpack.c.h.b16 %v554
    %v2040 = vunpack.c.l.b16 %v555
    %v2041 = vunpack.c.h.b16 %v555
    %v2042 = vunpack.c.l.b16 %v556
    %v2043 = vunpack.c.h.b16 %v556
    %v2044 = vunpack.c.l.b16 %v557
    %v2045 = vunpack.c.h.b16 %v557
    %v2046 = vunpack.c.l.b16 %v558
    %v2047 = vunpack.c.h.b16 %v558
    %v2048 = vunpack.c.l.b16 %v559
    %v2049 = vunpack.c.h.b16 %v559
    %v2050 = vunpack.c.l.b16 %v560
    %v2051 = vunpack.c.h.b16 %v560
    %v2052 = vunpack.c.l.b16 %v561
    %v2053 = vunpack.c.h.b16 %v561
    %v2054 = vunpack.c.l.b16 %v562
    %v2055 = vunpack.c.h.b16 %v562
    %v2056 = vunpack.c.l.b16 %v563
    %v2057 = vunpack.c.h.b16 %v563
    %v2058 = vunpack.c.l.b16 %v564
    %v2059 = vunpack.c.h.b16 %v564
    %v2060 = vunpack.c.l.b16 %v565
    %v2061 = vunpack.c.h.b16 %v565
    %v2062 = vunpack.c.l.b16 %v566
    %v2063 = vunpack.c.h.b16 %v566
    %v2064 = vunpack.c.l.b16 %v567
    %v2065 = vunpack.c.h.b16 %v567
    %v2066 = vunpack.c.l.b16 %v568
    %v2067 = vunpack.c.h.b16 %v568
    %v2068 = vunpack.c.l.b16 %v569
    %v2069 = vunpack.c.h.b16 %v569
    %v2070 = vunpack.c.l.b16 %v570
    %v2071 = vunpack.c.h.b16 %v570
    %v2072 = vunpack.c.l.b16 %v571
    %v2073 = vunpack.c.h.b16 %v571
    %v2074 = vunpack.c.l.b16 %v572
    %v2075 = vunpack.c.h.b16 %v572
    %v2076 = vunpack.c.l.b16 %v573
    %v2077 = vunpack.c.h.b16 %v573
    %v2078 = vunpack.c.l.b16 %v574
    %v2079 = vunpack.c.h.b16 %v574
    %v2080 = vunpack.c.l.b16 %v575
    %v2081 = vunpack.c.h.b16 %v575
    %v2082 = vunpack.c.l.b16 %v576
    %v2083 = vunpack.c.h.b16 %v576
    %v2084 = vunpack.c.l.b16 %v577
    %v2085 = vunpack.c.h.b16 %v577
    %v2086 = vunpack.c.l.b16 %v578
    %v2087 = vunpack.c.h.b16 %v578
    %v2088 = vunpack.c.l.b16 %v579
    %v2089 = vunpack.c.h.b16 %v579
    %v2090 = vunpack.c.l.b16 %v580
    %v2091 = vunpack.c.h.b16 %v580
    %v2092 = vunpack.c.l.b16 %v581
    %v2093 = vunpack.c.h.b16 %v581
    %v2094 = vunpack.c.l.b16 %v582
    %v2095 = vunpack.c.h.b16 %v582
    %v2096 = vunpack.c.l.b16 %v583
    %v2097 = vunpack.c.h.b16 %v583
    %v2098 = vunpack.c.l.b16 %v584
    %v2099 = vunpack.c.h.b16 %v584
    %v2100 = vunpack.c.l.b16 %v585
    %v2101 = vunpack.c.h.b16 %v585
    %v2102 = vunpack.c.l.b16 %v586
    %v2103 = vunpack.c.h.b16 %v586
    %v2104 = vunpack.c.l.b16 %v587
    %v2105 = vunpack.c.h.b16 %v587
    %v2106 = vunpack.c.l.b16 %v588
    %v2107 = vunpack.c.h.b16 %v588
    %v2108 = vunpack.c.l.b16 %v589
    %v2109 = vunpack.c.h.b16 %v589
    %v2110 = vunpack.c.l.b16 %v590
    %v2111 = vunpack.c.h.b16 %v590
    %v2112 = vunpack.c.l.b16 %v591
    %v2113 = vunpack.c.h.b16 %v591
    %v2114 = vunpack.c.l.b16 %v592
    %v2115 = vunpack.c.h.b16 %v592
    %v2116 = vunpack.c.l.b16 %v593
    %v2117 = vunpack.c.h.b16 %v593
    %v2118 = vunpack.c.l.b16 %v594
    %v2119 = vunpack.c.h.b16 %v594
    %v2120 = vunpack.c.l.b16 %v595
    %v2121 = vunpack.c.h.b16 %v595
    %v2122 = vunpack.c.l.b16 %v596
    %v2123 = vunpack.c.h.b16 %v596
    %v2124 = vunpack.c.l.b16 %v597
    %v2125 = vunpack.c.h.b16 %v597
    %v2126 = vunpack.c.l.b16 %v598
    %v2127 = vunpack.c.h.b16 %v598
    %v2128 = vunpack.c.l.b16 %v599
    %v2129 = vunpack.c.h.b16 %v599
    %v2130 = vunpack.c.l.b16 %v600
    %v2131 = vunpack.c.h.b16 %v600
    %v2132 = vunpack.c.l.b16 %v601
    %v2133 = vunpack.c.h.b16 %v601
    %v2134 = vunpack.c.l.b16 %v602
    %v2135 = vunpack.c.h.b16 %v602
    %v2136 = vunpack.c.l.b16 %v603
    %v2137 = vunpack.c.h.b16 %v603
    %v2138 = vunpack.c.l.b16 %v604
    %v2139 = vunpack.c.h.b16 %v604
    %v2140 = vunpack.c.l.b16 %v605
    %v2141 = vunpack.c.h.b16 %v605
    %v2142 = vunpack.c.l.b16 %v606
    %v2143 = vunpack.c.h.b16 %v606
    %v2144 = vunpack.c.l.b16 %v607
    %v2145 = vunpack.c.h.b16 %v607
    %v2146 = vunpack.c.l.b16 %v608
    %v2147 = vunpack.c.h.b16 %v608
    %v2148 = vunpack.c.l.b16 %v609
    %v2149 = vunpack.c.h.b16 %v609
    %v2150 = vunpack.c.l.b16 %v610
    %v2151 = vunpack.c.h.b16 %v610
    %v2152 = vunpack.c.l.b16 %v611
    %v2153 = vunpack.c.h.b16 %v611
    %v2154 = vunpack.c.l.b16 %v612
    %v2155 = vunpack.c.h.b16 %v612
    %v2156 = vunpack.c.l.b16 %v613
    %v2157 = vunpack.c.h.b16 %v613
    %v2158 = vunpack.c.l.b16 %v614
    %v2159 = vunpack.c.h.b16 %v614
    %v2160 = vunpack.c.l.b16 %v615
    %v2161 = vunpack.c.h.b16 %v615
    %v2162 = vunpack.c.l.b16 %v616
    %v2163 = vunpack.c.h.b16 %v616
    %v2164 = vunpack.c.l.b16 %v617
    %v2165 = vunpack.c.h.b16 %v617
    %v2166 = vunpack.c.l.b16 %v618
    %v2167 = vunpack.c.h.b16 %v618
    %v2168 = vunpack.c.l.b16 %v619
    %v2169 = vunpack.c.h.b16 %v619
    %v2170 = vunpack.c.l.b16 %v620
    %v2171 = vunpack.c.h.b16 %v620
    %v2172 = vunpack.c.l.b16 %v621
    %v2173 = vunpack.c.h.b16 %v621
    %v2174 = vunpack.c.l.b16 %v622
    %v2175 = vunpack.c.h.b16 %v622
    %v2176 = vunpack.c.l.b16 %v623
    %v2177 = vunpack.c.h.b16 %v623
    %v2178 = vunpack.c.l.b16 %v624
    %v2179 = vunpack.c.h.b16 %v624
    %v2180 = vunpack.c.l.b16 %v625
    %v2181 = vunpack.c.h.b16 %v625
    %v2182 = vunpack.c.l.b16 %v626
    %v2183 = vunpack.c.h.b16 %v626
    %v2184 = vunpack.c.l.b16 %v627
    %v2185 = vunpack.c.h.b16 %v627
    %v2186 = vpack.c.b16 %v1166, %v1162
    %v2187 = vpack.c.b16 %v1167, %v1163
    %v2188 = vpack.c.b16 %v1168, %v1164
    %v2189 = vpack.c.b16 %v1169, %v1165
    %v2190 = vpack.c.b16 %v1174, %v1170
    %v2191 = vpack.c.b16 %v1175, %v1171
    %v2192 = vpack.c.b16 %v1176, %v1172
    %v2193 = vpack.c.b16 %v1177, %v1173
    %v2194 = vpack.c.b16 %v1182, %v1178
    %v2195 = vpack.c.b16 %v1183, %v1179
    %v2196 = vpack.c.b16 %v1184, %v1180
    %v2197 = vpack.c.b16 %v1185, %v1181
    %v2198 = vpack.c.b16 %v1190, %v1186
    %v2199 = vpack.c.b16 %v1191, %v1187
    %v2200 = vpack.c.b16 %v1192, %v1188
    %v2201 = vpack.c.b16 %v1193, %v1189
    %v2202 = vpack.c.b16 %v1198, %v1194
    %v2203 = vpack.c.b16 %v1199, %v1195
    %v2204 = vpack.c.b16 %v1200, %v1196
    %v2205 = vpack.c.b16 %v1201, %v1197
    %v2206 = vpack.c.b16 %v1206, %v1202
    %v2207 = vpack.c.b16 %v1207, %v1203
    %v2208 = vpack.c.b16 %v1208, %v1204
    %v2209 = vpack.c.b16 %v1209, %v1205
    %v2210 = vpack.c.b16 %v1214, %v1210
    %v2211 = vpack.c.b16 %v1215, %v1211
    %v2212 = vpack.c.b16 %v1216, %v1212
    %v2213 = vpack.c.b16 %v1217, %v1213
    %v2214 = vpack.c.b16 %v1222, %v1218
    %v2215 = vpack.c.b16 %v1223, %v1219
    %v2216 = vpack.c.b16 %v1224, %v1220
    %v2217 = vpack.c.b16 %v1225, %v1221
    %v2218 = vpack.c.b16 %v1230, %v1226
    %v2219 = vpack.c.b16 %v1231, %v1227
    %v2220 = vpack.c.b16 %v1232, %v1228
    %v2221 = vpack.c.b16 %v1233, %v1229
    %v2222 = vpack.c.b16 %v1238, %v1234
    %v2223 = vpack.c.b16 %v1239, %v1235
    %v2224 = vpack.c.b16 %v1240, %v1236
    %v2225 = vpack.c.b16 %v1241, %v1237
    %v2226 = vpack.c.b16 %v1246, %v1242
    %v2227 = vpack.c.b16 %v1247, %v1243
    %v2228 = vpack.c.b16 %v1248, %v1244
    %v2229 = vpack.c.b16 %v1249, %v1245
    %v2230 = vpack.c.b16 %v1254, %v1250
    %v2231 = vpack.c.b16 %v1255, %v1251
    %v2232 = vpack.c.b16 %v1256, %v1252
    %v2233 = vpack.c.b16 %v1257, %v1253
    %v2234 = vpack.c.b16 %v1262, %v1258
    %v2235 = vpack.c.b16 %v1263, %v1259
    %v2236 = vpack.c.b16 %v1264, %v1260
    %v2237 = vpack.c.b16 %v1265, %v1261
    %v2238 = vpack.c.b16 %v1270, %v1266
    %v2239 = vpack.c.b16 %v1271, %v1267
    %v2240 = vpack.c.b16 %v1272, %v1268
    %v2241 = vpack.c.b16 %v1273, %v1269
    %v2242 = vpack.c.b16 %v1278, %v1274
    %v2243 = vpack.c.b16 %v1279, %v1275
    %v2244 = vpack.c.b16 %v1280, %v1276
    %v2245 = vpack.c.b16 %v1281, %v1277
    %v2246 = vpack.c.b16 %v1286, %v1282
    %v2247 = vpack.c.b16 %v1287, %v1283
    %v2248 = vpack.c.b16 %v1288, %v1284
    %v2249 = vpack.c.b16 %v1289, %v1285
    %v2250 = vpack.c.b16 %v1294, %v1290
    %v2251 = vpack.c.b16 %v1295, %v1291
    %v2252 = vpack.c.b16 %v1296, %v1292
    %v2253 = vpack.c.b16 %v1297, %v1293
    %v2254 = vpack.c.b16 %v1302, %v1298
    %v2255 = vpack.c.b16 %v1303, %v1299
    %v2256 = vpack.c.b16 %v1304, %v1300
    %v2257 = vpack.c.b16 %v1305, %v1301
    %v2258 = vpack.c.b16 %v1310, %v1306
    %v2259 = vpack.c.b16 %v1311, %v1307
    %v2260 = vpack.c.b16 %v1312, %v1308
    %v2261 = vpack.c.b16 %v1313, %v1309
    %v2262 = vpack.c.b16 %v1318, %v1314
    %v2263 = vpack.c.b16 %v1319, %v1315
    %v2264 = vpack.c.b16 %v1320, %v1316
    %v2265 = vpack.c.b16 %v1321, %v1317
    %v2266 = vpack.c.b16 %v1326, %v1322
    %v2267 = vpack.c.b16 %v1327, %v1323
    %v2268 = vpack.c.b16 %v1328, %v1324
    %v2269 = vpack.c.b16 %v1329, %v1325
    %v2270 = vpack.c.b16 %v1334, %v1330
    %v2271 = vpack.c.b16 %v1335, %v1331
    %v2272 = vpack.c.b16 %v1336, %v1332
    %v2273 = vpack.c.b16 %v1337, %v1333
    %v2274 = vpack.c.b16 %v1342, %v1338
    %v2275 = vpack.c.b16 %v1343, %v1339
    %v2276 = vpack.c.b16 %v1344, %v1340
    %v2277 = vpack.c.b16 %v1345, %v1341
    %v2278 = vpack.c.b16 %v1350, %v1346
    %v2279 = vpack.c.b16 %v1351, %v1347
    %v2280 = vpack.c.b16 %v1352, %v1348
    %v2281 = vpack.c.b16 %v1353, %v1349
    %v2282 = vpack.c.b16 %v1358, %v1354
    %v2283 = vpack.c.b16 %v1359, %v1355
    %v2284 = vpack.c.b16 %v1360, %v1356
    %v2285 = vpack.c.b16 %v1361, %v1357
    %v2286 = vpack.c.b16 %v1366, %v1362
    %v2287 = vpack.c.b16 %v1367, %v1363
    %v2288 = vpack.c.b16 %v1368, %v1364
    %v2289 = vpack.c.b16 %v1369, %v1365
    %v2290 = vpack.c.b16 %v1374, %v1370
    %v2291 = vpack.c.b16 %v1375, %v1371
    %v2292 = vpack.c.b16 %v1376, %v1372
    %v2293 = vpack.c.b16 %v1377, %v1373
    %v2294 = vpack.c.b16 %v1382, %v1378
    %v2295 = vpack.c.b16 %v1383, %v1379
    %v2296 = vpack.c.b16 %v1384, %v1380
    %v2297 = vpack.c.b16 %v1385, %v1381
    %v2298 = vpack.c.b16 %v1390, %v1386
    %v2299 = vpack.c.b16 %v1391, %v1387
    %v2300 = vpack.c.b16 %v1392, %v1388
    %v2301 = vpack.c.b16 %v1393, %v1389
    %v2302 = vpack.c.b16 %v1398, %v1394
    %v2303 = vpack.c.b16 %v1399, %v1395
    %v2304 = vpack.c.b16 %v1400, %v1396
    %v2305 = vpack.c.b16 %v1401, %v1397
    %v2306 = vpack.c.b16 %v1406, %v1402
    %v2307 = vpack.c.b16 %v1407, %v1403
    %v2308 = vpack.c.b16 %v1408, %v1404
    %v2309 = vpack.c.b16 %v1409, %v1405
    %v2310 = vpack.c.b16 %v1414, %v1410
    %v2311 = vpack.c.b16 %v1415, %v1411
    %v2312 = vpack.c.b16 %v1416, %v1412
    %v2313 = vpack.c.b16 %v1417, %v1413
    %v2314 = vpack.c.b16 %v1422, %v1418
    %v2315 = vpack.c.b16 %v1423, %v1419
    %v2316 = vpack.c.b16 %v1424, %v1420
    %v2317 = vpack.c.b16 %v1425, %v1421
    %v2318 = vpack.c.b16 %v1430, %v1426
    %v2319 = vpack.c.b16 %v1431, %v1427
    %v2320 = vpack.c.b16 %v1432, %v1428
    %v2321 = vpack.c.b16 %v1433, %v1429
    %v2322 = vpack.c.b16 %v1438, %v1434
    %v2323 = vpack.c.b16 %v1439, %v1435
    %v2324 = vpack.c.b16 %v1440, %v1436
    %v2325 = vpack.c.b16 %v1441, %v1437
    %v2326 = vpack.c.b16 %v1446, %v1442
    %v2327 = vpack.c.b16 %v1447, %v1443
    %v2328 = vpack.c.b16 %v1448, %v1444
    %v2329 = vpack.c.b16 %v1449, %v1445
    %v2330 = vpack.c.b16 %v1454, %v1450
    %v2331 = vpack.c.b16 %v1455, %v1451
    %v2332 = vpack.c.b16 %v1456, %v1452
    %v2333 = vpack.c.b16 %v1457, %v1453
    %v2334 = vpack.c.b16 %v1462, %v1458
    %v2335 = vpack.c.b16 %v1463, %v1459
    %v2336 = vpack.c.b16 %v1464, %v1460
    %v2337 = vpack.c.b16 %v1465, %v1461
    %v2338 = vpack.c.b16 %v1470, %v1466
    %v2339 = vpack.c.b16 %v1471, %v1467
    %v2340 = vpack.c.b16 %v1472, %v1468
    %v2341 = vpack.c.b16 %v1473, %v1469
    %v2342 = vpack.c.b16 %v1478, %v1474
    %v2343 = vpack.c.b16 %v1479, %v1475
    %v2344 = vpack.c.b16 %v1480, %v1476
    %v2345 = vpack.c.b16 %v1481, %v1477
    %v2346 = vpack.c.b16 %v1486, %v1482
    %v2347 = vpack.c.b16 %v1487, %v1483
    %v2348 = vpack.c.b16 %v1488, %v1484
    %v2349 = vpack.c.b16 %v1489, %v1485
    %v2350 = vpack.c.b16 %v1494, %v1490
    %v2351 = vpack.c.b16 %v1495, %v1491
    %v2352 = vpack.c.b16 %v1496, %v1492
    %v2353 = vpack.c.b16 %v1497, %v1493
    %v2354 = vpack.c.b16 %v1502, %v1498
    %v2355 = vpack.c.b16 %v1503, %v1499
    %v2356 = vpack.c.b16 %v1504, %v1500
    %v2357 = vpack.c.b16 %v1505, %v1501
    %v2358 = vpack.c.b16 %v1510, %v1506
    %v2359 = vpack.c.b16 %v1511, %v1507
    %v2360 = vpack.c.b16 %v1512, %v1508
    %v2361 = vpack.c.b16 %v1513, %v1509
    %v2362 = vpack.c.b16 %v1518, %v1514
    %v2363 = vpack.c.b16 %v1519, %v1515
    %v2364 = vpack.c.b16 %v1520, %v1516
    %v2365 = vpack.c.b16 %v1521, %v1517
    %v2366 = vpack.c.b16 %v1526, %v1522
    %v2367 = vpack.c.b16 %v1527, %v1523
    %v2368 = vpack.c.b16 %v1528, %v1524
    %v2369 = vpack.c.b16 %v1529, %v1525
    %v2370 = vpack.c.b16 %v1534, %v1530
    %v2371 = vpack.c.b16 %v1535, %v1531
    %v2372 = vpack.c.b16 %v1536, %v1532
    %v2373 = vpack.c.b16 %v1537, %v1533
    %v2374 = vpack.c.b16 %v1542, %v1538
    %v2375 = vpack.c.b16 %v1543, %v1539
    %v2376 = vpack.c.b16 %v1544, %v1540
    %v2377 = vpack.c.b16 %v1545, %v1541
    %v2378 = vpack.c.b16 %v1550, %v1546
    %v2379 = vpack.c.b16 %v1551, %v1547
    %v2380 = vpack.c.b16 %v1552, %v1548
    %v2381 = vpack.c.b16 %v1553, %v1549
    %v2382 = vpack.c.b16 %v1558, %v1554
    %v2383 = vpack.c.b16 %v1559, %v1555
    %v2384 = vpack.c.b16 %v1560, %v1556
    %v2385 = vpack.c.b16 %v1561, %v1557
    %v2386 = vpack.c.b16 %v1566, %v1562
    %v2387 = vpack.c.b16 %v1567, %v1563
    %v2388 = vpack.c.b16 %v1568, %v1564
    %v2389 = vpack.c.b16 %v1569, %v1565
    %v2390 = vpack.c.b16 %v1574, %v1570
    %v2391 = vpack.c.b16 %v1575, %v1571
    %v2392 = vpack.c.b16 %v1576, %v1572
    %v2393 = vpack.c.b16 %v1577, %v1573
    %v2394 = vpack.c.b16 %v1582, %v1578
    %v2395 = vpack.c.b16 %v1583, %v1579
    %v2396 = vpack.c.b16 %v1584, %v1580
    %v2397 = vpack.c.b16 %v1585, %v1581
    %v2398 = vpack.c.b16 %v1590, %v1586
    %v2399 = vpack.c.b16 %v1591, %v1587
    %v2400 = vpack.c.b16 %v1592, %v1588
    %v2401 = vpack.c.b16 %v1593, %v1589
    %v2402 = vpack.c.b16 %v1598, %v1594
    %v2403 = vpack.c.b16 %v1599, %v1595
    %v2404 = vpack.c.b16 %v1600, %v1596
    %v2405 = vpack.c.b16 %v1601, %v1597
    %v2406 = vpack.c.b16 %v1606, %v1602
    %v2407 = vpack.c.b16 %v1607, %v1603
    %v2408 = vpack.c.b16 %v1608, %v1604
    %v2409 = vpack.c.b16 %v1609, %v1605
    %v2410 = vpack.c.b16 %v1614, %v1610
    %v2411 = vpack.c.b16 %v1615, %v1611
    %v2412 = vpack.c.b16 %v1616, %v1612
    %v2413 = vpack.c.b16 %v1617, %v1613
    %v2414 = vpack.c.b16 %v1622, %v1618
    %v2415 = vpack.c.b16 %v1623, %v1619
    %v2416 = vpack.c.b16 %v1624, %v1620
    %v2417 = vpack.c.b16 %v1625, %v1621
    %v2418 = vpack.c.b16 %v1630, %v1626
    %v2419 = vpack.c.b16 %v1631, %v1627
    %v2420 = vpack.c.b16 %v1632, %v1628
    %v2421 = vpack.c.b16 %v1633, %v1629
    %v2422 = vpack.c.b16 %v1638, %v1634
    %v2423 = vpack.c.b16 %v1639, %v1635
    %v2424 = vpack.c.b16 %v1640, %v1636
    %v2425 = vpack.c.b16 %v1641, %v1637
    %v2426 = vpack.c.b16 %v1646, %v1642
    %v2427 = vpack.c.b16 %v1647, %v1643
    %v2428 = vpack.c.b16 %v1648, %v1644
    %v2429 = vpack.c.b16 %v1649, %v1645
    %v2430 = vpack.c.b16 %v1654, %v1650
    %v2431 = vpack.c.b16 %v1655, %v1651
    %v2432 = vpack.c.b16 %v1656, %v1652
    %v2433 = vpack.c.b16 %v1657, %v1653
    %v2434 = vpack.c.b16 %v1662, %v1658
    %v2435 = vpack.c.b16 %v1663, %v1659
    %v2436 = vpack.c.b16 %v1664, %v1660
    %v2437 = vpack.c.b16 %v1665, %v1661
    %v2438 = vpack.c.b16 %v1670, %v1666
    %v2439 = vpack.c.b16 %v1671, %v1667
    %v2440 = vpack.c.b16 %v1672, %v1668
    %v2441 = vpack.c.b16 %v1673, %v1669
    %v2442 = vpack.c.b16 %v1678, %v1674
    %v2443 = vpack.c.b16 %v1679, %v1675
    %v2444 = vpack.c.b16 %v1680, %v1676
    %v2445 = vpack.c.b16 %v1681, %v1677
    %v2446 = vpack.c.b16 %v1686, %v1682
    %v2447 = vpack.c.b16 %v1687, %v1683
    %v2448 = vpack.c.b16 %v1688, %v1684
    %v2449 = vpack.c.b16 %v1689, %v1685
    %v2450 = vpack.c.b16 %v1694, %v1690
    %v2451 = vpack.c.b16 %v1695, %v1691
    %v2452 = vpack.c.b16 %v1696, %v1692
    %v2453 = vpack.c.b16 %v1697, %v1693
    %v2454 = vpack.c.b16 %v1702, %v1698
    %v2455 = vpack.c.b16 %v1703, %v1699
    %v2456 = vpack.c.b16 %v1704, %v1700
    %v2457 = vpack.c.b16 %v1705, %v1701
    %v2458 = vpack.c.b16 %v1710, %v1706
    %v2459 = vpack.c.b16 %v1711, %v1707
    %v2460 = vpack.c.b16 %v1712, %v1708
    %v2461 = vpack.c.b16 %v1713, %v1709
    %v2462 = vpack.c.b16 %v1718, %v1714
    %v2463 = vpack.c.b16 %v1719, %v1715
    %v2464 = vpack.c.b16 %v1720, %v1716
    %v2465 = vpack.c.b16 %v1721, %v1717
    %v2466 = vpack.c.b16 %v1726, %v1722
    %v2467 = vpack.c.b16 %v1727, %v1723
    %v2468 = vpack.c.b16 %v1728, %v1724
    %v2469 = vpack.c.b16 %v1729, %v1725
    %v2470 = vpack.c.b16 %v1734, %v1730
    %v2471 = vpack.c.b16 %v1735, %v1731
    %v2472 = vpack.c.b16 %v1736, %v1732
    %v2473 = vpack.c.b16 %v1737, %v1733
    %v2474 = vpack.c.b16 %v1742, %v1738
    %v2475 = vpack.c.b16 %v1743, %v1739
    %v2476 = vpack.c.b16 %v1744, %v1740
    %v2477 = vpack.c.b16 %v1745, %v1741
    %v2478 = vpack.c.b16 %v1750, %v1746
    %v2479 = vpack.c.b16 %v1751, %v1747
    %v2480 = vpack.c.b16 %v1752, %v1748
    %v2481 = vpack.c.b16 %v1753, %v1749
    %v2482 = vpack.c.b16 %v1758, %v1754
    %v2483 = vpack.c.b16 %v1759, %v1755
    %v2484 = vpack.c.b16 %v1760, %v1756
    %v2485 = vpack.c.b16 %v1761, %v1757
    %v2486 = vpack.c.b16 %v1766, %v1762
    %v2487 = vpack.c.b16 %v1767, %v1763
    %v2488 = vpack.c.b16 %v1768, %v1764
    %v2489 = vpack.c.b16 %v1769, %v1765
    %v2490 = vpack.c.b16 %v1774, %v1770
    %v2491 = vpack.c.b16 %v1775, %v1771
    %v2492 = vpack.c.b16 %v1776, %v1772
    %v2493 = vpack.c.b16 %v1777, %v1773
    %v2494 = vpack.c.b16 %v1782, %v1778
    %v2495 = vpack.c.b16 %v1783, %v1779
    %v2496 = vpack.c.b16 %v1784, %v1780
    %v2497 = vpack.c.b16 %v1785, %v1781
    %v2498 = vpack.c.b16 %v1790, %v1786
    %v2499 = vpack.c.b16 %v1791, %v1787
    %v2500 = vpack.c.b16 %v1792, %v1788
    %v2501 = vpack.c.b16 %v1793, %v1789
    %v2502 = vpack.c.b16 %v1798, %v1794
    %v2503 = vpack.c.b16 %v1799, %v1795
    %v2504 = vpack.c.b16 %v1800, %v1796
    %v2505 = vpack.c.b16 %v1801, %v1797
    %v2506 = vpack.c.b16 %v1806, %v1802
    %v2507 = vpack.c.b16 %v1807, %v1803
    %v2508 = vpack.c.b16 %v1808, %v1804
    %v2509 = vpack.c.b16 %v1809, %v1805
    %v2510 = vpack.c.b16 %v1814, %v1810
    %v2511 = vpack.c.b16 %v1815, %v1811
    %v2512 = vpack.c.b16 %v1816, %v1812
    %v2513 = vpack.c.b16 %v1817, %v1813
    %v2514 = vpack.c.b16 %v1822, %v1818
    %v2515 = vpack.c.b16 %v1823, %v1819
    %v2516 = vpack.c.b16 %v1824, %v1820
    %v2517 = vpack.c.b16 %v1825, %v1821
    %v2518 = vpack.c.b16 %v1830, %v1826
    %v2519 = vpack.c.b16 %v1831, %v1827
    %v2520 = vpack.c.b16 %v1832, %v1828
    %v2521 = vpack.c.b16 %v1833, %v1829
    %v2522 = vpack.c.b16 %v1838, %v1834
    %v2523 = vpack.c.b16 %v1839, %v1835
    %v2524 = vpack.c.b16 %v1840, %v1836
    %v2525 = vpack.c.b16 %v1841, %v1837
    %v2526 = vpack.c.b16 %v1846, %v1842
    %v2527 = vpack.c.b16 %v1847, %v1843
    %v2528 = vpack.c.b16 %v1848, %v1844
    %v2529 = vpack.c.b16 %v1849, %v1845
    %v2530 = vpack.c.b16 %v1854, %v1850
    %v2531 = vpack.c.b16 %v1855, %v1851
    %v2532 = vpack.c.b16 %v1856, %v1852
    %v2533 = vpack.c.b16 %v1857, %v1853
    %v2534 = vpack.c.b16 %v1862, %v1858
    %v2535 = vpack.c.b16 %v1863, %v1859
    %v2536 = vpack.c.b16 %v1864, %v1860
    %v2537 = vpack.c.b16 %v1865, %v1861
    %v2538 = vpack.c.b16 %v1870, %v1866
    %v2539 = vpack.c.b16 %v1871, %v1867
    %v2540 = vpack.c.b16 %v1872, %v1868
    %v2541 = vpack.c.b16 %v1873, %v1869
    %v2542 = vpack.c.b16 %v1878, %v1874
    %v2543 = vpack.c.b16 %v1879, %v1875
    %v2544 = vpack.c.b16 %v1880, %v1876
    %v2545 = vpack.c.b16 %v1881, %v1877
    %v2546 = vpack.c.b16 %v1886, %v1882
    %v2547 = vpack.c.b16 %v1887, %v1883
    %v2548 = vpack.c.b16 %v1888, %v1884
    %v2549 = vpack.c.b16 %v1889, %v1885
    %v2550 = vpack.c.b16 %v1894, %v1890
    %v2551 = vpack.c.b16 %v1895, %v1891
    %v2552 = vpack.c.b16 %v1896, %v1892
    %v2553 = vpack.c.b16 %v1897, %v1893
    %v2554 = vpack.c.b16 %v1902, %v1898
    %v2555 = vpack.c.b16 %v1903, %v1899
    %v2556 = vpack.c.b16 %v1904, %v1900
    %v2557 = vpack.c.b16 %v1905, %v1901
    %v2558 = vpack.c.b16 %v1910, %v1906
    %v2559 = vpack.c.b16 %v1911, %v1907
    %v2560 = vpack.c.b16 %v1912, %v1908
    %v2561 = vpack.c.b16 %v1913, %v1909
    %v2562 = vpack.c.b16 %v1918, %v1914
    %v2563 = vpack.c.b16 %v1919, %v1915
    %v2564 = vpack.c.b16 %v1920, %v1916
    %v2565 = vpack.c.b16 %v1921, %v1917
    %v2566 = vpack.c.b16 %v1926, %v1922
    %v2567 = vpack.c.b16 %v1927, %v1923
    %v2568 = vpack.c.b16 %v1928, %v1924
    %v2569 = vpack.c.b16 %v1929, %v1925
    %v2570 = vpack.c.b16 %v1934, %v1930
    %v2571 = vpack.c.b16 %v1935, %v1931
    %v2572 = vpack.c.b16 %v1936, %v1932
    %v2573 = vpack.c.b16 %v1937, %v1933
    %v2574 = vpack.c.b16 %v1942, %v1938
    %v2575 = vpack.c.b16 %v1943, %v1939
    %v2576 = vpack.c.b16 %v1944, %v1940
    %v2577 = vpack.c.b16 %v1945, %v1941
    %v2578 = vpack.c.b16 %v1950, %v1946
    %v2579 = vpack.c.b16 %v1951, %v1947
    %v2580 = vpack.c.b16 %v1952, %v1948
    %v2581 = vpack.c.b16 %v1953, %v1949
    %v2582 = vpack.c.b16 %v1958, %v1954
    %v2583 = vpack.c.b16 %v1959, %v1955
    %v2584 = vpack.c.b16 %v1960, %v1956
    %v2585 = vpack.c.b16 %v1961, %v1957
    %v2586 = vpack.c.b16 %v1966, %v1962
    %v2587 = vpack.c.b16 %v1967, %v1963
    %v2588 = vpack.c.b16 %v1968, %v1964
    %v2589 = vpack.c.b16 %v1969, %v1965
    %v2590 = vpack.c.b16 %v1974, %v1970
    %v2591 = vpack.c.b16 %v1975, %v1971
    %v2592 = vpack.c.b16 %v1976, %v1972
    %v2593 = vpack.c.b16 %v1977, %v1973
    %v2594 = vpack.c.b16 %v1982, %v1978
    %v2595 = vpack.c.b16 %v1983, %v1979
    %v2596 = vpack.c.b16 %v1984, %v1980
    %v2597 = vpack.c.b16 %v1985, %v1981
    %v2598 = vpack.c.b16 %v1990, %v1986
    %v2599 = vpack.c.b16 %v1991, %v1987
    %v2600 = vpack.c.b16 %v1992, %v1988
    %v2601 = vpack.c.b16 %v1993, %v1989
    %v2602 = vpack.c.b16 %v1998, %v1994
    %v2603 = vpack.c.b16 %v1999, %v1995
    %v2604 = vpack.c.b16 %v2000, %v1996
    %v2605 = vpack.c.b16 %v2001, %v1997
    %v2606 = vpack.c.b16 %v2006, %v2002
    %v2607 = vpack.c.b16 %v2007, %v2003
    %v2608 = vpack.c.b16 %v2008, %v2004
    %v2609 = vpack.c.b16 %v2009, %v2005
    %v2610 = vpack.c.b16 %v2014, %v2010
    %v2611 = vpack.c.b16 %v2015, %v2011
    %v2612 = vpack.c.b16 %v2016, %v2012
    %v2613 = vpack.c.b16 %v2017, %v2013
    %v2614 = vpack.c.b16 %v2022, %v2018
    %v2615 = vpack.c.b16 %v2023, %v2019
    %v2616 = vpack.c.b16 %v2024, %v2020
    %v2617 = vpack.c.b16 %v2025, %v2021
    %v2618 = vpack.c.b16 %v2030, %v2026
    %v2619 = vpack.c.b16 %v2031, %v2027
    %v2620 = vpack.c.b16 %v2032, %v2028
    %v2621 = vpack.c.b16 %v2033, %v2029
    %v2622 = vpack.c.b16 %v2038, %v2034
    %v2623 = vpack.c.b16 %v2039, %v2035
    %v2624 = vpack.c.b16 %v2040, %v2036
    %v2625 = vpack.c.b16 %v2041, %v2037
    %v2626 = vpack.c.b16 %v2046, %v2042
    %v2627 = vpack.c.b16 %v2047, %v2043
    %v2628 = vpack.c.b16 %v2048, %v2044
    %v2629 = vpack.c.b16 %v2049, %v2045
    %v2630 = vpack.c.b16 %v2054, %v2050
    %v2631 = vpack.c.b16 %v2055, %v2051
    %v2632 = vpack.c.b16 %v2056, %v2052
    %v2633 = vpack.c.b16 %v2057, %v2053
    %v2634 = vpack.c.b16 %v2062, %v2058
    %v2635 = vpack.c.b16 %v2063, %v2059
    %v2636 = vpack.c.b16 %v2064, %v2060
    %v2637 = vpack.c.b16 %v2065, %v2061
    %v2638 = vpack.c.b16 %v2070, %v2066
    %v2639 = vpack.c.b16 %v2071, %v2067
    %v2640 = vpack.c.b16 %v2072, %v2068
    %v2641 = vpack.c.b16 %v2073, %v2069
    %v2642 = vpack.c.b16 %v2078, %v2074
    %v2643 = vpack.c.b16 %v2079, %v2075
    %v2644 = vpack.c.b16 %v2080, %v2076
    %v2645 = vpack.c.b16 %v2081, %v2077
    %v2646 = vpack.c.b16 %v2086, %v2082
    %v2647 = vpack.c.b16 %v2087, %v2083
    %v2648 = vpack.c.b16 %v2088, %v2084
    %v2649 = vpack.c.b16 %v2089, %v2085
    %v2650 = vpack.c.b16 %v2094, %v2090
    %v2651 = vpack.c.b16 %v2095, %v2091
    %v2652 = vpack.c.b16 %v2096, %v2092
    %v2653 = vpack.c.b16 %v2097, %v2093
    %v2654 = vpack.c.b16 %v2102, %v2098
    %v2655 = vpack.c.b16 %v2103, %v2099
    %v2656 = vpack.c.b16 %v2104, %v2100
    %v2657 = vpack.c.b16 %v2105, %v2101
    %v2658 = vpack.c.b16 %v2110, %v2106
    %v2659 = vpack.c.b16 %v2111, %v2107
    %v2660 = vpack.c.b16 %v2112, %v2108
    %v2661 = vpack.c.b16 %v2113, %v2109
    %v2662 = vpack.c.b16 %v2118, %v2114
    %v2663 = vpack.c.b16 %v2119, %v2115
    %v2664 = vpack.c.b16 %v2120, %v2116
    %v2665 = vpack.c.b16 %v2121, %v2117
    %v2666 = vpack.c.b16 %v2126, %v2122
    %v2667 = vpack.c.b16 %v2127, %v2123
    %v2668 = vpack.c.b16 %v2128, %v2124
    %v2669 = vpack.c.b16 %v2129, %v2125
    %v2670 = vpack.c.b16 %v2134, %v2130
    %v2671 = vpack.c.b16 %v2135, %v2131
    %v2672 = vpack.c.b16 %v2136, %v2132
    %v2673 = vpack.c.b16 %v2137, %v2133
    %v2674 = vpack.c.b16 %v2142, %v2138
    %v2675 = vpack.c.b16 %v2143, %v2139
    %v2676 = vpack.c.b16 %v2144, %v2140
    %v2677 = vpack.c.b16 %v2145, %v2141
    %v2678 = vpack.c.b16 %v2150, %v2146
    %v2679 = vpack.c.b16 %v2151, %v2147
    %v2680 = vpack.c.b16 %v2152, %v2148
    %v2681 = vpack.c.b16 %v2153, %v2149
    %v2682 = vpack.c.b16 %v2158, %v2154
    %v2683 = vpack.c.b16 %v2159, %v2155
    %v2684 = vpack.c.b16 %v2160, %v2156
    %v2685 = vpack.c.b16 %v2161, %v2157
    %v2686 = vpack.c.b16 %v2166, %v2162
    %v2687 = vpack.c.b16 %v2167, %v2163
    %v2688 = vpack.c.b16 %v2168, %v2164
    %v2689 = vpack.c.b16 %v2169, %v2165
    %v2690 = vpack.c.b16 %v2174, %v2170
    %v2691 = vpack.c.b16 %v2175, %v2171
    %v2692 = vpack.c.b16 %v2176, %v2172
    %v2693 = vpack.c.b16 %v2177, %v2173
    %v2694 = vpack.c.b16 %v2182, %v2178
    %v2695 = vpack.c.b16 %v2183, %v2179
    %v2696 = vpack.c.b16 %v2184, %v2180
    %v2697 = vpack.c.b16 %v2185, %v2181
    %3210 = vmatprep.subr.bf16.mxu0 %v2187
    %3211 = vmatpush1.bf16.msra.mxu0 %v2186
    %3212 = vmatprep.subr.bf16.mxu0 %v2191
    %3213 = vmatpush1.bf16.msra.mxu0 %v2190
    %3214 = vmatprep.subr.bf16.mxu0 %v2195
    %3215 = vmatpush1.bf16.msra.mxu0 %v2194
    %3216 = vmatprep.subr.bf16.mxu0 %v2199
    %3217 = vmatpush1.bf16.msra.mxu0 %v2198
    %3218 = vmatprep.subr.bf16.mxu0 %v2203
    %3219 = vmatpush1.bf16.msra.mxu0 %v2202
    %3220 = vmatprep.subr.bf16.mxu0 %v2207
    %3221 = vmatpush1.bf16.msra.mxu0 %v2206
    %3222 = vmatprep.subr.bf16.mxu0 %v2211
    %3223 = vmatpush1.bf16.msra.mxu0 %v2210
    %3224 = vmatprep.subr.bf16.mxu0 %v2215
    %3225 = vmatpush1.bf16.msra.mxu0 %v2214
    %3226 = vmatprep.subr.bf16.mxu0 %v2219
    %3227 = vmatpush1.bf16.msra.mxu0 %v2218
    %3228 = vmatprep.subr.bf16.mxu0 %v2223
    %3229 = vmatpush1.bf16.msra.mxu0 %v2222
    %3230 = vmatprep.subr.bf16.mxu0 %v2227
    %3231 = vmatpush1.bf16.msra.mxu0 %v2226
    %3232 = vmatprep.subr.bf16.mxu0 %v2231
    %3233 = vmatpush1.bf16.msra.mxu0 %v2230
    %3234 = vmatprep.subr.bf16.mxu0 %v2235
    %3235 = vmatpush1.bf16.msra.mxu0 %v2234
    %3236 = vmatprep.subr.bf16.mxu0 %v2239
    %3237 = vmatpush1.bf16.msra.mxu0 %v2238
    %3238 = vmatprep.subr.bf16.mxu0 %v2243
    %3239 = vmatpush1.bf16.msra.mxu0 %v2242
    %3240 = vmatprep.subr.bf16.mxu0 %v2247
    %3241 = vmatpush1.bf16.msra.mxu0 %v2246
    %3242 = vmatprep.mubr.bf16.mxu0 %v101
    %3243 = vmatmul.mubr.bf16.gmra.mrb[0].mxu0 %v100
    %v3244 = vpop.f32.mrb[0].mxu0
    %v3245 = vadd.f32 %v633, %v3244
    %v3246 = vpop.f32.mrb[0].mxu0
    %v3247 = vadd.f32 %v637, %v3246
    %v3248 = vpop.f32.mrb[0].mxu0
    %v3249 = vpop.f32.mrb[0].mxu0
    %3250 = vdwg.mxu0
    %3251 = vmatprep.subr.bf16.mxu0 %v2251
    %3252 = vmatpush1.bf16.msra.mxu0 %v2250
    %3253 = vmatprep.subr.bf16.mxu0 %v2255
    %3254 = vmatpush1.bf16.msra.mxu0 %v2254
    %3255 = vmatprep.subr.bf16.mxu0 %v2259
    %3256 = vmatpush1.bf16.msra.mxu0 %v2258
    %3257 = vmatprep.subr.bf16.mxu0 %v2263
    %3258 = vmatpush1.bf16.msra.mxu0 %v2262
    %3259 = vmatprep.subr.bf16.mxu0 %v2267
    %3260 = vmatpush1.bf16.msra.mxu0 %v2266
    %3261 = vmatprep.subr.bf16.mxu0 %v2271
    %3262 = vmatpush1.bf16.msra.mxu0 %v2270
    %3263 = vmatprep.subr.bf16.mxu0 %v2275
    %3264 = vmatpush1.bf16.msra.mxu0 %v2274
    %3265 = vmatprep.subr.bf16.mxu0 %v2279
    %3266 = vmatpush1.bf16.msra.mxu0 %v2278
    %3267 = vmatprep.subr.bf16.mxu0 %v2283
    %3268 = vmatpush1.bf16.msra.mxu0 %v2282
    %3269 = vmatprep.subr.bf16.mxu0 %v2287
    %3270 = vmatpush1.bf16.msra.mxu0 %v2286
    %3271 = vmatprep.subr.bf16.mxu0 %v2291
    %3272 = vmatpush1.bf16.msra.mxu0 %v2290
    %3273 = vmatprep.subr.bf16.mxu0 %v2295
    %3274 = vmatpush1.bf16.msra.mxu0 %v2294
    %3275 = vmatprep.subr.bf16.mxu0 %v2299
    %3276 = vmatpush1.bf16.msra.mxu0 %v2298
    %3277 = vmatprep.subr.bf16.mxu0 %v2303
    %3278 = vmatpush1.bf16.msra.mxu0 %v2302
    %3279 = vmatprep.subr.bf16.mxu0 %v2307
    %3280 = vmatpush1.bf16.msra.mxu0 %v2306
    %3281 = vmatprep.subr.bf16.mxu0 %v2311
    %3282 = vmatpush1.bf16.msra.mxu0 %v2310
    %3283 = vmatprep.mubr.bf16.mxu0 %v103
    %3284 = vmatmul.mubr.bf16.gmra.mrb[0].mxu0 %v102
    %v3285 = vpop.f32.mrb[0].mxu0
    %v3286 = vadd.f32 %v3245, %v3285
    %v3287 = vpop.f32.mrb[0].mxu0
    %v3288 = vadd.f32 %v3247, %v3287
    %v3289 = vpop.f32.mrb[0].mxu0
    %v3290 = vpop.f32.mrb[0].mxu0
    %3291 = vdwg.mxu0
    %3292 = vmatprep.subr.bf16.mxu0 %v2315
    %3293 = vmatpush1.bf16.msra.mxu0 %v2314
    %3294 = vmatprep.subr.bf16.mxu0 %v2319
    %3295 = vmatpush1.bf16.msra.mxu0 %v2318
    %3296 = vmatprep.subr.bf16.mxu0 %v2323
    %3297 = vmatpush1.bf16.msra.mxu0 %v2322
    %3298 = vmatprep.subr.bf16.mxu0 %v2327
    %3299 = vmatpush1.bf16.msra.mxu0 %v2326
    %3300 = vmatprep.subr.bf16.mxu0 %v2331
    %3301 = vmatpush1.bf16.msra.mxu0 %v2330
    %3302 = vmatprep.subr.bf16.mxu0 %v2335
    %3303 = vmatpush1.bf16.msra.mxu0 %v2334
    %3304 = vmatprep.subr.bf16.mxu0 %v2339
    %3305 = vmatpush1.bf16.msra.mxu0 %v2338
    %3306 = vmatprep.subr.bf16.mxu0 %v2343
    %3307 = vmatpush1.bf16.msra.mxu0 %v2342
    %3308 = vmatprep.subr.bf16.mxu0 %v2347
    %3309 = vmatpush1.bf16.msra.mxu0 %v2346
    %3310 = vmatprep.subr.bf16.mxu0 %v2351
    %3311 = vmatpush1.bf16.msra.mxu0 %v2350
    %3312 = vmatprep.subr.bf16.mxu0 %v2355
    %3313 = vmatpush1.bf16.msra.mxu0 %v2354
    %3314 = vmatprep.subr.bf16.mxu0 %v2359
    %3315 = vmatpush1.bf16.msra.mxu0 %v2358
    %3316 = vmatprep.subr.bf16.mxu0 %v2363
    %3317 = vmatpush1.bf16.msra.mxu0 %v2362
    %3318 = vmatprep.subr.bf16.mxu0 %v2367
    %3319 = vmatpush1.bf16.msra.mxu0 %v2366
    %3320 = vmatprep.subr.bf16.mxu0 %v2371
    %3321 = vmatpush1.bf16.msra.mxu0 %v2370
    %3322 = vmatprep.subr.bf16.mxu0 %v2375
    %3323 = vmatpush1.bf16.msra.mxu0 %v2374
    %3324 = vmatprep.mubr.bf16.mxu0 %v105
    %3325 = vmatmul.mubr.bf16.gmra.mrb[0].mxu0 %v104
    %v3326 = vpop.f32.mrb[0].mxu0
    %v3327 = vadd.f32 %v3286, %v3326
    %v3328 = vpop.f32.mrb[0].mxu0
    %v3329 = vadd.f32 %v3288, %v3328
    %v3330 = vpop.f32.mrb[0].mxu0
    %v3331 = vpop.f32.mrb[0].mxu0
    %3332 = vdwg.mxu0
    %3333 = vmatprep.subr.bf16.mxu0 %v2379
    %3334 = vmatpush1.bf16.msra.mxu0 %v2378
    %3335 = vmatprep.subr.bf16.mxu0 %v2383
    %3336 = vmatpush1.bf16.msra.mxu0 %v2382
    %3337 = vmatprep.subr.bf16.mxu0 %v2387
    %3338 = vmatpush1.bf16.msra.mxu0 %v2386
    %3339 = vmatprep.subr.bf16.mxu0 %v2391
    %3340 = vmatpush1.bf16.msra.mxu0 %v2390
    %3341 = vmatprep.subr.bf16.mxu0 %v2395
    %3342 = vmatpush1.bf16.msra.mxu0 %v2394
    %3343 = vmatprep.subr.bf16.mxu0 %v2399
    %3344 = vmatpush1.bf16.msra.mxu0 %v2398
    %3345 = vmatprep.subr.bf16.mxu0 %v2403
    %3346 = vmatpush1.bf16.msra.mxu0 %v2402
    %3347 = vmatprep.subr.bf16.mxu0 %v2407
    %3348 = vmatpush1.bf16.msra.mxu0 %v2406
    %3349 = vmatprep.subr.bf16.mxu0 %v2411
    %3350 = vmatpush1.bf16.msra.mxu0 %v2410
    %3351 = vmatprep.subr.bf16.mxu0 %v2415
    %3352 = vmatpush1.bf16.msra.mxu0 %v2414
    %3353 = vmatprep.subr.bf16.mxu0 %v2419
    %3354 = vmatpush1.bf16.msra.mxu0 %v2418
    %3355 = vmatprep.subr.bf16.mxu0 %v2423
    %3356 = vmatpush1.bf16.msra.mxu0 %v2422
    %3357 = vmatprep.subr.bf16.mxu0 %v2427
    %3358 = vmatpush1.bf16.msra.mxu0 %v2426
    %3359 = vmatprep.subr.bf16.mxu0 %v2431
    %3360 = vmatpush1.bf16.msra.mxu0 %v2430
    %3361 = vmatprep.subr.bf16.mxu0 %v2435
    %3362 = vmatpush1.bf16.msra.mxu0 %v2434
    %3363 = vmatprep.subr.bf16.mxu0 %v2439
    %3364 = vmatpush1.bf16.msra.mxu0 %v2438
    %3365 = vmatprep.mubr.bf16.mxu0 %v107
    %3366 = vmatmul.mubr.bf16.gmra.mrb[0].mxu0 %v106
    %v3367 = vpop.f32.mrb[0].mxu0
    %v3368 = vadd.f32 %v3327, %v3367
    %v3369 = vpop.f32.mrb[0].mxu0
    %v3370 = vadd.f32 %v3329, %v3369
    %v3371 = vpop.f32.mrb[0].mxu0
    %v3372 = vpop.f32.mrb[0].mxu0
    %3373 = vdwg.mxu0
    %3374 = vmatprep.subr.bf16.mxu0 %v2443
    %3375 = vmatpush1.bf16.msra.mxu0 %v2442
    %3376 = vmatprep.subr.bf16.mxu0 %v2447
    %3377 = vmatpush1.bf16.msra.mxu0 %v2446
    %3378 = vmatprep.subr.bf16.mxu0 %v2451
    %3379 = vmatpush1.bf16.msra.mxu0 %v2450
    %3380 = vmatprep.subr.bf16.mxu0 %v2455
    %3381 = vmatpush1.bf16.msra.mxu0 %v2454
    %3382 = vmatprep.subr.bf16.mxu0 %v2459
    %3383 = vmatpush1.bf16.msra.mxu0 %v2458
    %3384 = vmatprep.subr.bf16.mxu0 %v2463
    %3385 = vmatpush1.bf16.msra.mxu0 %v2462
    %3386 = vmatprep.subr.bf16.mxu0 %v2467
    %3387 = vmatpush1.bf16.msra.mxu0 %v2466
    %3388 = vmatprep.subr.bf16.mxu0 %v2471
    %3389 = vmatpush1.bf16.msra.mxu0 %v2470
    %3390 = vmatprep.subr.bf16.mxu0 %v2475
    %3391 = vmatpush1.bf16.msra.mxu0 %v2474
    %3392 = vmatprep.subr.bf16.mxu0 %v2479
    %3393 = vmatpush1.bf16.msra.mxu0 %v2478
    %3394 = vmatprep.subr.bf16.mxu0 %v2483
    %3395 = vmatpush1.bf16.msra.mxu0 %v2482
    %3396 = vmatprep.subr.bf16.mxu0 %v2487
    %3397 = vmatpush1.bf16.msra.mxu0 %v2486
    %3398 = vmatprep.subr.bf16.mxu0 %v2491
    %3399 = vmatpush1.bf16.msra.mxu0 %v2490
    %3400 = vmatprep.subr.bf16.mxu0 %v2495
    %3401 = vmatpush1.bf16.msra.mxu0 %v2494
    %3402 = vmatprep.subr.bf16.mxu0 %v2499
    %3403 = vmatpush1.bf16.msra.mxu0 %v2498
    %3404 = vmatprep.subr.bf16.mxu0 %v2503
    %3405 = vmatpush1.bf16.msra.mxu0 %v2502
    %3406 = vmatprep.mubr.bf16.mxu0 %v109
    %3407 = vmatmul.mubr.bf16.gmra.mrb[0].mxu0 %v108
    %v3408 = vpop.f32.mrb[0].mxu0
    %v3409 = vadd.f32 %v3368, %v3408
    %v3410 = vpop.f32.mrb[0].mxu0
    %v3411 = vadd.f32 %v3370, %v3410
    %v3412 = vpop.f32.mrb[0].mxu0
    %v3413 = vpop.f32.mrb[0].mxu0
    %3414 = vdwg.mxu0
    %3415 = vmatprep.subr.bf16.mxu0 %v2507
    %3416 = vmatpush1.bf16.msra.mxu0 %v2506
    %3417 = vmatprep.subr.bf16.mxu0 %v2511
    %3418 = vmatpush1.bf16.msra.mxu0 %v2510
    %3419 = vmatprep.subr.bf16.mxu0 %v2515
    %3420 = vmatpush1.bf16.msra.mxu0 %v2514
    %3421 = vmatprep.subr.bf16.mxu0 %v2519
    %3422 = vmatpush1.bf16.msra.mxu0 %v2518
    %3423 = vmatprep.subr.bf16.mxu0 %v2523
    %3424 = vmatpush1.bf16.msra.mxu0 %v2522
    %3425 = vmatprep.subr.bf16.mxu0 %v2527
    %3426 = vmatpush1.bf16.msra.mxu0 %v2526
    %3427 = vmatprep.subr.bf16.mxu0 %v2531
    %3428 = vmatpush1.bf16.msra.mxu0 %v2530
    %3429 = vmatprep.subr.bf16.mxu0 %v2535
    %3430 = vmatpush1.bf16.msra.mxu0 %v2534
    %3431 = vmatprep.subr.bf16.mxu0 %v2539
    %3432 = vmatpush1.bf16.msra.mxu0 %v2538
    %3433 = vmatprep.subr.bf16.mxu0 %v2543
    %3434 = vmatpush1.bf16.msra.mxu0 %v2542
    %3435 = vmatprep.subr.bf16.mxu0 %v2547
    %3436 = vmatpush1.bf16.msra.mxu0 %v2546
    %3437 = vmatprep.subr.bf16.mxu0 %v2551
    %3438 = vmatpush1.bf16.msra.mxu0 %v2550
    %3439 = vmatprep.subr.bf16.mxu0 %v2555
    %3440 = vmatpush1.bf16.msra.mxu0 %v2554
    %3441 = vmatprep.subr.bf16.mxu0 %v2559
    %3442 = vmatpush1.bf16.msra.mxu0 %v2558
    %3443 = vmatprep.subr.bf16.mxu0 %v2563
    %3444 = vmatpush1.bf16.msra.mxu0 %v2562
    %3445 = vmatprep.subr.bf16.mxu0 %v2567
    %3446 = vmatpush1.bf16.msra.mxu0 %v2566
    %3447 = vmatprep.mubr.bf16.mxu0 %v111
    %3448 = vmatmul.mubr.bf16.gmra.mrb[0].mxu0 %v110
    %v3449 = vpop.f32.mrb[0].mxu0
    %v3450 = vadd.f32 %v3409, %v3449
    %v3451 = vpop.f32.mrb[0].mxu0
    %v3452 = vadd.f32 %v3411, %v3451
    %v3453 = vpop.f32.mrb[0].mxu0
    %v3454 = vpop.f32.mrb[0].mxu0
    %3455 = vdwg.mxu0
    %3456 = vmatprep.subr.bf16.mxu0 %v2571
    %3457 = vmatpush1.bf16.msra.mxu0 %v2570
    %3458 = vmatprep.subr.bf16.mxu0 %v2575
    %3459 = vmatpush1.bf16.msra.mxu0 %v2574
    %3460 = vmatprep.subr.bf16.mxu0 %v2579
    %3461 = vmatpush1.bf16.msra.mxu0 %v2578
    %3462 = vmatprep.subr.bf16.mxu0 %v2583
    %3463 = vmatpush1.bf16.msra.mxu0 %v2582
    %3464 = vmatprep.subr.bf16.mxu0 %v2587
    %3465 = vmatpush1.bf16.msra.mxu0 %v2586
    %3466 = vmatprep.subr.bf16.mxu0 %v2591
    %3467 = vmatpush1.bf16.msra.mxu0 %v2590
    %3468 = vmatprep.subr.bf16.mxu0 %v2595
    %3469 = vmatpush1.bf16.msra.mxu0 %v2594
    %3470 = vmatprep.subr.bf16.mxu0 %v2599
    %3471 = vmatpush1.bf16.msra.mxu0 %v2598
    %3472 = vmatprep.subr.bf16.mxu0 %v2603
    %3473 = vmatpush1.bf16.msra.mxu0 %v2602
    %3474 = vmatprep.subr.bf16.mxu0 %v2607
    %3475 = vmatpush1.bf16.msra.mxu0 %v2606
    %3476 = vmatprep.subr.bf16.mxu0 %v2611
    %3477 = vmatpush1.bf16.msra.mxu0 %v2610
    %3478 = vmatprep.subr.bf16.mxu0 %v2615
    %3479 = vmatpush1.bf16.msra.mxu0 %v2614
    %3480 = vmatprep.subr.bf16.mxu0 %v2619
    %3481 = vmatpush1.bf16.msra.mxu0 %v2618
    %3482 = vmatprep.subr.bf16.mxu0 %v2623
    %3483 = vmatpush1.bf16.msra.mxu0 %v2622
    %3484 = vmatprep.subr.bf16.mxu0 %v2627
    %3485 = vmatpush1.bf16.msra.mxu0 %v2626
    %3486 = vmatprep.subr.bf16.mxu0 %v2631
    %3487 = vmatpush1.bf16.msra.mxu0 %v2630
    %3488 = vmatprep.mubr.bf16.mxu0 %v113
    %3489 = vmatmul.mubr.bf16.gmra.mrb[0].mxu0 %v112
    %v3490 = vpop.f32.mrb[0].mxu0
    %v3491 = vadd.f32 %v3450, %v3490
    %v3492 = vpop.f32.mrb[0].mxu0
    %v3493 = vadd.f32 %v3452, %v3492
    %v3494 = vpop.f32.mrb[0].mxu0
    %v3495 = vpop.f32.mrb[0].mxu0
    %3496 = vdwg.mxu0
    %3497 = vmatprep.subr.bf16.mxu0 %v2635
    %3498 = vmatpush1.bf16.msra.mxu0 %v2634
    %3499 = vmatprep.subr.bf16.mxu0 %v2639
    %3500 = vmatpush1.bf16.msra.mxu0 %v2638
    %3501 = vmatprep.subr.bf16.mxu0 %v2643
    %3502 = vmatpush1.bf16.msra.mxu0 %v2642
    %3503 = vmatprep.subr.bf16.mxu0 %v2647
    %3504 = vmatpush1.bf16.msra.mxu0 %v2646
    %3505 = vmatprep.subr.bf16.mxu0 %v2651
    %3506 = vmatpush1.bf16.msra.mxu0 %v2650
    %3507 = vmatprep.subr.bf16.mxu0 %v2655
    %3508 = vmatpush1.bf16.msra.mxu0 %v2654
    %3509 = vmatprep.subr.bf16.mxu0 %v2659
    %3510 = vmatpush1.bf16.msra.mxu0 %v2658
    %3511 = vmatprep.subr.bf16.mxu0 %v2663
    %3512 = vmatpush1.bf16.msra.mxu0 %v2662
    %3513 = vmatprep.subr.bf16.mxu0 %v2667
    %3514 = vmatpush1.bf16.msra.mxu0 %v2666
    %3515 = vmatprep.subr.bf16.mxu0 %v2671
    %3516 = vmatpush1.bf16.msra.mxu0 %v2670
    %3517 = vmatprep.subr.bf16.mxu0 %v2675
    %3518 = vmatpush1.bf16.msra.mxu0 %v2674
    %3519 = vmatprep.subr.bf16.mxu0 %v2679
    %3520 = vmatpush1.bf16.msra.mxu0 %v2678
    %3521 = vmatprep.subr.bf16.mxu0 %v2683
    %3522 = vmatpush1.bf16.msra.mxu0 %v2682
    %3523 = vmatprep.subr.bf16.mxu0 %v2687
    %3524 = vmatpush1.bf16.msra.mxu0 %v2686
    %3525 = vmatprep.subr.bf16.mxu0 %v2691
    %3526 = vmatpush1.bf16.msra.mxu0 %v2690
    %3527 = vmatprep.subr.bf16.mxu0 %v2695
    %3528 = vmatpush1.bf16.msra.mxu0 %v2694
    %3529 = vmatprep.mubr.bf16.mxu0 %v115
    %3530 = vmatmul.mubr.bf16.gmra.mrb[0].mxu0 %v114
    %v3531 = vpop.f32.mrb[0].mxu0
    %v3532 = vadd.f32 %v3491, %v3531
    %v3533 = vpop.f32.mrb[0].mxu0
    %v3534 = vadd.f32 %v3493, %v3533
    %v3535 = vpop.f32.mrb[0].mxu0
    %v3536 = vpop.f32.mrb[0].mxu0
    %3537 = vdwg.mxu0
    %3538 = vmatprep.subr.bf16.mxu0 %v2189
    %3539 = vmatpush1.bf16.msra.mxu0 %v2188
    %3540 = vmatprep.subr.bf16.mxu0 %v2193
    %3541 = vmatpush1.bf16.msra.mxu0 %v2192
    %3542 = vmatprep.subr.bf16.mxu0 %v2197
    %3543 = vmatpush1.bf16.msra.mxu0 %v2196
    %3544 = vmatprep.subr.bf16.mxu0 %v2201
    %3545 = vmatpush1.bf16.msra.mxu0 %v2200
    %3546 = vmatprep.subr.bf16.mxu0 %v2205
    %3547 = vmatpush1.bf16.msra.mxu0 %v2204
    %3548 = vmatprep.subr.bf16.mxu0 %v2209
    %3549 = vmatpush1.bf16.msra.mxu0 %v2208
    %3550 = vmatprep.subr.bf16.mxu0 %v2213
    %3551 = vmatpush1.bf16.msra.mxu0 %v2212
    %3552 = vmatprep.subr.bf16.mxu0 %v2217
    %3553 = vmatpush1.bf16.msra.mxu0 %v2216
    %3554 = vmatprep.subr.bf16.mxu0 %v2221
    %3555 = vmatpush1.bf16.msra.mxu0 %v2220
    %3556 = vmatprep.subr.bf16.mxu0 %v2225
    %3557 = vmatpush1.bf16.msra.mxu0 %v2224
    %3558 = vmatprep.subr.bf16.mxu0 %v2229
    %3559 = vmatpush1.bf16.msra.mxu0 %v2228
    %3560 = vmatprep.subr.bf16.mxu0 %v2233
    %3561 = vmatpush1.bf16.msra.mxu0 %v2232
    %3562 = vmatprep.subr.bf16.mxu0 %v2237
    %3563 = vmatpush1.bf16.msra.mxu0 %v2236
    %3564 = vmatprep.subr.bf16.mxu0 %v2241
    %3565 = vmatpush1.bf16.msra.mxu0 %v2240
    %3566 = vmatprep.subr.bf16.mxu0 %v2245
    %3567 = vmatpush1.bf16.msra.mxu0 %v2244
    %3568 = vmatprep.subr.bf16.mxu0 %v2249
    %3569 = vmatpush1.bf16.msra.mxu0 %v2248
    %3570 = vmatprep.mubr.bf16.mxu0 %v101
    %3571 = vmatmul.mubr.bf16.gmra.mrb[0].mxu0 %v100
    %v3572 = vpop.f32.mrb[0].mxu0
    %v3573 = vadd.f32 %v641, %v3572
    %v3574 = vpop.f32.mrb[0].mxu0
    %v3575 = vadd.f32 %v645, %v3574
    %v3576 = vpop.f32.mrb[0].mxu0
    %v3577 = vpop.f32.mrb[0].mxu0
    %3578 = vdwg.mxu0
    %3579 = vmatprep.subr.bf16.mxu0 %v2253
    %3580 = vmatpush1.bf16.msra.mxu0 %v2252
    %3581 = vmatprep.subr.bf16.mxu0 %v2257
    %3582 = vmatpush1.bf16.msra.mxu0 %v2256
    %3583 = vmatprep.subr.bf16.mxu0 %v2261
    %3584 = vmatpush1.bf16.msra.mxu0 %v2260
    %3585 = vmatprep.subr.bf16.mxu0 %v2265
    %3586 = vmatpush1.bf16.msra.mxu0 %v2264
    %3587 = vmatprep.subr.bf16.mxu0 %v2269
    %3588 = vmatpush1.bf16.msra.mxu0 %v2268
    %3589 = vmatprep.subr.bf16.mxu0 %v2273
    %3590 = vmatpush1.bf16.msra.mxu0 %v2272
    %3591 = vmatprep.subr.bf16.mxu0 %v2277
    %3592 = vmatpush1.bf16.msra.mxu0 %v2276
    %3593 = vmatprep.subr.bf16.mxu0 %v2281
    %3594 = vmatpush1.bf16.msra.mxu0 %v2280
    %3595 = vmatprep.subr.bf16.mxu0 %v2285
    %3596 = vmatpush1.bf16.msra.mxu0 %v2284
    %3597 = vmatprep.subr.bf16.mxu0 %v2289
    %3598 = vmatpush1.bf16.msra.mxu0 %v2288
    %3599 = vmatprep.subr.bf16.mxu0 %v2293
    %3600 = vmatpush1.bf16.msra.mxu0 %v2292
    %3601 = vmatprep.subr.bf16.mxu0 %v2297
    %3602 = vmatpush1.bf16.msra.mxu0 %v2296
    %3603 = vmatprep.subr.bf16.mxu0 %v2301
    %3604 = vmatpush1.bf16.msra.mxu0 %v2300
    %3605 = vmatprep.subr.bf16.mxu0 %v2305
    %3606 = vmatpush1.bf16.msra.mxu0 %v2304
    %3607 = vmatprep.subr.bf16.mxu0 %v2309
    %3608 = vmatpush1.bf16.msra.mxu0 %v2308
    %3609 = vmatprep.subr.bf16.mxu0 %v2313
    %3610 = vmatpush1.bf16.msra.mxu0 %v2312
    %3611 = vmatprep.mubr.bf16.mxu0 %v103
    %3612 = vmatmul.mubr.bf16.gmra.mrb[0].mxu0 %v102
    %v3613 = vpop.f32.mrb[0].mxu0
    %v3614 = vadd.f32 %v3573, %v3613
    %v3615 = vpop.f32.mrb[0].mxu0
    %v3616 = vadd.f32 %v3575, %v3615
    %v3617 = vpop.f32.mrb[0].mxu0
    %v3618 = vpop.f32.mrb[0].mxu0
    %3619 = vdwg.mxu0
    %3620 = vmatprep.subr.bf16.mxu0 %v2317
    %3621 = vmatpush1.bf16.msra.mxu0 %v2316
    %3622 = vmatprep.subr.bf16.mxu0 %v2321
    %3623 = vmatpush1.bf16.msra.mxu0 %v2320
    %3624 = vmatprep.subr.bf16.mxu0 %v2325
    %3625 = vmatpush1.bf16.msra.mxu0 %v2324
    %3626 = vmatprep.subr.bf16.mxu0 %v2329
    %3627 = vmatpush1.bf16.msra.mxu0 %v2328
    %3628 = vmatprep.subr.bf16.mxu0 %v2333
    %3629 = vmatpush1.bf16.msra.mxu0 %v2332
    %3630 = vmatprep.subr.bf16.mxu0 %v2337
    %3631 = vmatpush1.bf16.msra.mxu0 %v2336
    %3632 = vmatprep.subr.bf16.mxu0 %v2341
    %3633 = vmatpush1.bf16.msra.mxu0 %v2340
    %3634 = vmatprep.subr.bf16.mxu0 %v2345
    %3635 = vmatpush1.bf16.msra.mxu0 %v2344
    %3636 = vmatprep.subr.bf16.mxu0 %v2349
    %3637 = vmatpush1.bf16.msra.mxu0 %v2348
    %3638 = vmatprep.subr.bf16.mxu0 %v2353
    %3639 = vmatpush1.bf16.msra.mxu0 %v2352
    %3640 = vmatprep.subr.bf16.mxu0 %v2357
    %3641 = vmatpush1.bf16.msra.mxu0 %v2356
    %3642 = vmatprep.subr.bf16.mxu0 %v2361
    %3643 = vmatpush1.bf16.msra.mxu0 %v2360
    %3644 = vmatprep.subr.bf16.mxu0 %v2365
    %3645 = vmatpush1.bf16.msra.mxu0 %v2364
    %3646 = vmatprep.subr.bf16.mxu0 %v2369
    %3647 = vmatpush1.bf16.msra.mxu0 %v2368
    %3648 = vmatprep.subr.bf16.mxu0 %v2373
    %3649 = vmatpush1.bf16.msra.mxu0 %v2372
    %3650 = vmatprep.subr.bf16.mxu0 %v2377
    %3651 = vmatpush1.bf16.msra.mxu0 %v2376
    %3652 = vmatprep.mubr.bf16.mxu0 %v105
    %3653 = vmatmul.mubr.bf16.gmra.mrb[0].mxu0 %v104
    %v3654 = vpop.f32.mrb[0].mxu0
    %v3655 = vadd.f32 %v3614, %v3654
    %v3656 = vpop.f32.mrb[0].mxu0
    %v3657 = vadd.f32 %v3616, %v3656
    %v3658 = vpop.f32.mrb[0].mxu0
    %v3659 = vpop.f32.mrb[0].mxu0
    %3660 = vdwg.mxu0
    %3661 = vmatprep.subr.bf16.mxu0 %v2381
    %3662 = vmatpush1.bf16.msra.mxu0 %v2380
    %3663 = vmatprep.subr.bf16.mxu0 %v2385
    %3664 = vmatpush1.bf16.msra.mxu0 %v2384
    %3665 = vmatprep.subr.bf16.mxu0 %v2389
    %3666 = vmatpush1.bf16.msra.mxu0 %v2388
    %3667 = vmatprep.subr.bf16.mxu0 %v2393
    %3668 = vmatpush1.bf16.msra.mxu0 %v2392
    %3669 = vmatprep.subr.bf16.mxu0 %v2397
    %3670 = vmatpush1.bf16.msra.mxu0 %v2396
    %3671 = vmatprep.subr.bf16.mxu0 %v2401
    %3672 = vmatpush1.bf16.msra.mxu0 %v2400
    %3673 = vmatprep.subr.bf16.mxu0 %v2405
    %3674 = vmatpush1.bf16.msra.mxu0 %v2404
    %3675 = vmatprep.subr.bf16.mxu0 %v2409
    %3676 = vmatpush1.bf16.msra.mxu0 %v2408
    %3677 = vmatprep.subr.bf16.mxu0 %v2413
    %3678 = vmatpush1.bf16.msra.mxu0 %v2412
    %3679 = vmatprep.subr.bf16.mxu0 %v2417
    %3680 = vmatpush1.bf16.msra.mxu0 %v2416
    %3681 = vmatprep.subr.bf16.mxu0 %v2421
    %3682 = vmatpush1.bf16.msra.mxu0 %v2420
    %3683 = vmatprep.subr.bf16.mxu0 %v2425
    %3684 = vmatpush1.bf16.msra.mxu0 %v2424
    %3685 = vmatprep.subr.bf16.mxu0 %v2429
    %3686 = vmatpush1.bf16.msra.mxu0 %v2428
    %3687 = vmatprep.subr.bf16.mxu0 %v2433
    %3688 = vmatpush1.bf16.msra.mxu0 %v2432
    %3689 = vmatprep.subr.bf16.mxu0 %v2437
    %3690 = vmatpush1.bf16.msra.mxu0 %v2436
    %3691 = vmatprep.subr.bf16.mxu0 %v2441
    %3692 = vmatpush1.bf16.msra.mxu0 %v2440
    %3693 = vmatprep.mubr.bf16.mxu0 %v107
    %3694 = vmatmul.mubr.bf16.gmra.mrb[0].mxu0 %v106
    %v3695 = vpop.f32.mrb[0].mxu0
    %v3696 = vadd.f32 %v3655, %v3695
    %v3697 = vpop.f32.mrb[0].mxu0
    %v3698 = vadd.f32 %v3657, %v3697
    %v3699 = vpop.f32.mrb[0].mxu0
    %v3700 = vpop.f32.mrb[0].mxu0
    %3701 = vdwg.mxu0
    %3702 = vmatprep.subr.bf16.mxu0 %v2445
    %3703 = vmatpush1.bf16.msra.mxu0 %v2444
    %3704 = vmatprep.subr.bf16.mxu0 %v2449
    %3705 = vmatpush1.bf16.msra.mxu0 %v2448
    %3706 = vmatprep.subr.bf16.mxu0 %v2453
    %3707 = vmatpush1.bf16.msra.mxu0 %v2452
    %3708 = vmatprep.subr.bf16.mxu0 %v2457
    %3709 = vmatpush1.bf16.msra.mxu0 %v2456
    %3710 = vmatprep.subr.bf16.mxu0 %v2461
    %3711 = vmatpush1.bf16.msra.mxu0 %v2460
    %3712 = vmatprep.subr.bf16.mxu0 %v2465
    %3713 = vmatpush1.bf16.msra.mxu0 %v2464
    %3714 = vmatprep.subr.bf16.mxu0 %v2469
    %3715 = vmatpush1.bf16.msra.mxu0 %v2468
    %3716 = vmatprep.subr.bf16.mxu0 %v2473
    %3717 = vmatpush1.bf16.msra.mxu0 %v2472
    %3718 = vmatprep.subr.bf16.mxu0 %v2477
    %3719 = vmatpush1.bf16.msra.mxu0 %v2476
    %3720 = vmatprep.subr.bf16.mxu0 %v2481
    %3721 = vmatpush1.bf16.msra.mxu0 %v2480
    %3722 = vmatprep.subr.bf16.mxu0 %v2485
    %3723 = vmatpush1.bf16.msra.mxu0 %v2484
    %3724 = vmatprep.subr.bf16.mxu0 %v2489
    %3725 = vmatpush1.bf16.msra.mxu0 %v2488
    %3726 = vmatprep.subr.bf16.mxu0 %v2493
    %3727 = vmatpush1.bf16.msra.mxu0 %v2492
    %3728 = vmatprep.subr.bf16.mxu0 %v2497
    %3729 = vmatpush1.bf16.msra.mxu0 %v2496
    %3730 = vmatprep.subr.bf16.mxu0 %v2501
    %3731 = vmatpush1.bf16.msra.mxu0 %v2500
    %3732 = vmatprep.subr.bf16.mxu0 %v2505
    %3733 = vmatpush1.bf16.msra.mxu0 %v2504
    %3734 = vmatprep.mubr.bf16.mxu0 %v109
    %3735 = vmatmul.mubr.bf16.gmra.mrb[0].mxu0 %v108
    %v3736 = vpop.f32.mrb[0].mxu0
    %v3737 = vadd.f32 %v3696, %v3736
    %v3738 = vpop.f32.mrb[0].mxu0
    %v3739 = vadd.f32 %v3698, %v3738
    %v3740 = vpop.f32.mrb[0].mxu0
    %v3741 = vpop.f32.mrb[0].mxu0
    %3742 = vdwg.mxu0
    %3743 = vmatprep.subr.bf16.mxu0 %v2509
    %3744 = vmatpush1.bf16.msra.mxu0 %v2508
    %3745 = vmatprep.subr.bf16.mxu0 %v2513
    %3746 = vmatpush1.bf16.msra.mxu0 %v2512
    %3747 = vmatprep.subr.bf16.mxu0 %v2517
    %3748 = vmatpush1.bf16.msra.mxu0 %v2516
    %3749 = vmatprep.subr.bf16.mxu0 %v2521
    %3750 = vmatpush1.bf16.msra.mxu0 %v2520
    %3751 = vmatprep.subr.bf16.mxu0 %v2525
    %3752 = vmatpush1.bf16.msra.mxu0 %v2524
    %3753 = vmatprep.subr.bf16.mxu0 %v2529
    %3754 = vmatpush1.bf16.msra.mxu0 %v2528
    %3755 = vmatprep.subr.bf16.mxu0 %v2533
    %3756 = vmatpush1.bf16.msra.mxu0 %v2532
    %3757 = vmatprep.subr.bf16.mxu0 %v2537
    %3758 = vmatpush1.bf16.msra.mxu0 %v2536
    %3759 = vmatprep.subr.bf16.mxu0 %v2541
    %3760 = vmatpush1.bf16.msra.mxu0 %v2540
    %3761 = vmatprep.subr.bf16.mxu0 %v2545
    %3762 = vmatpush1.bf16.msra.mxu0 %v2544
    %3763 = vmatprep.subr.bf16.mxu0 %v2549
    %3764 = vmatpush1.bf16.msra.mxu0 %v2548
    %3765 = vmatprep.subr.bf16.mxu0 %v2553
    %3766 = vmatpush1.bf16.msra.mxu0 %v2552
    %3767 = vmatprep.subr.bf16.mxu0 %v2557
    %3768 = vmatpush1.bf16.msra.mxu0 %v2556
    %3769 = vmatprep.subr.bf16.mxu0 %v2561
    %3770 = vmatpush1.bf16.msra.mxu0 %v2560
    %3771 = vmatprep.subr.bf16.mxu0 %v2565
    %3772 = vmatpush1.bf16.msra.mxu0 %v2564
    %3773 = vmatprep.subr.bf16.mxu0 %v2569
    %3774 = vmatpush1.bf16.msra.mxu0 %v2568
    %3775 = vmatprep.mubr.bf16.mxu0 %v111
    %3776 = vmatmul.mubr.bf16.gmra.mrb[0].mxu0 %v110
    %v3777 = vpop.f32.mrb[0].mxu0
    %v3778 = vadd.f32 %v3737, %v3777
    %v3779 = vpop.f32.mrb[0].mxu0
    %v3780 = vadd.f32 %v3739, %v3779
    %v3781 = vpop.f32.mrb[0].mxu0
    %v3782 = vpop.f32.mrb[0].mxu0
    %3783 = vdwg.mxu0
    %3784 = vmatprep.subr.bf16.mxu0 %v2573
    %3785 = vmatpush1.bf16.msra.mxu0 %v2572
    %3786 = vmatprep.subr.bf16.mxu0 %v2577
    %3787 = vmatpush1.bf16.msra.mxu0 %v2576
    %3788 = vmatprep.subr.bf16.mxu0 %v2581
    %3789 = vmatpush1.bf16.msra.mxu0 %v2580
    %3790 = vmatprep.subr.bf16.mxu0 %v2585
    %3791 = vmatpush1.bf16.msra.mxu0 %v2584
    %3792 = vmatprep.subr.bf16.mxu0 %v2589
    %3793 = vmatpush1.bf16.msra.mxu0 %v2588
    %3794 = vmatprep.subr.bf16.mxu0 %v2593
    %3795 = vmatpush1.bf16.msra.mxu0 %v2592
    %3796 = vmatprep.subr.bf16.mxu0 %v2597
    %3797 = vmatpush1.bf16.msra.mxu0 %v2596
    %3798 = vmatprep.subr.bf16.mxu0 %v2601
    %3799 = vmatpush1.bf16.msra.mxu0 %v2600
    %3800 = vmatprep.subr.bf16.mxu0 %v2605
    %3801 = vmatpush1.bf16.msra.mxu0 %v2604
    %3802 = vmatprep.subr.bf16.mxu0 %v2609
    %3803 = vmatpush1.bf16.msra.mxu0 %v2608
    %3804 = vmatprep.subr.bf16.mxu0 %v2613
    %3805 = vmatpush1.bf16.msra.mxu0 %v2612
    %3806 = vmatprep.subr.bf16.mxu0 %v2617
    %3807 = vmatpush1.bf16.msra.mxu0 %v2616
    %3808 = vmatprep.subr.bf16.mxu0 %v2621
    %3809 = vmatpush1.bf16.msra.mxu0 %v2620
    %3810 = vmatprep.subr.bf16.mxu0 %v2625
    %3811 = vmatpush1.bf16.msra.mxu0 %v2624
    %3812 = vmatprep.subr.bf16.mxu0 %v2629
    %3813 = vmatpush1.bf16.msra.mxu0 %v2628
    %3814 = vmatprep.subr.bf16.mxu0 %v2633
    %3815 = vmatpush1.bf16.msra.mxu0 %v2632
    %3816 = vmatprep.mubr.bf16.mxu0 %v113
    %3817 = vmatmul.mubr.bf16.gmra.mrb[0].mxu0 %v112
    %v3818 = vpop.f32.mrb[0].mxu0
    %v3819 = vadd.f32 %v3778, %v3818
    %v3820 = vpop.f32.mrb[0].mxu0
    %v3821 = vadd.f32 %v3780, %v3820
    %v3822 = vpop.f32.mrb[0].mxu0
    %v3823 = vpop.f32.mrb[0].mxu0
    %3824 = vdwg.mxu0
    %3825 = vmatprep.subr.bf16.mxu0 %v2637
    %3826 = vmatpush1.bf16.msra.mxu0 %v2636
    %3827 = vmatprep.subr.bf16.mxu0 %v2641
    %3828 = vmatpush1.bf16.msra.mxu0 %v2640
    %3829 = vmatprep.subr.bf16.mxu0 %v2645
    %3830 = vmatpush1.bf16.msra.mxu0 %v2644
    %3831 = vmatprep.subr.bf16.mxu0 %v2649
    %3832 = vmatpush1.bf16.msra.mxu0 %v2648
    %3833 = vmatprep.subr.bf16.mxu0 %v2653
    %3834 = vmatpush1.bf16.msra.mxu0 %v2652
    %3835 = vmatprep.subr.bf16.mxu0 %v2657
    %3836 = vmatpush1.bf16.msra.mxu0 %v2656
    %3837 = vmatprep.subr.bf16.mxu0 %v2661
    %3838 = vmatpush1.bf16.msra.mxu0 %v2660
    %3839 = vmatprep.subr.bf16.mxu0 %v2665
    %3840 = vmatpush1.bf16.msra.mxu0 %v2664
    %3841 = vmatprep.subr.bf16.mxu0 %v2669
    %3842 = vmatpush1.bf16.msra.mxu0 %v2668
    %3843 = vmatprep.subr.bf16.mxu0 %v2673
    %3844 = vmatpush1.bf16.msra.mxu0 %v2672
    %3845 = vmatprep.subr.bf16.mxu0 %v2677
    %3846 = vmatpush1.bf16.msra.mxu0 %v2676
    %3847 = vmatprep.subr.bf16.mxu0 %v2681
    %3848 = vmatpush1.bf16.msra.mxu0 %v2680
    %3849 = vmatprep.subr.bf16.mxu0 %v2685
    %3850 = vmatpush1.bf16.msra.mxu0 %v2684
    %3851 = vmatprep.subr.bf16.mxu0 %v2689
    %3852 = vmatpush1.bf16.msra.mxu0 %v2688
    %3853 = vmatprep.subr.bf16.mxu0 %v2693
    %3854 = vmatpush1.bf16.msra.mxu0 %v2692
    %3855 = vmatprep.subr.bf16.mxu0 %v2697
    %3856 = vmatpush1.bf16.msra.mxu0 %v2696
    %3857 = vmatprep.mubr.bf16.mxu0 %v115
    %3858 = vmatmul.mubr.bf16.gmra.mrb[0].mxu0 %v114
    %v3859 = vpop.f32.mrb[0].mxu0
    %v3860 = vadd.f32 %v3819, %v3859
    %v3861 = vpop.f32.mrb[0].mxu0
    %v3862 = vadd.f32 %v3821, %v3861
    %v3863 = vpop.f32.mrb[0].mxu0
    %v3864 = vpop.f32.mrb[0].mxu0
    %3865 = vdwg.mxu0
    %v3866 = vmax.f32 %v3532, 0.0
    %v3867 = vmax.f32 %v3534, 0.0
    %v3868 = vmax.f32 %v3860, 0.0
    %v3869 = vmax.f32 %v3862, 0.0
    %v3870 = vpack.c.bf16 %v3866, %v3866
    %v3871 = vpack.c.bf16 %v3867, %v3867
    %v3872 = vpack.c.bf16 %v3868, %v3868
    %v3873 = vpack.c.bf16 %v3869, %v3869
    %v3874 = vld [vmem:[#allocation8] sm:$0xf]
    %v3875 = vld [vmem:[#allocation8 + $0x4] sm:$0xf]
    %v3876 = vld [vmem:[#allocation8 + $0x8] sm:$0xf]
    %v3877 = vld [vmem:[#allocation8 + $0xc] sm:$0xf]
    %v3878 = vld [vmem:[#allocation8 + $0x10] sm:$0xf]
    %v3879 = vld [vmem:[#allocation8 + $0x14] sm:$0xf]
    %v3880 = vld [vmem:[#allocation8 + $0x18] sm:$0xf]
    %v3881 = vld [vmem:[#allocation8 + $0x1c] sm:$0xf]
    %v3882 = vld [vmem:[#allocation8 + $0x20] sm:$0xf]
    %v3883 = vld [vmem:[#allocation8 + $0x24] sm:$0xf]
    %v3884 = vld [vmem:[#allocation8 + $0x28] sm:$0xf]
    %v3885 = vld [vmem:[#allocation8 + $0x2c] sm:$0xf]
    %v3886 = vld [vmem:[#allocation8 + $0x30] sm:$0xf]
    %v3887 = vld [vmem:[#allocation8 + $0x34] sm:$0xf]
    %v3888 = vld [vmem:[#allocation8 + $0x38] sm:$0xf]
    %v3889 = vld [vmem:[#allocation8 + $0x3c] sm:$0xf]
    %v3890 = vld [vmem:[#allocation8 + $0x40] sm:$0xf]
    %v3891 = vld [vmem:[#allocation8 + $0x44] sm:$0xf]
    %v3892 = vld [vmem:[#allocation8 + $0x48] sm:$0xf]
    %v3893 = vld [vmem:[#allocation8 + $0x4c] sm:$0xf]
    %v3894 = vld [vmem:[#allocation8 + $0x50] sm:$0xf]
    %v3895 = vld [vmem:[#allocation8 + $0x54] sm:$0xf]
    %v3896 = vld [vmem:[#allocation8 + $0x58] sm:$0xf]
    %v3897 = vld [vmem:[#allocation8 + $0x5c] sm:$0xf]
    %v3898 = vld [vmem:[#allocation8 + $0x60] sm:$0xf]
    %v3899 = vld [vmem:[#allocation8 + $0x64] sm:$0xf]
    %v3900 = vld [vmem:[#allocation8 + $0x68] sm:$0xf]
    %v3901 = vld [vmem:[#allocation8 + $0x6c] sm:$0xf]
    %v3902 = vld [vmem:[#allocation8 + $0x70] sm:$0xf]
    %v3903 = vld [vmem:[#allocation8 + $0x74] sm:$0xf]
    %v3904 = vld [vmem:[#allocation8 + $0x78] sm:$0xf]
    %v3905 = vld [vmem:[#allocation8 + $0x7c] sm:$0xf]
    %v3906 = vld [vmem:[#allocation8 + $0x80] sm:$0xf]
    %v3907 = vld [vmem:[#allocation8 + $0x84] sm:$0xf]
    %v3908 = vld [vmem:[#allocation8 + $0x88] sm:$0xf]
    %v3909 = vld [vmem:[#allocation8 + $0x8c] sm:$0xf]
    %v3910 = vld [vmem:[#allocation8 + $0x90] sm:$0xf]
    %v3911 = vld [vmem:[#allocation8 + $0x94] sm:$0xf]
    %v3912 = vld [vmem:[#allocation8 + $0x98] sm:$0xf]
    %v3913 = vld [vmem:[#allocation8 + $0x9c] sm:$0xf]
    %v3914 = vld [vmem:[#allocation8 + $0xa0] sm:$0xf]
    %v3915 = vld [vmem:[#allocation8 + $0xa4] sm:$0xf]
    %v3916 = vld [vmem:[#allocation8 + $0xa8] sm:$0xf]
    %v3917 = vld [vmem:[#allocation8 + $0xac] sm:$0xf]
    %v3918 = vld [vmem:[#allocation8 + $0xb0] sm:$0xf]
    %v3919 = vld [vmem:[#allocation8 + $0xb4] sm:$0xf]
    %v3920 = vld [vmem:[#allocation8 + $0xb8] sm:$0xf]
    %v3921 = vld [vmem:[#allocation8 + $0xbc] sm:$0xf]
    %v3922 = vld [vmem:[#allocation8 + $0xc0] sm:$0xf]
    %v3923 = vld [vmem:[#allocation8 + $0xc4] sm:$0xf]
    %v3924 = vld [vmem:[#allocation8 + $0xc8] sm:$0xf]
    %v3925 = vld [vmem:[#allocation8 + $0xcc] sm:$0xf]
    %v3926 = vld [vmem:[#allocation8 + $0xd0] sm:$0xf]
    %v3927 = vld [vmem:[#allocation8 + $0xd4] sm:$0xf]
    %v3928 = vld [vmem:[#allocation8 + $0xd8] sm:$0xf]
    %v3929 = vld [vmem:[#allocation8 + $0xdc] sm:$0xf]
    %v3930 = vld [vmem:[#allocation8 + $0xe0] sm:$0xf]
    %v3931 = vld [vmem:[#allocation8 + $0xe4] sm:$0xf]
    %v3932 = vld [vmem:[#allocation8 + $0xe8] sm:$0xf]
    %v3933 = vld [vmem:[#allocation8 + $0xec] sm:$0xf]
    %v3934 = vld [vmem:[#allocation8 + $0xf0] sm:$0xf]
    %v3935 = vld [vmem:[#allocation8 + $0xf4] sm:$0xf]
    %v3936 = vld [vmem:[#allocation8 + $0xf8] sm:$0xf]
    %v3937 = vld [vmem:[#allocation8 + $0xfc] sm:$0xf]
    %v3938 = vld [vmem:[#allocation10] sm:$0x1]
    %v3940 = vlaneseq
    %v3941 = vshrl.u32 %v3940, 7
    %v3942 = vsub.s32 0, %v3941
    %v3943 = vrot.slane %v3938, %v3942
    %v4009 = vunpack.c.l.b16 %v3874
    %v4010 = vunpack.c.l.b16 %v3875
    %v4011 = vunpack.c.l.b16 %v3876
    %v4012 = vunpack.c.l.b16 %v3877
    %v4013 = vunpack.c.l.b16 %v3878
    %v4014 = vunpack.c.l.b16 %v3879
    %v4015 = vunpack.c.l.b16 %v3880
    %v4016 = vunpack.c.l.b16 %v3881
    %v4017 = vunpack.c.l.b16 %v3882
    %v4018 = vunpack.c.l.b16 %v3883
    %v4019 = vunpack.c.l.b16 %v3884
    %v4020 = vunpack.c.l.b16 %v3885
    %v4021 = vunpack.c.l.b16 %v3886
    %v4022 = vunpack.c.l.b16 %v3887
    %v4023 = vunpack.c.l.b16 %v3888
    %v4024 = vunpack.c.l.b16 %v3889
    %v4025 = vunpack.c.l.b16 %v3890
    %v4026 = vunpack.c.l.b16 %v3891
    %v4027 = vunpack.c.l.b16 %v3892
    %v4028 = vunpack.c.l.b16 %v3893
    %v4029 = vunpack.c.l.b16 %v3894
    %v4030 = vunpack.c.l.b16 %v3895
    %v4031 = vunpack.c.l.b16 %v3896
    %v4032 = vunpack.c.l.b16 %v3897
    %v4033 = vunpack.c.l.b16 %v3898
    %v4034 = vunpack.c.l.b16 %v3899
    %v4035 = vunpack.c.l.b16 %v3900
    %v4036 = vunpack.c.l.b16 %v3901
    %v4037 = vunpack.c.l.b16 %v3902
    %v4038 = vunpack.c.l.b16 %v3903
    %v4039 = vunpack.c.l.b16 %v3904
    %v4040 = vunpack.c.l.b16 %v3905
    %v4041 = vunpack.c.l.b16 %v3906
    %v4042 = vunpack.c.l.b16 %v3907
    %v4043 = vunpack.c.l.b16 %v3908
    %v4044 = vunpack.c.l.b16 %v3909
    %v4045 = vunpack.c.l.b16 %v3910
    %v4046 = vunpack.c.l.b16 %v3911
    %v4047 = vunpack.c.l.b16 %v3912
    %v4048 = vunpack.c.l.b16 %v3913
    %v4049 = vunpack.c.l.b16 %v3914
    %v4050 = vunpack.c.l.b16 %v3915
    %v4051 = vunpack.c.l.b16 %v3916
    %v4052 = vunpack.c.l.b16 %v3917
    %v4053 = vunpack.c.l.b16 %v3918
    %v4054 = vunpack.c.l.b16 %v3919
    %v4055 = vunpack.c.l.b16 %v3920
    %v4056 = vunpack.c.l.b16 %v3921
    %v4057 = vunpack.c.l.b16 %v3922
    %v4058 = vunpack.c.l.b16 %v3923
    %v4059 = vunpack.c.l.b16 %v3924
    %v4060 = vunpack.c.l.b16 %v3925
    %v4061 = vunpack.c.l.b16 %v3926
    %v4062 = vunpack.c.l.b16 %v3927
    %v4063 = vunpack.c.l.b16 %v3928
    %v4064 = vunpack.c.l.b16 %v3929
    %v4065 = vunpack.c.l.b16 %v3930
    %v4066 = vunpack.c.l.b16 %v3931
    %v4067 = vunpack.c.l.b16 %v3932
    %v4068 = vunpack.c.l.b16 %v3933
    %v4069 = vunpack.c.l.b16 %v3934
    %v4070 = vunpack.c.l.b16 %v3935
    %v4071 = vunpack.c.l.b16 %v3936
    %v4072 = vunpack.c.l.b16 %v3937
    %v4073 = vpack.c.b16 %v4010, %v4009
    %v4074 = vpack.c.b16 %v4012, %v4011
    %v4075 = vpack.c.b16 %v4014, %v4013
    %v4076 = vpack.c.b16 %v4016, %v4015
    %v4077 = vpack.c.b16 %v4018, %v4017
    %v4078 = vpack.c.b16 %v4020, %v4019
    %v4079 = vpack.c.b16 %v4022, %v4021
    %v4080 = vpack.c.b16 %v4024, %v4023
    %v4081 = vpack.c.b16 %v4026, %v4025
    %v4082 = vpack.c.b16 %v4028, %v4027
    %v4083 = vpack.c.b16 %v4030, %v4029
    %v4084 = vpack.c.b16 %v4032, %v4031
    %v4085 = vpack.c.b16 %v4034, %v4033
    %v4086 = vpack.c.b16 %v4036, %v4035
    %v4087 = vpack.c.b16 %v4038, %v4037
    %v4088 = vpack.c.b16 %v4040, %v4039
    %v4089 = vpack.c.b16 %v4042, %v4041
    %v4090 = vpack.c.b16 %v4044, %v4043
    %v4091 = vpack.c.b16 %v4046, %v4045
    %v4092 = vpack.c.b16 %v4048, %v4047
    %v4093 = vpack.c.b16 %v4050, %v4049
    %v4094 = vpack.c.b16 %v4052, %v4051
    %v4095 = vpack.c.b16 %v4054, %v4053
    %v4096 = vpack.c.b16 %v4056, %v4055
    %v4097 = vpack.c.b16 %v4058, %v4057
    %v4098 = vpack.c.b16 %v4060, %v4059
    %v4099 = vpack.c.b16 %v4062, %v4061
    %v4100 = vpack.c.b16 %v4064, %v4063
    %v4101 = vpack.c.b16 %v4066, %v4065
    %v4102 = vpack.c.b16 %v4068, %v4067
    %v4103 = vpack.c.b16 %v4070, %v4069
    %v4104 = vpack.c.b16 %v4072, %v4071
    %4137 = vmatprep.subr.bf16.mxu0 0
    %4138 = vmatpush1.bf16.msra.mxu0 %v4073
    %4139 = vmatprep.subr.bf16.mxu0 0
    %4140 = vmatpush1.bf16.msra.mxu0 %v4074
    %4141 = vmatprep.subr.bf16.mxu0 0
    %4142 = vmatpush1.bf16.msra.mxu0 %v4075
    %4143 = vmatprep.subr.bf16.mxu0 0
    %4144 = vmatpush1.bf16.msra.mxu0 %v4076
    %4145 = vmatprep.subr.bf16.mxu0 0
    %4146 = vmatpush1.bf16.msra.mxu0 %v4077
    %4147 = vmatprep.subr.bf16.mxu0 0
    %4148 = vmatpush1.bf16.msra.mxu0 %v4078
    %4149 = vmatprep.subr.bf16.mxu0 0
    %4150 = vmatpush1.bf16.msra.mxu0 %v4079
    %4151 = vmatprep.subr.bf16.mxu0 0
    %4152 = vmatpush1.bf16.msra.mxu0 %v4080
    %4153 = vmatprep.subr.bf16.mxu0 0
    %4154 = vmatpush1.bf16.msra.mxu0 %v4081
    %4155 = vmatprep.subr.bf16.mxu0 0
    %4156 = vmatpush1.bf16.msra.mxu0 %v4082
    %4157 = vmatprep.subr.bf16.mxu0 0
    %4158 = vmatpush1.bf16.msra.mxu0 %v4083
    %4159 = vmatprep.subr.bf16.mxu0 0
    %4160 = vmatpush1.bf16.msra.mxu0 %v4084
    %4161 = vmatprep.subr.bf16.mxu0 0
    %4162 = vmatpush1.bf16.msra.mxu0 %v4085
    %4163 = vmatprep.subr.bf16.mxu0 0
    %4164 = vmatpush1.bf16.msra.mxu0 %v4086
    %4165 = vmatprep.subr.bf16.mxu0 0
    %4166 = vmatpush1.bf16.msra.mxu0 %v4087
    %4167 = vmatprep.subr.bf16.mxu0 0
    %4168 = vmatpush1.bf16.msra.mxu0 %v4088
    %4169 = vmatprep.mubr.bf16.mxu0 %v3871
    %4170 = vmatmul.mubr.bf16.gmra.mrb[0].mxu0 %v3870
    %v4171 = vpop.f32.mrb[0].mxu0
    %v4172 = vadd.f32 %v3943, %v4171
    %v4173 = vpop.f32.mrb[0].mxu0
    %v4174 = vpop.f32.mrb[0].mxu0
    %v4175 = vpop.f32.mrb[0].mxu0
    %4176 = vdwg.mxu0
    %4177 = vmatprep.subr.bf16.mxu0 0
    %4178 = vmatpush1.bf16.msra.mxu0 %v4089
    %4179 = vmatprep.subr.bf16.mxu0 0
    %4180 = vmatpush1.bf16.msra.mxu0 %v4090
    %4181 = vmatprep.subr.bf16.mxu0 0
    %4182 = vmatpush1.bf16.msra.mxu0 %v4091
    %4183 = vmatprep.subr.bf16.mxu0 0
    %4184 = vmatpush1.bf16.msra.mxu0 %v4092
    %4185 = vmatprep.subr.bf16.mxu0 0
    %4186 = vmatpush1.bf16.msra.mxu0 %v4093
    %4187 = vmatprep.subr.bf16.mxu0 0
    %4188 = vmatpush1.bf16.msra.mxu0 %v4094
    %4189 = vmatprep.subr.bf16.mxu0 0
    %4190 = vmatpush1.bf16.msra.mxu0 %v4095
    %4191 = vmatprep.subr.bf16.mxu0 0
    %4192 = vmatpush1.bf16.msra.mxu0 %v4096
    %4193 = vmatprep.subr.bf16.mxu0 0
    %4194 = vmatpush1.bf16.msra.mxu0 %v4097
    %4195 = vmatprep.subr.bf16.mxu0 0
    %4196 = vmatpush1.bf16.msra.mxu0 %v4098
    %4197 = vmatprep.subr.bf16.mxu0 0
    %4198 = vmatpush1.bf16.msra.mxu0 %v4099
    %4199 = vmatprep.subr.bf16.mxu0 0
    %4200 = vmatpush1.bf16.msra.mxu0 %v4100
    %4201 = vmatprep.subr.bf16.mxu0 0
    %4202 = vmatpush1.bf16.msra.mxu0 %v4101
    %4203 = vmatprep.subr.bf16.mxu0 0
    %4204 = vmatpush1.bf16.msra.mxu0 %v4102
    %4205 = vmatprep.subr.bf16.mxu0 0
    %4206 = vmatpush1.bf16.msra.mxu0 %v4103
    %4207 = vmatprep.subr.bf16.mxu0 0
    %4208 = vmatpush1.bf16.msra.mxu0 %v4104
    %4209 = vmatprep.mubr.bf16.mxu0 %v3873
    %4210 = vmatmul.mubr.bf16.gmra.mrb[0].mxu0 %v3872
    %v4211 = vpop.f32.mrb[0].mxu0
    %v4212 = vadd.f32 %v4172, %v4211
    %v4213 = vpop.f32.mrb[0].mxu0
    %v4214 = vpop.f32.mrb[0].mxu0
    %v4215 = vpop.f32.mrb[0].mxu0
    %4216 = vdwg.mxu0
    %4217 = vst [vmem:[#allocation11] sm:$0xff] %v4212
    // Predicated region
    $region42: #{tpu_custom_call.1} parent=1 // pred_check
      _
    $region43: #{tpu_custom_call.1} parent=1 // pred_check_branch
      %4219 = sbr.rel (0) target = $region45
    $region44: #{tpu_custom_call.1} parent=1 // pred_region
      %s4221 = ssub.s32 128, 128
      %4222 = vsyncadd [#allocation4], %s4221
      %s4224 = sshll.u32 [#allocation11], 4
      %s4225 = int_to_ptr.vmem [resolvable:$true] %s4224
      %4227 = dma.vmem_to_hbm [thread:$0]  %s4225, 128, %s5, [#allocation4]
    $region45: #{tpu_custom_call.1} parent=1 // pred_fallthru
      _
    // Predicated region
    $region46: #{tpu_custom_call.1} parent=1 // pred_check
      _
    $region47: #{tpu_custom_call.1} parent=1 // pred_check_branch
      %4229 = sbr.rel (0) target = $region49
    $region48: #{tpu_custom_call.1} parent=1 // pred_region
      %4230 = dma.done [#allocation4], 128
    $region49: #{tpu_custom_call.1} parent=1 // pred_fallthru
      _
    %4231 = vsyncpa [#allocation3], 1
    %4232 = vsyncpa [#allocation6], 1
    %4233 = vsyncpa [#allocation9], 1
    %4234 = vsyncpa [#allocation4], 1

</llo_original>
